<compile_context>
chip_gen: v5e
topology: v5e:2x2
jax: 0.10.0
libtpu: 0.0.40
codegen_flags: <defaults>
</compile_context>

<pallas_src>
import jax
import jax.numpy as jnp
import numpy as np
from jax import lax
from jax.experimental import pallas as pl
from jax.experimental.pallas import tpu as pltpu

EPS = 1e-5
LANE = 128


def _make_ac_kernel(TD, H, W, Cin, Cop):
    M = TD * H * W
    K = 27 * Cin

    def ac_kernel(x_ref, w_ref, b_ref, o_ref):
        # x_ref: (1, 1, TD+2, H+2, W+2, Cin)  bf16  padded input tile (with halo)
        # w_ref: (27*Cin, Cop)                bf16  folded weight, lane-dense 2-D
        # b_ref: (1, Cop)                     f32   folded bias
        # o_ref: (1, 1, TD, H, W, Cop)        f32
        x = x_ref[...][0, 0]                          # (TD+2, H+2, W+2, Cin)
        taps = []
        for kd in range(3):
            for kh in range(3):
                for kw in range(3):
                    taps.append(x[kd:kd + TD, kh:kh + H, kw:kw + W, :])
        # In-kernel im2col: one (M, 27*Cin) stack -> single MXU contraction.
        patches = jnp.concatenate(taps, axis=-1)      # (TD, H, W, 27*Cin)
        patches = patches.reshape(M, K)
        acc = jnp.dot(patches, w_ref[...],
                      preferred_element_type=jnp.float32)   # (M, Cop) f32 accum
        acc = acc + b_ref[...]                        # (1, Cop) broadcast
        o_ref[...] = acc.reshape(1, 1, TD, H, W, Cop).astype(o_ref.dtype)

    return ac_kernel


def ac_layer_pallas(x_ncdhw, w_eff_khwio, b_eff, *, tile_d=None):
    """x_ncdhw: (N, Cin, D, H, W) f32.  Returns (N, Cout, D, H, W) f32."""
    N, Cin, D, H, W = x_ncdhw.shape
    Cout = w_eff_khwio.shape[-1]
    if tile_d is None:
        tile_d = D
    assert D % tile_d == 0, "tile_d must divide D"
    n_td = D // tile_d
    Cop = -(-Cout // LANE) * LANE                       # Cout padded to 128 lanes

    # ---- wrapper glue: layout, zero-pad, halo duplication, dtype casts ----
    x = jnp.transpose(x_ncdhw, (0, 2, 3, 4, 1)).astype(jnp.bfloat16)   # NDHWC
    xp = jnp.pad(x, ((0, 0), (1, 1), (1, 1), (1, 1), (0, 0)))
    # overlapping D tiles with a 2-row halo -> (N, n_td, TD+2, H+2, W+2, Cin)
    x_tiles = jnp.stack(
        [xp[:, t * tile_d: t * tile_d + tile_d + 2] for t in range(n_td)], axis=1)

    # folded weight as flat, lane-dense 2-D (27*Cin, Cop); bias as (1, Cop)
    w2d = w_eff_khwio.reshape(27 * Cin, Cout)
    w2d = jnp.pad(w2d, ((0, 0), (0, Cop - Cout))).astype(jnp.bfloat16)
    b2 = jnp.pad(b_eff.reshape(1, Cout).astype(jnp.float32),
                 ((0, 0), (0, Cop - Cout)))

    out = pl.pallas_call(
        _make_ac_kernel(tile_d, H, W, Cin, Cop),
        out_shape=jax.ShapeDtypeStruct((N, n_td, tile_d, H, W, Cop), jnp.float32),
        grid=(N, n_td),
        in_specs=[
            pl.BlockSpec((1, 1, tile_d + 2, H + 2, W + 2, Cin),
                         lambda n, t: (n, t, 0, 0, 0, 0)),
            pl.BlockSpec((27 * Cin, Cop), lambda n, t: (0, 0)),
            pl.BlockSpec((1, Cop), lambda n, t: (0, 0)),
        ],
        out_specs=pl.BlockSpec((1, 1, tile_d, H, W, Cop),
                               lambda n, t: (n, t, 0, 0, 0, 0)),
        compiler_params=pltpu.CompilerParams(
            dimension_semantics=("parallel", "parallel")),
    )(x_tiles, w2d, b2)

    out = out.reshape(N, D, H, W, Cop)[..., :Cout]      # drop lane padding
    return jnp.transpose(out, (0, 4, 1, 2, 3))          # NDHWC -> NCDHW


def fold_params(ws, gammas, betas, means, vars_):
    """Fold 4 (conv, BN-eval) branches into one 3x3x3 conv weight + bias.

    ws: [w1 (Co,Ci,3,3,3), w2 (Co,Ci,1,1,3), w3 (Co,Ci,3,1,1), w4 (Co,Ci,1,3,1)]
    Returns w_eff (3,3,3,Ci,Co), b_eff (Co,).
    """
    w1, w2, w3, w4 = ws
    scales = [g / jnp.sqrt(v + EPS) for g, v in zip(gammas, vars_)]
    shifts = [b - m * s for b, m, s in zip(betas, means, scales)]

    w_comb = scales[0][:, None, None, None, None] * w1                 # (Co,Ci,3,3,3)
    # (1,1,3) pad (0,0,1) -> lives at kd=1, kh=1 of the 3x3x3 kernel
    w_comb = w_comb.at[:, :, 1, 1, :].add(scales[1][:, None, None] * w2[:, :, 0, 0, :])
    # (3,1,1) pad (1,0,0) -> lives at kh=1, kw=1
    w_comb = w_comb.at[:, :, :, 1, 1].add(scales[2][:, None, None] * w3[:, :, :, 0, 0])
    # (1,3,1) pad (0,1,0) -> lives at kd=1, kw=1
    w_comb = w_comb.at[:, :, 1, :, 1].add(scales[3][:, None, None] * w4[:, :, 0, :, 0])

    b_comb = shifts[0] + shifts[1] + shifts[2] + shifts[3]
    # (Co, Ci, kd, kh, kw) -> (kd, kh, kw, Ci, Co) for the channels-last kernel
    w_eff = jnp.transpose(w_comb, (2, 3, 4, 1, 0)).astype(jnp.float32)
    return w_eff, b_comb.astype(jnp.float32)


def ac_layer_reference(x, ws, gammas, betas, means, vars_):
    """Literal 4-branch conv + BN(eval) reference in plain JAX f32 (NCDHW)."""
    pads = [
        [(1, 1), (1, 1), (1, 1)],
        [(0, 0), (0, 0), (1, 1)],
        [(1, 1), (0, 0), (0, 0)],
        [(0, 0), (1, 1), (0, 0)],
    ]
    out = 0.0
    for w, g, b, m, v, pad in zip(ws, gammas, betas, means, vars_, pads):
        y = lax.conv_general_dilated(
            x, w, window_strides=(1, 1, 1), padding=pad,
            dimension_numbers=("NCDHW", "OIDHW", "NCDHW"),
            precision=lax.Precision.HIGHEST)
        s = g / jnp.sqrt(v + EPS)
        y = y * s[None, :, None, None, None] + (b - m * s)[None, :, None, None, None]
        out = out + y
    return out


def ac_layer_folded_bf16_ref(x, w_eff, b_eff):
    """Effective single 3x3x3 conv with bf16-cast operands, f32 accumulation.

    Numerically matches the Pallas kernel (same bf16 rounding of operands),
    so it validates the kernel's indexing/contraction tightly."""
    xb = x.astype(jnp.bfloat16).astype(jnp.float32)
    wb = w_eff.astype(jnp.bfloat16).astype(jnp.float32)
    w_oidhw = jnp.transpose(wb, (4, 3, 0, 1, 2))      # (kd,kh,kw,Ci,Co)->(Co,Ci,kd,kh,kw)
    y = lax.conv_general_dilated(
        xb, w_oidhw, window_strides=(1, 1, 1),
        padding=[(1, 1), (1, 1), (1, 1)],
        dimension_numbers=("NCDHW", "OIDHW", "NCDHW"),
        precision=lax.Precision.HIGHEST)
    return y + b_eff[None, :, None, None, None]


if __name__ == "__main__":
    N, Cin, Cout, D, H, W = 2, 4, 8, 8, 8, 8
    key = jax.random.PRNGKey(0)
    keys = jax.random.split(key, 21)

    x = jax.random.normal(keys[0], (N, Cin, D, H, W), jnp.float32)

    # Conv weights (PyTorch OIDHW shapes), deterministic init.
    w1 = 0.1 * jax.random.normal(keys[1], (Cout, Cin, 3, 3, 3), jnp.float32)
    w2 = 0.1 * jax.random.normal(keys[2], (Cout, Cin, 1, 1, 3), jnp.float32)
    w3 = 0.1 * jax.random.normal(keys[3], (Cout, Cin, 3, 1, 1), jnp.float32)
    w4 = 0.1 * jax.random.normal(keys[4], (Cout, Cin, 1, 3, 1), jnp.float32)
    ws = [w1, w2, w3, w4]

    # BatchNorm3d (eval-mode) parameters per branch.
    gammas = [1.0 + 0.1 * jax.random.normal(keys[5 + i], (Cout,), jnp.float32) for i in range(4)]
    betas = [0.1 * jax.random.normal(keys[9 + i], (Cout,), jnp.float32) for i in range(4)]
    means = [0.1 * jax.random.normal(keys[13 + i], (Cout,), jnp.float32) for i in range(4)]
    vars_ = [1.0 + 0.5 * jnp.abs(jax.random.normal(keys[17 + i], (Cout,), jnp.float32)) for i in range(4)]

    w_eff, b_eff = fold_params(ws, gammas, betas, means, vars_)

    out = ac_layer_pallas(x, w_eff, b_eff, tile_d=4)   # grid (N=2, n_td=2)
    out = jax.block_until_ready(out)
    assert out.shape == (N, Cout, D, H, W), out.shape

    # Tight check vs. a numerically matched (bf16-operand, f32-accum) reference.
    ref_fold = jax.block_until_ready(ac_layer_folded_bf16_ref(x, w_eff, b_eff))
    err_fold = float(np.max(np.abs(np.asarray(out) - np.asarray(ref_fold))))
    assert np.allclose(np.asarray(out), np.asarray(ref_fold), rtol=1e-3, atol=1e-3), err_fold

    # End-to-end check vs. the literal f32 4-branch module (bf16 operand
    # rounding in the kernel -> looser tolerance).
    ref_lit = jax.block_until_ready(
        ac_layer_reference(x, ws, gammas, betas, means, vars_))
    err_lit = float(np.max(np.abs(np.asarray(out) - np.asarray(ref_lit))))
    assert np.allclose(np.asarray(out), np.asarray(ref_lit), rtol=3e-2, atol=3e-2), err_lit

    print("KERNEL_OK")
</pallas_src>

<mosaic_0001>
module attributes {stable_mosaic.version = 11 : i64} {
  func.func @ac_kernel(%arg0: i32, %arg1: i32, %arg2: memref<1x1x6x10x10x4xbf16, #tpu.memory_space<vmem>>, %arg3: memref<108x128xbf16, #tpu.memory_space<vmem>>, %arg4: memref<1x128xf32, #tpu.memory_space<vmem>>, %arg5: memref<1x1x4x8x8x128xf32, #tpu.memory_space<vmem>>) attributes {dimension_semantics = [#tpu.dimension_semantics<parallel>, #tpu.dimension_semantics<parallel>], iteration_bounds = array<i64: 2, 2>, scalar_prefetch = 0 : i64, scratch_operands = 0 : i64, tpu.core_type = #tpu.core_type<tc>, window_params = [{transform_indices = @transform_0, window_bounds = array<i64: 1, 1, 6, 10, 10, 4>}, {pipeline_mode = #tpu.pipeline_mode<synchronous>, transform_indices = @transform_1, window_bounds = array<i64: 108, 128>}, {pipeline_mode = #tpu.pipeline_mode<synchronous>, transform_indices = @transform_2, window_bounds = array<i64: 1, 128>}, {transform_indices = @transform_3, window_bounds = array<i64: 1, 1, 4, 8, 8, 128>}]} {
    %c0 = arith.constant 0 : index
    %c0_0 = arith.constant 0 : index
    %c0_1 = arith.constant 0 : index
    %c0_2 = arith.constant 0 : index
    %c0_3 = arith.constant 0 : index
    %c0_4 = arith.constant 0 : index
    %0 = vector.load %arg2[%c0, %c0_0, %c0_1, %c0_2, %c0_3, %c0_4] : memref<1x1x6x10x10x4xbf16, #tpu.memory_space<vmem>>, vector<1x1x6x10x10x4xbf16>
    %1 = vector.shape_cast %0 : vector<1x1x6x10x10x4xbf16> to vector<6x10x10x4xbf16>
    %2 = vector.extract_strided_slice %1 {offsets = [0, 0, 0, 0], sizes = [4, 8, 8, 4], strides = [1, 1, 1, 1]} : vector<6x10x10x4xbf16> to vector<4x8x8x4xbf16>
    %3 = vector.extract_strided_slice %1 {offsets = [0, 0, 1, 0], sizes = [4, 8, 8, 4], strides = [1, 1, 1, 1]} : vector<6x10x10x4xbf16> to vector<4x8x8x4xbf16>
    %4 = vector.extract_strided_slice %1 {offsets = [0, 0, 2, 0], sizes = [4, 8, 8, 4], strides = [1, 1, 1, 1]} : vector<6x10x10x4xbf16> to vector<4x8x8x4xbf16>
    %5 = vector.extract_strided_slice %1 {offsets = [0, 1, 0, 0], sizes = [4, 8, 8, 4], strides = [1, 1, 1, 1]} : vector<6x10x10x4xbf16> to vector<4x8x8x4xbf16>
    %6 = vector.extract_strided_slice %1 {offsets = [0, 1, 1, 0], sizes = [4, 8, 8, 4], strides = [1, 1, 1, 1]} : vector<6x10x10x4xbf16> to vector<4x8x8x4xbf16>
    %7 = vector.extract_strided_slice %1 {offsets = [0, 1, 2, 0], sizes = [4, 8, 8, 4], strides = [1, 1, 1, 1]} : vector<6x10x10x4xbf16> to vector<4x8x8x4xbf16>
    %8 = vector.extract_strided_slice %1 {offsets = [0, 2, 0, 0], sizes = [4, 8, 8, 4], strides = [1, 1, 1, 1]} : vector<6x10x10x4xbf16> to vector<4x8x8x4xbf16>
    %9 = vector.extract_strided_slice %1 {offsets = [0, 2, 1, 0], sizes = [4, 8, 8, 4], strides = [1, 1, 1, 1]} : vector<6x10x10x4xbf16> to vector<4x8x8x4xbf16>
    %10 = vector.extract_strided_slice %1 {offsets = [0, 2, 2, 0], sizes = [4, 8, 8, 4], strides = [1, 1, 1, 1]} : vector<6x10x10x4xbf16> to vector<4x8x8x4xbf16>
    %11 = vector.extract_strided_slice %1 {offsets = [1, 0, 0, 0], sizes = [4, 8, 8, 4], strides = [1, 1, 1, 1]} : vector<6x10x10x4xbf16> to vector<4x8x8x4xbf16>
    %12 = vector.extract_strided_slice %1 {offsets = [1, 0, 1, 0], sizes = [4, 8, 8, 4], strides = [1, 1, 1, 1]} : vector<6x10x10x4xbf16> to vector<4x8x8x4xbf16>
    %13 = vector.extract_strided_slice %1 {offsets = [1, 0, 2, 0], sizes = [4, 8, 8, 4], strides = [1, 1, 1, 1]} : vector<6x10x10x4xbf16> to vector<4x8x8x4xbf16>
    %14 = vector.extract_strided_slice %1 {offsets = [1, 1, 0, 0], sizes = [4, 8, 8, 4], strides = [1, 1, 1, 1]} : vector<6x10x10x4xbf16> to vector<4x8x8x4xbf16>
    %15 = vector.extract_strided_slice %1 {offsets = [1, 1, 1, 0], sizes = [4, 8, 8, 4], strides = [1, 1, 1, 1]} : vector<6x10x10x4xbf16> to vector<4x8x8x4xbf16>
    %16 = vector.extract_strided_slice %1 {offsets = [1, 1, 2, 0], sizes = [4, 8, 8, 4], strides = [1, 1, 1, 1]} : vector<6x10x10x4xbf16> to vector<4x8x8x4xbf16>
    %17 = vector.extract_strided_slice %1 {offsets = [1, 2, 0, 0], sizes = [4, 8, 8, 4], strides = [1, 1, 1, 1]} : vector<6x10x10x4xbf16> to vector<4x8x8x4xbf16>
    %18 = vector.extract_strided_slice %1 {offsets = [1, 2, 1, 0], sizes = [4, 8, 8, 4], strides = [1, 1, 1, 1]} : vector<6x10x10x4xbf16> to vector<4x8x8x4xbf16>
    %19 = vector.extract_strided_slice %1 {offsets = [1, 2, 2, 0], sizes = [4, 8, 8, 4], strides = [1, 1, 1, 1]} : vector<6x10x10x4xbf16> to vector<4x8x8x4xbf16>
    %20 = vector.extract_strided_slice %1 {offsets = [2, 0, 0, 0], sizes = [4, 8, 8, 4], strides = [1, 1, 1, 1]} : vector<6x10x10x4xbf16> to vector<4x8x8x4xbf16>
    %21 = vector.extract_strided_slice %1 {offsets = [2, 0, 1, 0], sizes = [4, 8, 8, 4], strides = [1, 1, 1, 1]} : vector<6x10x10x4xbf16> to vector<4x8x8x4xbf16>
    %22 = vector.extract_strided_slice %1 {offsets = [2, 0, 2, 0], sizes = [4, 8, 8, 4], strides = [1, 1, 1, 1]} : vector<6x10x10x4xbf16> to vector<4x8x8x4xbf16>
    %23 = vector.extract_strided_slice %1 {offsets = [2, 1, 0, 0], sizes = [4, 8, 8, 4], strides = [1, 1, 1, 1]} : vector<6x10x10x4xbf16> to vector<4x8x8x4xbf16>
    %24 = vector.extract_strided_slice %1 {offsets = [2, 1, 1, 0], sizes = [4, 8, 8, 4], strides = [1, 1, 1, 1]} : vector<6x10x10x4xbf16> to vector<4x8x8x4xbf16>
    %25 = vector.extract_strided_slice %1 {offsets = [2, 1, 2, 0], sizes = [4, 8, 8, 4], strides = [1, 1, 1, 1]} : vector<6x10x10x4xbf16> to vector<4x8x8x4xbf16>
    %26 = vector.extract_strided_slice %1 {offsets = [2, 2, 0, 0], sizes = [4, 8, 8, 4], strides = [1, 1, 1, 1]} : vector<6x10x10x4xbf16> to vector<4x8x8x4xbf16>
    %27 = vector.extract_strided_slice %1 {offsets = [2, 2, 1, 0], sizes = [4, 8, 8, 4], strides = [1, 1, 1, 1]} : vector<6x10x10x4xbf16> to vector<4x8x8x4xbf16>
    %28 = vector.extract_strided_slice %1 {offsets = [2, 2, 2, 0], sizes = [4, 8, 8, 4], strides = [1, 1, 1, 1]} : vector<6x10x10x4xbf16> to vector<4x8x8x4xbf16>
    %29 = tpu.concatenate %2, %3, %4, %5, %6, %7, %8, %9, %10, %11, %12, %13, %14, %15, %16, %17 in 3 : vector<4x8x8x4xbf16>, vector<4x8x8x4xbf16>, vector<4x8x8x4xbf16>, vector<4x8x8x4xbf16>, vector<4x8x8x4xbf16>, vector<4x8x8x4xbf16>, vector<4x8x8x4xbf16>, vector<4x8x8x4xbf16>, vector<4x8x8x4xbf16>, vector<4x8x8x4xbf16>, vector<4x8x8x4xbf16>, vector<4x8x8x4xbf16>, vector<4x8x8x4xbf16>, vector<4x8x8x4xbf16>, vector<4x8x8x4xbf16>, vector<4x8x8x4xbf16> -> vector<4x8x8x64xbf16>
    %30 = tpu.concatenate %18, %19, %20, %21, %22, %23, %24, %25, %26, %27, %28 in 3 : vector<4x8x8x4xbf16>, vector<4x8x8x4xbf16>, vector<4x8x8x4xbf16>, vector<4x8x8x4xbf16>, vector<4x8x8x4xbf16>, vector<4x8x8x4xbf16>, vector<4x8x8x4xbf16>, vector<4x8x8x4xbf16>, vector<4x8x8x4xbf16>, vector<4x8x8x4xbf16>, vector<4x8x8x4xbf16> -> vector<4x8x8x44xbf16>
    %31 = tpu.concatenate %29, %30 in 3 : vector<4x8x8x64xbf16>, vector<4x8x8x44xbf16> -> vector<4x8x8x108xbf16>
    %32 = vector.shape_cast %31 : vector<4x8x8x108xbf16> to vector<256x108xbf16>
    %c0_5 = arith.constant 0 : index
    %c0_6 = arith.constant 0 : index
    %33 = vector.load %arg3[%c0_5, %c0_6] : memref<108x128xbf16, #tpu.memory_space<vmem>>, vector<108x128xbf16>
    %cst = arith.constant dense<0.000000e+00> : vector<256x128xf32>
    %34 = tpu.matmul %32, %33, %cst {dimension_numbers = #tpu.dot_dimension_numbers<[1], [0], [0], [1], [0, 0, 1, 1], [], []>} : vector<256x108xbf16>, vector<108x128xbf16>, vector<256x128xf32> -> vector<256x128xf32>
    %c0_7 = arith.constant 0 : index
    %c0_8 = arith.constant 0 : index
    %35 = vector.load %arg4[%c0_7, %c0_8] : memref<1x128xf32, #tpu.memory_space<vmem>>, vector<1x128xf32>
    %36 = vector.broadcast %35 : vector<1x128xf32> to vector<256x128xf32>
    %37 = arith.addf %34, %36 : vector<256x128xf32>
    %38 = vector.shape_cast %37 : vector<256x128xf32> to vector<1x1x4x8x8x128xf32>
    %c0_9 = arith.constant 0 : index
    %c0_10 = arith.constant 0 : index
    %c0_11 = arith.constant 0 : index
    %c0_12 = arith.constant 0 : index
    %c0_13 = arith.constant 0 : index
    %c0_14 = arith.constant 0 : index
    %39 = vector.load %arg5[%c0_9, %c0_10, %c0_11, %c0_12, %c0_13, %c0_14] : memref<1x1x4x8x8x128xf32, #tpu.memory_space<vmem>>, vector<1x1x4x8x8x128xf32>
    tpu.vector_store %arg5[%c0_9, %c0_10, %c0_11, %c0_12, %c0_13, %c0_14], %38 {strides = array<i32>} : memref<1x1x4x8x8x128xf32, #tpu.memory_space<vmem>>, vector<1x1x4x8x8x128xf32>,
    return
  }
  func.func @transform_0(%arg0: i32, %arg1: i32) -> (i32, i32, i32, i32, i32, i32) {
    %c0_i32 = arith.constant 0 : i32
    %c0_i32_0 = arith.constant 0 : i32
    %c0_i32_1 = arith.constant 0 : i32
    %c0_i32_2 = arith.constant 0 : i32
    %c0_i32_3 = arith.constant 0 : i32
    return %arg0, %arg1, %c0_i32, %c0_i32_0, %c0_i32_1, %c0_i32_2 : i32, i32, i32, i32, i32, i32
  }
  func.func @transform_1(%arg0: i32, %arg1: i32) -> (i32, i32) {
    %c0_i32 = arith.constant 0 : i32
    %c0_i32_0 = arith.constant 0 : i32
    %c0_i32_1 = arith.constant 0 : i32
    return %c0_i32, %c0_i32_0 : i32, i32
  }
  func.func @transform_2(%arg0: i32, %arg1: i32) -> (i32, i32) {
    %c0_i32 = arith.constant 0 : i32
    %c0_i32_0 = arith.constant 0 : i32
    %c0_i32_1 = arith.constant 0 : i32
    return %c0_i32, %c0_i32_0 : i32, i32
  }
  func.func @transform_3(%arg0: i32, %arg1: i32) -> (i32, i32, i32, i32, i32, i32) {
    %c0_i32 = arith.constant 0 : i32
    %c0_i32_0 = arith.constant 0 : i32
    %c0_i32_1 = arith.constant 0 : i32
    %c0_i32_2 = arith.constant 0 : i32
    %c0_i32_3 = arith.constant 0 : i32
    return %arg0, %arg1, %c0_i32, %c0_i32_0, %c0_i32_1, %c0_i32_2 : i32, i32, i32, i32, i32, i32
  }
}

</mosaic_0001>

<llo_original>
// kernel: tpu_custom_call.1
$region0: #{tpu_custom_call.1}
  #allocation0 [shape = 'u32[]', space=smem, size = 0x4, offset = 0x4, fixed_abs, tag = 'smem constant byte address 0x4 - core index']
  #allocation1 [shape = 'u32[72,128]{1,0:T(1,128)}', space=vmem, size = 0x9000, scoped, tag = 'internal scratch']
  %s0 = inlined_call_operand.vmem [shape: bf16[2,2,6,10,10,4], index: 0, kind: input, shape index: {}]
  %s1 = inlined_call_operand.vmem [shape: bf16[108,128], index: 1, kind: input, shape index: {}]
  %s2 = inlined_call_operand.vmem [shape: f32[1,128], index: 2, kind: input, shape index: {}]
  %s3 = inlined_call_operand.hbm [shape: f32[2,2,4,8,8,128], index: 3, kind: output, shape index: {}]
  %s4 = sld [smem:[#allocation0]]
  $region45: #{tpu_custom_call.1} parent=0
    _
  %s6 = ssub.s32 1, %s4
  %s7 = scalar_select 0, %s6, %s4
  $region1: #{tpu_custom_call.1} parent=0
    #allocation2 [shape = 'u8[262144]{0}', space=vmem, size = 0x40000, scoped, tag = 'output window, operand 0']
    #allocation3 [shape = 's32[2]{0}', space=sflag, size = 0x8, scoped, tag = 'scoped memory for tpu_custom_call.1']
    %8 = vsyncpa [#allocation3], 0
    %s9 = scalar_lea.sflag [#allocation3], 1
    %10 = vsyncpa %s9, 0
    loop: start=0, step=1, limit=6
    $region2: #{tpu_custom_call.1} parent=1 // loop_pre_header
      _
    $region3: #{tpu_custom_call.1} parent=1 // loop_header
      %s12 = sphi 0, %s16
      %p13 = scmp.ge.s32.totalorder %s12, 6
      %s19 = sphi 0, %s31
      %s20 = sphi 0, %s27
      %s21 = sphi 0, %s19
      %s22 = sphi 0, %s20
      %s23 = sphi 0, %s21
      %s24 = sphi 0, %s22
      %s36 = sphi 0, %s38
      %s39 = sphi 0, %s36
      %s40 = sphi 0, %s39
      %s56 = sphi 0, %s40
      %s60 = sphi 0, %s60
      %s62 = sphi 0, %s60
      %s63 = sphi 0, %s62
      %s77 = sphi 0, %s63
      %s81 = sphi 0, %s81
      %s83 = sphi 0, %s81
      %s84 = sphi 0, %s83
      %s98 = sphi 0, %s84
      %s106 = sphi 0, %s108
      %s109 = sphi 0, %s106
      %s110 = sphi 0, %s109
      %s126 = sphi 0, %s110
    $region4: #{tpu_custom_call.1} parent=1 // loop_header_branch
      %15 = sbr.rel (%p13) target = $region8
    $region5: #{tpu_custom_call.1} parent=1 // loop_body
      %s17 = ssub.s32 %s12, 1
      %s18 = ssub.s32 %s12, 2
      %s25 = sadd.s32 1, %s20
      %p26 = scmp.ge.s32.totalorder %s25, 2
      %s27 = scalar_select %p26, 0, %s25
      %s28 = sadd.s32 1, %s19
      %s29 = scalar_select %p26, %s28, %s19
      %p30 = scmp.ge.s32.totalorder %s29, 2
      %s31 = scalar_select %p30, 0, %s29
      %s32 = ssub.s32 %s19, %s31
      %s33 = ssub.s32 %s20, %s27
      %s34 = sor.u32 %s32, %s33
      %p35 = scmp.eq.s32.totalorder %s34, 0
      %s37 = sadd.s32 %s36, 1
      %s38 = scalar_select %p35, %s36, %s37
      %p41 = pneg %p35
      %p42 = scmp.eq.s32.totalorder %s12, 3
      %p43 = por %p41, %p42
      %p44 = scmp.ne.s32.totalorder %s36, %s39
      %p45 = scmp.eq.s32.totalorder %s12, 0
      %p46 = por %p44, %p45
      %p47 = scmp.ne.s32.totalorder %s36, %s39
      %p48 = scmp.eq.s32.totalorder %s17, 3
      %p49 = por %p47, %p48
      %p50 = scmp.ne.s32.totalorder %s39, %s40
      %p51 = scmp.eq.s32.totalorder %s17, 0
      %p52 = por %p50, %p51
      %p53 = scmp.ne.s32.totalorder %s39, %s40
      %p54 = scmp.eq.s32.totalorder %s18, 3
      %p55 = por %p53, %p54
      %p57 = scmp.ne.s32.totalorder %s40, %s56
      %p58 = scmp.eq.s32.totalorder %s18, 0
      %p59 = por %p57, %p58
      %s61 = sadd.s32 %s60, 1
      %p64 = scmp.eq.s32.totalorder %s12, 3
      %p65 = scmp.ne.s32.totalorder %s60, %s62
      %p66 = scmp.eq.s32.totalorder %s12, 0
      %p67 = por %p65, %p66
      %p68 = scmp.ne.s32.totalorder %s60, %s62
      %p69 = scmp.eq.s32.totalorder %s17, 3
      %p70 = por %p68, %p69
      %p71 = scmp.ne.s32.totalorder %s62, %s63
      %p72 = scmp.eq.s32.totalorder %s17, 0
      %p73 = por %p71, %p72
      %p74 = scmp.ne.s32.totalorder %s62, %s63
      %p75 = scmp.eq.s32.totalorder %s18, 3
      %p76 = por %p74, %p75
      %p78 = scmp.ne.s32.totalorder %s63, %s77
      %p79 = scmp.eq.s32.totalorder %s18, 0
      %p80 = por %p78, %p79
      %s82 = sadd.s32 %s81, 1
      %p85 = scmp.eq.s32.totalorder %s12, 3
      %p86 = scmp.ne.s32.totalorder %s81, %s83
      %p87 = scmp.eq.s32.totalorder %s12, 0
      %p88 = por %p86, %p87
      %p89 = scmp.ne.s32.totalorder %s81, %s83
      %p90 = scmp.eq.s32.totalorder %s17, 3
      %p91 = por %p89, %p90
      %p92 = scmp.ne.s32.totalorder %s83, %s84
      %p93 = scmp.eq.s32.totalorder %s17, 0
      %p94 = por %p92, %p93
      %p95 = scmp.ne.s32.totalorder %s83, %s84
      %p96 = scmp.eq.s32.totalorder %s18, 3
      %p97 = por %p95, %p96
      %p99 = scmp.ne.s32.totalorder %s84, %s98
      %p100 = scmp.eq.s32.totalorder %s18, 0
      %p101 = por %p99, %p100
      %s102 = ssub.s32 %s19, %s31
      %s103 = ssub.s32 %s20, %s27
      %s104 = sor.u32 %s102, %s103
      %p105 = scmp.eq.s32.totalorder %s104, 0
      %s107 = sadd.s32 %s106, 1
      %s108 = scalar_select %p105, %s106, %s107
      %p111 = pneg %p105
      %p112 = scmp.eq.s32.totalorder %s12, 3
      %p113 = por %p111, %p112
      %p114 = scmp.ne.s32.totalorder %s106, %s109
      %p115 = scmp.eq.s32.totalorder %s12, 0
      %p116 = por %p114, %p115
      %p117 = scmp.ne.s32.totalorder %s106, %s109
      %p118 = scmp.eq.s32.totalorder %s17, 3
      %p119 = por %p117, %p118
      %p120 = scmp.ne.s32.totalorder %s109, %s110
      %p121 = scmp.eq.s32.totalorder %s17, 0
      %p122 = por %p120, %p121
      %p123 = scmp.ne.s32.totalorder %s109, %s110
      %p124 = scmp.eq.s32.totalorder %s18, 3
      %p125 = por %p123, %p124
      %p127 = scmp.ne.s32.totalorder %s110, %s126
      %p128 = scmp.eq.s32.totalorder %s18, 0
      %p129 = por %p127, %p128
      %p130 = scmp.le.s32.totalorder 1, %s12
      %p131 = scmp.lt.s32.totalorder %s12, 5
      %p132 = pnand %p130, %p131
      %p133 = pneg %p132
      // Predicated region
      $region9: #{tpu_custom_call.1} parent=5 // pred_check
        _
      $region10: #{tpu_custom_call.1} parent=5 // pred_check_branch
        %135 = sbr.rel (%p132) target = $region12
      $region11: #{tpu_custom_call.1} parent=5 // pred_region
        %s136 = ssub.s32 %s12, 1
        // Predicated region
        $region13: #{tpu_custom_call.1} parent=11 // pred_check
          %p137 = pneg %p73
        $region14: #{tpu_custom_call.1} parent=11 // pred_check_branch
          %139 = sbr.rel (%p137) target = $region16
        $region15: #{tpu_custom_call.1} parent=11 // pred_region
          _
        $region16: #{tpu_custom_call.1} parent=11 // pred_fallthru
          _
        // Predicated region
        $region17: #{tpu_custom_call.1} parent=11 // pred_check
          %p140 = pneg %p94
        $region18: #{tpu_custom_call.1} parent=11 // pred_check_branch
          %142 = sbr.rel (%p140) target = $region20
        $region19: #{tpu_custom_call.1} parent=11 // pred_region
          _
        $region20: #{tpu_custom_call.1} parent=11 // pred_fallthru
          _
      $region12: #{tpu_custom_call.1} parent=5 // pred_fallthru
        _
      %p143 = scmp.lt.s32.totalorder %s12, 4
      // Predicated region
      $region21: #{tpu_custom_call.1} parent=5 // pred_check
        %p144 = pneg %p143
      $region22: #{tpu_custom_call.1} parent=5 // pred_check_branch
        %146 = sbr.rel (%p144) target = $region24
      $region23: #{tpu_custom_call.1} parent=5 // pred_region
        // Predicated region
        $region25: #{tpu_custom_call.1} parent=23 // pred_check
          %p147 = pneg %p46
        $region26: #{tpu_custom_call.1} parent=23 // pred_check_branch
          %149 = sbr.rel (%p147) target = $region28
        $region27: #{tpu_custom_call.1} parent=23 // pred_region
          %p150 = scmp.lt.s32.totalorder %s19, 1
          %s151 = scalar_select %p150, %s19, 1
          %p152 = scmp.lt.s32.totalorder %s20, 1
          %s153 = scalar_select %p152, %s20, 1
          %s154 = smul.addr %s153, 120
          %s155 = smul.addr %s151, 240
          %s156 = sadd.s32 %s154, %s155
          %s157 = smul.addr %s156, 4
          %s158 = scalar_lea.vmem %s0, %s157
        $region28: #{tpu_custom_call.1} parent=23 // pred_fallthru
          _
      $region24: #{tpu_custom_call.1} parent=5 // pred_fallthru
        _
      %p159 = scmp.le.s32.totalorder 1, %s12
      %p160 = scmp.lt.s32.totalorder %s12, 5
      %p161 = pnand %p159, %p160
      %p162 = pneg %p161
      // Predicated region
      $region29: #{tpu_custom_call.1} parent=5 // pred_check
        _
      $region30: #{tpu_custom_call.1} parent=5 // pred_check_branch
        %164 = sbr.rel (%p161) target = $region32
      $region31: #{tpu_custom_call.1} parent=5 // pred_region
        %s165 = ssub.s32 %s12, 1
        %p166 = scmp.lt.s32.totalorder %s21, 1
        %s167 = scalar_select %p166, %s21, 1
        %p168 = scmp.lt.s32.totalorder %s22, 1
        %s169 = scalar_select %p168, %s22, 1
        %s170 = smul.addr %s169, 120
        %s171 = smul.addr %s167, 240
        %s172 = sadd.s32 %s170, %s171
        %s173 = smul.addr %s172, 4
        %s174 = scalar_lea.vmem %s0, %s173
        %p175 = pneg %p52
        %p176 = pneg %p49
        %p177 = pneg %p73
        %p178 = pneg %p70
        %p179 = pneg %p94
        %p180 = pneg %p91
        %p181 = pneg %p122
        %p182 = pneg %p119
        %s183 = sand.u32 %s109, 1
        %s184 = scalar_lea.sflag [#allocation3], %s183
        %s185 = sand.u32 %s109, 1
        %s186 = smul.addr %s185, 256
        %s187 = scalar_lea.vmem [#allocation2], %s186
        %p188 = scmp.lt.s32.totalorder %s21, 1
        %s189 = scalar_select %p188, %s21, 1
        %p190 = scmp.lt.s32.totalorder %s22, 1
        %s191 = scalar_select %p190, %s22, 1
        %s192 = smul.addr %s191, 120
        %s193 = smul.addr %s189, 240
        %s194 = sadd.s32 %s192, %s193
        %s195 = smul.addr %s194, 4
        %s196 = scalar_lea.vmem %s0, %s195
        %v198 = vld [vmem:[%s196] sm:$0xf]
        %v199 = vld [vmem:[%s196 + $0x4] sm:$0x1]
        %v200 = vld [vmem:[%s196 + $0x8] sm:$0xf]
        %v201 = vld [vmem:[%s196 + $0xc] sm:$0x1]
        %v202 = vld [vmem:[%s196 + $0x10] sm:$0xf]
        %v203 = vld [vmem:[%s196 + $0x14] sm:$0x1]
        %v204 = vld [vmem:[%s196 + $0x18] sm:$0xf]
        %v205 = vld [vmem:[%s196 + $0x1c] sm:$0x1]
        %v206 = vld [vmem:[%s196 + $0x20] sm:$0xf]
        %v207 = vld [vmem:[%s196 + $0x24] sm:$0x1]
        %v208 = vld [vmem:[%s196 + $0x28] sm:$0xf]
        %v209 = vld [vmem:[%s196 + $0x2c] sm:$0x1]
        %v210 = vld [vmem:[%s196 + $0x30] sm:$0xf]
        %v211 = vld [vmem:[%s196 + $0x34] sm:$0x1]
        %v212 = vld [vmem:[%s196 + $0x38] sm:$0xf]
        %v213 = vld [vmem:[%s196 + $0x3c] sm:$0x1]
        %v214 = vld [vmem:[%s196 + $0x40] sm:$0xf]
        %v215 = vld [vmem:[%s196 + $0x44] sm:$0x1]
        %v216 = vld [vmem:[%s196 + $0x48] sm:$0xf]
        %v217 = vld [vmem:[%s196 + $0x4c] sm:$0x1]
        %v218 = vld [vmem:[%s196 + $0x50] sm:$0xf]
        %v219 = vld [vmem:[%s196 + $0x54] sm:$0x1]
        %v220 = vld [vmem:[%s196 + $0x58] sm:$0xf]
        %v221 = vld [vmem:[%s196 + $0x5c] sm:$0x1]
        %v222 = vld [vmem:[%s196 + $0x60] sm:$0xf]
        %v223 = vld [vmem:[%s196 + $0x64] sm:$0x1]
        %v224 = vld [vmem:[%s196 + $0x68] sm:$0xf]
        %v225 = vld [vmem:[%s196 + $0x6c] sm:$0x1]
        %v226 = vld [vmem:[%s196 + $0x70] sm:$0xf]
        %v227 = vld [vmem:[%s196 + $0x74] sm:$0x1]
        %v228 = vld [vmem:[%s196 + $0x78] sm:$0xf]
        %v229 = vld [vmem:[%s196 + $0x7c] sm:$0x1]
        %v230 = vld [vmem:[%s196 + $0x80] sm:$0xf]
        %v231 = vld [vmem:[%s196 + $0x84] sm:$0x1]
        %v232 = vld [vmem:[%s196 + $0x88] sm:$0xf]
        %v233 = vld [vmem:[%s196 + $0x8c] sm:$0x1]
        %v234 = vld [vmem:[%s196 + $0x90] sm:$0xf]
        %v235 = vld [vmem:[%s196 + $0x94] sm:$0x1]
        %v236 = vld [vmem:[%s196 + $0x98] sm:$0xf]
        %v237 = vld [vmem:[%s196 + $0x9c] sm:$0x1]
        %v238 = vld [vmem:[%s196 + $0xa0] sm:$0xf]
        %v239 = vld [vmem:[%s196 + $0xa4] sm:$0x1]
        %v240 = vld [vmem:[%s196 + $0xa8] sm:$0xf]
        %v241 = vld [vmem:[%s196 + $0xac] sm:$0x1]
        %v242 = vld [vmem:[%s196 + $0xb0] sm:$0xf]
        %v243 = vld [vmem:[%s196 + $0xb4] sm:$0x1]
        %v244 = vld [vmem:[%s196 + $0xb8] sm:$0xf]
        %v245 = vld [vmem:[%s196 + $0xbc] sm:$0x1]
        %v246 = vld [vmem:[%s196 + $0xc0] sm:$0xf]
        %v247 = vld [vmem:[%s196 + $0xc4] sm:$0x1]
        %v248 = vld [vmem:[%s196 + $0xc8] sm:$0xf]
        %v249 = vld [vmem:[%s196 + $0xcc] sm:$0x1]
        %v250 = vld [vmem:[%s196 + $0xd0] sm:$0xf]
        %v251 = vld [vmem:[%s196 + $0xd4] sm:$0x1]
        %v252 = vld [vmem:[%s196 + $0xd8] sm:$0xf]
        %v253 = vld [vmem:[%s196 + $0xdc] sm:$0x1]
        %v254 = vld [vmem:[%s196 + $0xe0] sm:$0xf]
        %v255 = vld [vmem:[%s196 + $0xe4] sm:$0x1]
        %v256 = vld [vmem:[%s196 + $0xe8] sm:$0xf]
        %v257 = vld [vmem:[%s196 + $0xec] sm:$0x1]
        %v258 = vld [vmem:[%s196 + $0xf0] sm:$0xf]
        %v259 = vld [vmem:[%s196 + $0xf4] sm:$0x1]
        %v260 = vld [vmem:[%s196 + $0xf8] sm:$0xf]
        %v261 = vld [vmem:[%s196 + $0xfc] sm:$0x1]
        %v262 = vld [vmem:[%s196 + $0x100] sm:$0xf]
        %v263 = vld [vmem:[%s196 + $0x104] sm:$0x1]
        %v264 = vld [vmem:[%s196 + $0x108] sm:$0xf]
        %v265 = vld [vmem:[%s196 + $0x10c] sm:$0x1]
        %v266 = vld [vmem:[%s196 + $0x110] sm:$0xf]
        %v267 = vld [vmem:[%s196 + $0x114] sm:$0x1]
        %v268 = vld [vmem:[%s196 + $0x118] sm:$0xf]
        %v269 = vld [vmem:[%s196 + $0x11c] sm:$0x1]
        %v270 = vld [vmem:[%s196 + $0x120] sm:$0xf]
        %v271 = vld [vmem:[%s196 + $0x124] sm:$0x1]
        %v272 = vld [vmem:[%s196 + $0x128] sm:$0xf]
        %v273 = vld [vmem:[%s196 + $0x12c] sm:$0x1]
        %v274 = vld [vmem:[%s196 + $0x130] sm:$0xf]
        %v275 = vld [vmem:[%s196 + $0x134] sm:$0x1]
        %v276 = vld [vmem:[%s196 + $0x138] sm:$0xf]
        %v277 = vld [vmem:[%s196 + $0x13c] sm:$0x1]
        %v278 = vld [vmem:[%s196 + $0x140] sm:$0xf]
        %v279 = vld [vmem:[%s196 + $0x144] sm:$0x1]
        %v280 = vld [vmem:[%s196 + $0x148] sm:$0xf]
        %v281 = vld [vmem:[%s196 + $0x14c] sm:$0x1]
        %v282 = vld [vmem:[%s196 + $0x150] sm:$0xf]
        %v283 = vld [vmem:[%s196 + $0x154] sm:$0x1]
        %v284 = vld [vmem:[%s196 + $0x158] sm:$0xf]
        %v285 = vld [vmem:[%s196 + $0x15c] sm:$0x1]
        %v286 = vld [vmem:[%s196 + $0x160] sm:$0xf]
        %v287 = vld [vmem:[%s196 + $0x164] sm:$0x1]
        %v288 = vld [vmem:[%s196 + $0x168] sm:$0xf]
        %v289 = vld [vmem:[%s196 + $0x16c] sm:$0x1]
        %v290 = vld [vmem:[%s196 + $0x170] sm:$0xf]
        %v291 = vld [vmem:[%s196 + $0x174] sm:$0x1]
        %v292 = vld [vmem:[%s196 + $0x178] sm:$0xf]
        %v293 = vld [vmem:[%s196 + $0x17c] sm:$0x1]
        %v294 = vld [vmem:[%s196 + $0x180] sm:$0xf]
        %v295 = vld [vmem:[%s196 + $0x184] sm:$0x1]
        %v296 = vld [vmem:[%s196 + $0x188] sm:$0xf]
        %v297 = vld [vmem:[%s196 + $0x18c] sm:$0x1]
        %v298 = vld [vmem:[%s196 + $0x190] sm:$0xf]
        %v299 = vld [vmem:[%s196 + $0x194] sm:$0x1]
        %v300 = vld [vmem:[%s196 + $0x198] sm:$0xf]
        %v301 = vld [vmem:[%s196 + $0x19c] sm:$0x1]
        %v302 = vld [vmem:[%s196 + $0x1a0] sm:$0xf]
        %v303 = vld [vmem:[%s196 + $0x1a4] sm:$0x1]
        %v304 = vld [vmem:[%s196 + $0x1a8] sm:$0xf]
        %v305 = vld [vmem:[%s196 + $0x1ac] sm:$0x1]
        %v306 = vld [vmem:[%s196 + $0x1b0] sm:$0xf]
        %v307 = vld [vmem:[%s196 + $0x1b4] sm:$0x1]
        %v308 = vld [vmem:[%s196 + $0x1b8] sm:$0xf]
        %v309 = vld [vmem:[%s196 + $0x1bc] sm:$0x1]
        %v310 = vld [vmem:[%s196 + $0x1c0] sm:$0xf]
        %v311 = vld [vmem:[%s196 + $0x1c4] sm:$0x1]
        %v312 = vld [vmem:[%s196 + $0x1c8] sm:$0xf]
        %v313 = vld [vmem:[%s196 + $0x1cc] sm:$0x1]
        %v314 = vld [vmem:[%s196 + $0x1d0] sm:$0xf]
        %v315 = vld [vmem:[%s196 + $0x1d4] sm:$0x1]
        %v316 = vld [vmem:[%s196 + $0x1d8] sm:$0xf]
        %v317 = vld [vmem:[%s196 + $0x1dc] sm:$0x1]
        %v382 = vunpack.c.l.b16 %v198
        %v383 = vunpack.c.l.b16 %v199
        %v384 = vunpack.c.l.b16 %v200
        %v385 = vunpack.c.l.b16 %v201
        %v386 = vunpack.c.l.b16 %v202
        %v387 = vunpack.c.l.b16 %v203
        %v388 = vunpack.c.l.b16 %v204
        %v389 = vunpack.c.l.b16 %v205
        %v390 = vunpack.c.l.b16 %v206
        %v391 = vunpack.c.l.b16 %v207
        %v392 = vunpack.c.l.b16 %v208
        %v393 = vunpack.c.l.b16 %v209
        %v394 = vunpack.c.l.b16 %v210
        %v395 = vunpack.c.l.b16 %v211
        %v396 = vunpack.c.l.b16 %v212
        %v397 = vunpack.c.l.b16 %v213
        %v398 = vunpack.c.l.b16 %v218
        %v399 = vunpack.c.l.b16 %v219
        %v400 = vunpack.c.l.b16 %v220
        %v401 = vunpack.c.l.b16 %v221
        %v402 = vunpack.c.l.b16 %v222
        %v403 = vunpack.c.l.b16 %v223
        %v404 = vunpack.c.l.b16 %v224
        %v405 = vunpack.c.l.b16 %v225
        %v406 = vunpack.c.l.b16 %v226
        %v407 = vunpack.c.l.b16 %v227
        %v408 = vunpack.c.l.b16 %v228
        %v409 = vunpack.c.l.b16 %v229
        %v410 = vunpack.c.l.b16 %v230
        %v411 = vunpack.c.l.b16 %v231
        %v412 = vunpack.c.l.b16 %v232
        %v413 = vunpack.c.l.b16 %v233
        %v414 = vunpack.c.l.b16 %v238
        %v415 = vunpack.c.l.b16 %v239
        %v416 = vunpack.c.l.b16 %v240
        %v417 = vunpack.c.l.b16 %v241
        %v418 = vunpack.c.l.b16 %v242
        %v419 = vunpack.c.l.b16 %v243
        %v420 = vunpack.c.l.b16 %v244
        %v421 = vunpack.c.l.b16 %v245
        %v422 = vunpack.c.l.b16 %v246
        %v423 = vunpack.c.l.b16 %v247
        %v424 = vunpack.c.l.b16 %v248
        %v425 = vunpack.c.l.b16 %v249
        %v426 = vunpack.c.l.b16 %v250
        %v427 = vunpack.c.l.b16 %v251
        %v428 = vunpack.c.l.b16 %v252
        %v429 = vunpack.c.l.b16 %v253
        %v430 = vunpack.c.l.b16 %v258
        %v431 = vunpack.c.l.b16 %v259
        %v432 = vunpack.c.l.b16 %v260
        %v433 = vunpack.c.l.b16 %v261
        %v434 = vunpack.c.l.b16 %v262
        %v435 = vunpack.c.l.b16 %v263
        %v436 = vunpack.c.l.b16 %v264
        %v437 = vunpack.c.l.b16 %v265
        %v438 = vunpack.c.l.b16 %v266
        %v439 = vunpack.c.l.b16 %v267
        %v440 = vunpack.c.l.b16 %v268
        %v441 = vunpack.c.l.b16 %v269
        %v442 = vunpack.c.l.b16 %v270
        %v443 = vunpack.c.l.b16 %v271
        %v444 = vunpack.c.l.b16 %v272
        %v445 = vunpack.c.l.b16 %v273
        %v446 = vpack.c.b16 %v383, %v382
        %v447 = vpack.c.b16 %v385, %v384
        %v448 = vpack.c.b16 %v387, %v386
        %v449 = vpack.c.b16 %v389, %v388
        %v450 = vpack.c.b16 %v391, %v390
        %v451 = vpack.c.b16 %v393, %v392
        %v452 = vpack.c.b16 %v395, %v394
        %v453 = vpack.c.b16 %v397, %v396
        %v454 = vpack.c.b16 %v399, %v398
        %v455 = vpack.c.b16 %v401, %v400
        %v456 = vpack.c.b16 %v403, %v402
        %v457 = vpack.c.b16 %v405, %v404
        %v458 = vpack.c.b16 %v407, %v406
        %v459 = vpack.c.b16 %v409, %v408
        %v460 = vpack.c.b16 %v411, %v410
        %v461 = vpack.c.b16 %v413, %v412
        %v462 = vpack.c.b16 %v415, %v414
        %v463 = vpack.c.b16 %v417, %v416
        %v464 = vpack.c.b16 %v419, %v418
        %v465 = vpack.c.b16 %v421, %v420
        %v466 = vpack.c.b16 %v423, %v422
        %v467 = vpack.c.b16 %v425, %v424
        %v468 = vpack.c.b16 %v427, %v426
        %v469 = vpack.c.b16 %v429, %v428
        %v470 = vpack.c.b16 %v431, %v430
        %v471 = vpack.c.b16 %v433, %v432
        %v472 = vpack.c.b16 %v435, %v434
        %v473 = vpack.c.b16 %v437, %v436
        %v474 = vpack.c.b16 %v439, %v438
        %v475 = vpack.c.b16 %v441, %v440
        %v476 = vpack.c.b16 %v443, %v442
        %v477 = vpack.c.b16 %v445, %v444
        %v479 = vshrl.u32 %v446, 16
        %v481 = vshll.u32 %v446, 16
        %v483 = vrot.slane %v481, 1
        %v484 = vor.u32 %v479, %v483
        %v486 = vshrl.u32 %v447, 16
        %v488 = vshll.u32 %v447, 16
        %v490 = vrot.slane %v488, 1
        %v491 = vor.u32 %v486, %v490
        %v493 = vshrl.u32 %v448, 16
        %v495 = vshll.u32 %v448, 16
        %v497 = vrot.slane %v495, 1
        %v498 = vor.u32 %v493, %v497
        %v500 = vshrl.u32 %v449, 16
        %v502 = vshll.u32 %v449, 16
        %v504 = vrot.slane %v502, 1
        %v505 = vor.u32 %v500, %v504
        %v507 = vshrl.u32 %v450, 16
        %v509 = vshll.u32 %v450, 16
        %v511 = vrot.slane %v509, 1
        %v512 = vor.u32 %v507, %v511
        %v514 = vshrl.u32 %v451, 16
        %v516 = vshll.u32 %v451, 16
        %v518 = vrot.slane %v516, 1
        %v519 = vor.u32 %v514, %v518
        %v521 = vshrl.u32 %v452, 16
        %v523 = vshll.u32 %v452, 16
        %v525 = vrot.slane %v523, 1
        %v526 = vor.u32 %v521, %v525
        %v528 = vshrl.u32 %v453, 16
        %v530 = vshll.u32 %v453, 16
        %v532 = vrot.slane %v530, 1
        %v533 = vor.u32 %v528, %v532
        %v535 = vshrl.u32 %v454, 16
        %v537 = vshll.u32 %v454, 16
        %v539 = vrot.slane %v537, 1
        %v540 = vor.u32 %v535, %v539
        %v542 = vshrl.u32 %v455, 16
        %v544 = vshll.u32 %v455, 16
        %v546 = vrot.slane %v544, 1
        %v547 = vor.u32 %v542, %v546
        %v549 = vshrl.u32 %v456, 16
        %v551 = vshll.u32 %v456, 16
        %v553 = vrot.slane %v551, 1
        %v554 = vor.u32 %v549, %v553
        %v556 = vshrl.u32 %v457, 16
        %v558 = vshll.u32 %v457, 16
        %v560 = vrot.slane %v558, 1
        %v561 = vor.u32 %v556, %v560
        %v563 = vshrl.u32 %v458, 16
        %v565 = vshll.u32 %v458, 16
        %v567 = vrot.slane %v565, 1
        %v568 = vor.u32 %v563, %v567
        %v570 = vshrl.u32 %v459, 16
        %v572 = vshll.u32 %v459, 16
        %v574 = vrot.slane %v572, 1
        %v575 = vor.u32 %v570, %v574
        %v577 = vshrl.u32 %v460, 16
        %v579 = vshll.u32 %v460, 16
        %v581 = vrot.slane %v579, 1
        %v582 = vor.u32 %v577, %v581
        %v584 = vshrl.u32 %v461, 16
        %v586 = vshll.u32 %v461, 16
        %v588 = vrot.slane %v586, 1
        %v589 = vor.u32 %v584, %v588
        %v591 = vshrl.u32 %v462, 16
        %v593 = vshll.u32 %v462, 16
        %v595 = vrot.slane %v593, 1
        %v596 = vor.u32 %v591, %v595
        %v598 = vshrl.u32 %v463, 16
        %v600 = vshll.u32 %v463, 16
        %v602 = vrot.slane %v600, 1
        %v603 = vor.u32 %v598, %v602
        %v605 = vshrl.u32 %v464, 16
        %v607 = vshll.u32 %v464, 16
        %v609 = vrot.slane %v607, 1
        %v610 = vor.u32 %v605, %v609
        %v612 = vshrl.u32 %v465, 16
        %v614 = vshll.u32 %v465, 16
        %v616 = vrot.slane %v614, 1
        %v617 = vor.u32 %v612, %v616
        %v619 = vshrl.u32 %v466, 16
        %v621 = vshll.u32 %v466, 16
        %v623 = vrot.slane %v621, 1
        %v624 = vor.u32 %v619, %v623
        %v626 = vshrl.u32 %v467, 16
        %v628 = vshll.u32 %v467, 16
        %v630 = vrot.slane %v628, 1
        %v631 = vor.u32 %v626, %v630
        %v633 = vshrl.u32 %v468, 16
        %v635 = vshll.u32 %v468, 16
        %v637 = vrot.slane %v635, 1
        %v638 = vor.u32 %v633, %v637
        %v640 = vshrl.u32 %v469, 16
        %v642 = vshll.u32 %v469, 16
        %v644 = vrot.slane %v642, 1
        %v645 = vor.u32 %v640, %v644
        %v647 = vshrl.u32 %v470, 16
        %v649 = vshll.u32 %v470, 16
        %v651 = vrot.slane %v649, 1
        %v652 = vor.u32 %v647, %v651
        %v654 = vshrl.u32 %v471, 16
        %v656 = vshll.u32 %v471, 16
        %v658 = vrot.slane %v656, 1
        %v659 = vor.u32 %v654, %v658
        %v661 = vshrl.u32 %v472, 16
        %v663 = vshll.u32 %v472, 16
        %v665 = vrot.slane %v663, 1
        %v666 = vor.u32 %v661, %v665
        %v668 = vshrl.u32 %v473, 16
        %v670 = vshll.u32 %v473, 16
        %v672 = vrot.slane %v670, 1
        %v673 = vor.u32 %v668, %v672
        %v675 = vshrl.u32 %v474, 16
        %v677 = vshll.u32 %v474, 16
        %v679 = vrot.slane %v677, 1
        %v680 = vor.u32 %v675, %v679
        %v682 = vshrl.u32 %v475, 16
        %v684 = vshll.u32 %v475, 16
        %v686 = vrot.slane %v684, 1
        %v687 = vor.u32 %v682, %v686
        %v689 = vshrl.u32 %v476, 16
        %v691 = vshll.u32 %v476, 16
        %v693 = vrot.slane %v691, 1
        %v694 = vor.u32 %v689, %v693
        %v696 = vshrl.u32 %v477, 16
        %v698 = vshll.u32 %v477, 16
        %v700 = vrot.slane %v698, 1
        %v701 = vor.u32 %v696, %v700
        %702 = vrot.lane.b32.xlu0 %v484, 4
        %v703 = vpop.permute.xlu0 %702
        %704 = vrot.lane.b32.xlu0 %v491, 4
        %v705 = vpop.permute.xlu0 %704
        %706 = vrot.lane.b32.xlu0 %v498, 4
        %v707 = vpop.permute.xlu0 %706
        %708 = vrot.lane.b32.xlu0 %v505, 4
        %v709 = vpop.permute.xlu0 %708
        %710 = vrot.lane.b32.xlu0 %v512, 4
        %v711 = vpop.permute.xlu0 %710
        %712 = vrot.lane.b32.xlu0 %v519, 4
        %v713 = vpop.permute.xlu0 %712
        %714 = vrot.lane.b32.xlu0 %v526, 4
        %v715 = vpop.permute.xlu0 %714
        %716 = vrot.lane.b32.xlu0 %v533, 4
        %v717 = vpop.permute.xlu0 %716
        %718 = vrot.lane.b32.xlu0 %v540, 4
        %v719 = vpop.permute.xlu0 %718
        %720 = vrot.lane.b32.xlu0 %v547, 4
        %v721 = vpop.permute.xlu0 %720
        %722 = vrot.lane.b32.xlu0 %v554, 4
        %v723 = vpop.permute.xlu0 %722
        %724 = vrot.lane.b32.xlu0 %v561, 4
        %v725 = vpop.permute.xlu0 %724
        %726 = vrot.lane.b32.xlu0 %v568, 4
        %v727 = vpop.permute.xlu0 %726
        %728 = vrot.lane.b32.xlu0 %v575, 4
        %v729 = vpop.permute.xlu0 %728
        %730 = vrot.lane.b32.xlu0 %v582, 4
        %v731 = vpop.permute.xlu0 %730
        %732 = vrot.lane.b32.xlu0 %v589, 4
        %v733 = vpop.permute.xlu0 %732
        %734 = vrot.lane.b32.xlu0 %v596, 4
        %v735 = vpop.permute.xlu0 %734
        %736 = vrot.lane.b32.xlu0 %v603, 4
        %v737 = vpop.permute.xlu0 %736
        %738 = vrot.lane.b32.xlu0 %v610, 4
        %v739 = vpop.permute.xlu0 %738
        %740 = vrot.lane.b32.xlu0 %v617, 4
        %v741 = vpop.permute.xlu0 %740
        %742 = vrot.lane.b32.xlu0 %v624, 4
        %v743 = vpop.permute.xlu0 %742
        %744 = vrot.lane.b32.xlu0 %v631, 4
        %v745 = vpop.permute.xlu0 %744
        %746 = vrot.lane.b32.xlu0 %v638, 4
        %v747 = vpop.permute.xlu0 %746
        %748 = vrot.lane.b32.xlu0 %v645, 4
        %v749 = vpop.permute.xlu0 %748
        %750 = vrot.lane.b32.xlu0 %v652, 4
        %v751 = vpop.permute.xlu0 %750
        %752 = vrot.lane.b32.xlu0 %v659, 4
        %v753 = vpop.permute.xlu0 %752
        %754 = vrot.lane.b32.xlu0 %v666, 4
        %v755 = vpop.permute.xlu0 %754
        %756 = vrot.lane.b32.xlu0 %v673, 4
        %v757 = vpop.permute.xlu0 %756
        %758 = vrot.lane.b32.xlu0 %v680, 4
        %v759 = vpop.permute.xlu0 %758
        %760 = vrot.lane.b32.xlu0 %v687, 4
        %v761 = vpop.permute.xlu0 %760
        %762 = vrot.lane.b32.xlu0 %v694, 4
        %v763 = vpop.permute.xlu0 %762
        %764 = vrot.lane.b32.xlu0 %v701, 4
        %v765 = vpop.permute.xlu0 %764
        %v766 = vrot.slane %v446, 1
        %v767 = vrot.slane %v447, 1
        %v768 = vrot.slane %v448, 1
        %v769 = vrot.slane %v449, 1
        %v770 = vrot.slane %v450, 1
        %v771 = vrot.slane %v451, 1
        %v772 = vrot.slane %v452, 1
        %v773 = vrot.slane %v453, 1
        %v774 = vrot.slane %v454, 1
        %v775 = vrot.slane %v455, 1
        %v776 = vrot.slane %v456, 1
        %v777 = vrot.slane %v457, 1
        %v778 = vrot.slane %v458, 1
        %v779 = vrot.slane %v459, 1
        %v780 = vrot.slane %v460, 1
        %v781 = vrot.slane %v461, 1
        %v782 = vrot.slane %v462, 1
        %v783 = vrot.slane %v463, 1
        %v784 = vrot.slane %v464, 1
        %v785 = vrot.slane %v465, 1
        %v786 = vrot.slane %v466, 1
        %v787 = vrot.slane %v467, 1
        %v788 = vrot.slane %v468, 1
        %v789 = vrot.slane %v469, 1
        %v790 = vrot.slane %v470, 1
        %v791 = vrot.slane %v471, 1
        %v792 = vrot.slane %v472, 1
        %v793 = vrot.slane %v473, 1
        %v794 = vrot.slane %v474, 1
        %v795 = vrot.slane %v475, 1
        %v796 = vrot.slane %v476, 1
        %v797 = vrot.slane %v477, 1
        %798 = vrot.lane.b32.xlu0 %v766, 8
        %v799 = vpop.permute.xlu0 %798
        %800 = vrot.lane.b32.xlu0 %v767, 8
        %v801 = vpop.permute.xlu0 %800
        %802 = vrot.lane.b32.xlu0 %v768, 8
        %v803 = vpop.permute.xlu0 %802
        %804 = vrot.lane.b32.xlu0 %v769, 8
        %v805 = vpop.permute.xlu0 %804
        %806 = vrot.lane.b32.xlu0 %v770, 8
        %v807 = vpop.permute.xlu0 %806
        %808 = vrot.lane.b32.xlu0 %v771, 8
        %v809 = vpop.permute.xlu0 %808
        %810 = vrot.lane.b32.xlu0 %v772, 8
        %v811 = vpop.permute.xlu0 %810
        %812 = vrot.lane.b32.xlu0 %v773, 8
        %v813 = vpop.permute.xlu0 %812
        %814 = vrot.lane.b32.xlu0 %v774, 8
        %v815 = vpop.permute.xlu0 %814
        %816 = vrot.lane.b32.xlu0 %v775, 8
        %v817 = vpop.permute.xlu0 %816
        %818 = vrot.lane.b32.xlu0 %v776, 8
        %v819 = vpop.permute.xlu0 %818
        %820 = vrot.lane.b32.xlu0 %v777, 8
        %v821 = vpop.permute.xlu0 %820
        %822 = vrot.lane.b32.xlu0 %v778, 8
        %v823 = vpop.permute.xlu0 %822
        %824 = vrot.lane.b32.xlu0 %v779, 8
        %v825 = vpop.permute.xlu0 %824
        %826 = vrot.lane.b32.xlu0 %v780, 8
        %v827 = vpop.permute.xlu0 %826
        %828 = vrot.lane.b32.xlu0 %v781, 8
        %v829 = vpop.permute.xlu0 %828
        %830 = vrot.lane.b32.xlu0 %v782, 8
        %v831 = vpop.permute.xlu0 %830
        %832 = vrot.lane.b32.xlu0 %v783, 8
        %v833 = vpop.permute.xlu0 %832
        %834 = vrot.lane.b32.xlu0 %v784, 8
        %v835 = vpop.permute.xlu0 %834
        %836 = vrot.lane.b32.xlu0 %v785, 8
        %v837 = vpop.permute.xlu0 %836
        %838 = vrot.lane.b32.xlu0 %v786, 8
        %v839 = vpop.permute.xlu0 %838
        %840 = vrot.lane.b32.xlu0 %v787, 8
        %v841 = vpop.permute.xlu0 %840
        %842 = vrot.lane.b32.xlu0 %v788, 8
        %v843 = vpop.permute.xlu0 %842
        %844 = vrot.lane.b32.xlu0 %v789, 8
        %v845 = vpop.permute.xlu0 %844
        %846 = vrot.lane.b32.xlu0 %v790, 8
        %v847 = vpop.permute.xlu0 %846
        %848 = vrot.lane.b32.xlu0 %v791, 8
        %v849 = vpop.permute.xlu0 %848
        %850 = vrot.lane.b32.xlu0 %v792, 8
        %v851 = vpop.permute.xlu0 %850
        %852 = vrot.lane.b32.xlu0 %v793, 8
        %v853 = vpop.permute.xlu0 %852
        %854 = vrot.lane.b32.xlu0 %v794, 8
        %v855 = vpop.permute.xlu0 %854
        %856 = vrot.lane.b32.xlu0 %v795, 8
        %v857 = vpop.permute.xlu0 %856
        %858 = vrot.lane.b32.xlu0 %v796, 8
        %v859 = vpop.permute.xlu0 %858
        %860 = vrot.lane.b32.xlu0 %v797, 8
        %v861 = vpop.permute.xlu0 %860
        %v866 = vunpack.c.l.b16 %v214
        %v867 = vunpack.c.l.b16 %v234
        %v868 = vunpack.c.l.b16 %v254
        %v869 = vunpack.c.l.b16 %v274
        %v870 = vpack.c.b16 %v384, %v384
        %v871 = vpack.c.b16 %v386, %v386
        %v872 = vpack.c.b16 %v388, %v388
        %v873 = vpack.c.b16 %v390, %v390
        %v874 = vpack.c.b16 %v392, %v392
        %v875 = vpack.c.b16 %v394, %v394
        %v876 = vpack.c.b16 %v396, %v396
        %v877 = vpack.c.b16 %v866, %v866
        %v878 = vpack.c.b16 %v400, %v400
        %v879 = vpack.c.b16 %v402, %v402
        %v880 = vpack.c.b16 %v404, %v404
        %v881 = vpack.c.b16 %v406, %v406
        %v882 = vpack.c.b16 %v408, %v408
        %v883 = vpack.c.b16 %v410, %v410
        %v884 = vpack.c.b16 %v412, %v412
        %v885 = vpack.c.b16 %v867, %v867
        %v886 = vpack.c.b16 %v416, %v416
        %v887 = vpack.c.b16 %v418, %v418
        %v888 = vpack.c.b16 %v420, %v420
        %v889 = vpack.c.b16 %v422, %v422
        %v890 = vpack.c.b16 %v424, %v424
        %v891 = vpack.c.b16 %v426, %v426
        %v892 = vpack.c.b16 %v428, %v428
        %v893 = vpack.c.b16 %v868, %v868
        %v894 = vpack.c.b16 %v432, %v432
        %v895 = vpack.c.b16 %v434, %v434
        %v896 = vpack.c.b16 %v436, %v436
        %v897 = vpack.c.b16 %v438, %v438
        %v898 = vpack.c.b16 %v440, %v440
        %v899 = vpack.c.b16 %v442, %v442
        %v900 = vpack.c.b16 %v444, %v444
        %v901 = vpack.c.b16 %v869, %v869
        %902 = vrot.lane.b32.xlu0 %v870, 12
        %v903 = vpop.permute.xlu0 %902
        %904 = vrot.lane.b32.xlu0 %v871, 12
        %v905 = vpop.permute.xlu0 %904
        %906 = vrot.lane.b32.xlu0 %v872, 12
        %v907 = vpop.permute.xlu0 %906
        %908 = vrot.lane.b32.xlu0 %v873, 12
        %v909 = vpop.permute.xlu0 %908
        %910 = vrot.lane.b32.xlu0 %v874, 12
        %v911 = vpop.permute.xlu0 %910
        %912 = vrot.lane.b32.xlu0 %v875, 12
        %v913 = vpop.permute.xlu0 %912
        %914 = vrot.lane.b32.xlu0 %v876, 12
        %v915 = vpop.permute.xlu0 %914
        %916 = vrot.lane.b32.xlu0 %v877, 12
        %v917 = vpop.permute.xlu0 %916
        %918 = vrot.lane.b32.xlu0 %v878, 12
        %v919 = vpop.permute.xlu0 %918
        %920 = vrot.lane.b32.xlu0 %v879, 12
        %v921 = vpop.permute.xlu0 %920
        %922 = vrot.lane.b32.xlu0 %v880, 12
        %v923 = vpop.permute.xlu0 %922
        %924 = vrot.lane.b32.xlu0 %v881, 12
        %v925 = vpop.permute.xlu0 %924
        %926 = vrot.lane.b32.xlu0 %v882, 12
        %v927 = vpop.permute.xlu0 %926
        %928 = vrot.lane.b32.xlu0 %v883, 12
        %v929 = vpop.permute.xlu0 %928
        %930 = vrot.lane.b32.xlu0 %v884, 12
        %v931 = vpop.permute.xlu0 %930
        %932 = vrot.lane.b32.xlu0 %v885, 12
        %v933 = vpop.permute.xlu0 %932
        %934 = vrot.lane.b32.xlu0 %v886, 12
        %v935 = vpop.permute.xlu0 %934
        %936 = vrot.lane.b32.xlu0 %v887, 12
        %v937 = vpop.permute.xlu0 %936
        %938 = vrot.lane.b32.xlu0 %v888, 12
        %v939 = vpop.permute.xlu0 %938
        %940 = vrot.lane.b32.xlu0 %v889, 12
        %v941 = vpop.permute.xlu0 %940
        %942 = vrot.lane.b32.xlu0 %v890, 12
        %v943 = vpop.permute.xlu0 %942
        %944 = vrot.lane.b32.xlu0 %v891, 12
        %v945 = vpop.permute.xlu0 %944
        %946 = vrot.lane.b32.xlu0 %v892, 12
        %v947 = vpop.permute.xlu0 %946
        %948 = vrot.lane.b32.xlu0 %v893, 12
        %v949 = vpop.permute.xlu0 %948
        %950 = vrot.lane.b32.xlu0 %v894, 12
        %v951 = vpop.permute.xlu0 %950
        %952 = vrot.lane.b32.xlu0 %v895, 12
        %v953 = vpop.permute.xlu0 %952
        %954 = vrot.lane.b32.xlu0 %v896, 12
        %v955 = vpop.permute.xlu0 %954
        %956 = vrot.lane.b32.xlu0 %v897, 12
        %v957 = vpop.permute.xlu0 %956
        %958 = vrot.lane.b32.xlu0 %v898, 12
        %v959 = vpop.permute.xlu0 %958
        %960 = vrot.lane.b32.xlu0 %v899, 12
        %v961 = vpop.permute.xlu0 %960
        %962 = vrot.lane.b32.xlu0 %v900, 12
        %v963 = vpop.permute.xlu0 %962
        %964 = vrot.lane.b32.xlu0 %v901, 12
        %v965 = vpop.permute.xlu0 %964
        %v970 = vunpack.c.l.b16 %v215
        %v971 = vunpack.c.l.b16 %v235
        %v972 = vunpack.c.l.b16 %v255
        %v973 = vunpack.c.l.b16 %v275
        %v974 = vpack.c.b16 %v970, %v866
        %v975 = vpack.c.b16 %v971, %v867
        %v976 = vpack.c.b16 %v972, %v868
        %v977 = vpack.c.b16 %v973, %v869
        %v979 = vshrl.u32 %v974, 16
        %v981 = vshll.u32 %v974, 16
        %v983 = vrot.slane %v981, 1
        %v984 = vor.u32 %v979, %v983
        %v986 = vshrl.u32 %v975, 16
        %v988 = vshll.u32 %v975, 16
        %v990 = vrot.slane %v988, 1
        %v991 = vor.u32 %v986, %v990
        %v993 = vshrl.u32 %v976, 16
        %v995 = vshll.u32 %v976, 16
        %v997 = vrot.slane %v995, 1
        %v998 = vor.u32 %v993, %v997
        %v1000 = vshrl.u32 %v977, 16
        %v1002 = vshll.u32 %v977, 16
        %v1004 = vrot.slane %v1002, 1
        %v1005 = vor.u32 %v1000, %v1004
        %1006 = vrot.lane.b32.xlu0 %v491, 16
        %v1007 = vpop.permute.xlu0 %1006
        %1008 = vrot.lane.b32.xlu0 %v498, 16
        %v1009 = vpop.permute.xlu0 %1008
        %1010 = vrot.lane.b32.xlu0 %v505, 16
        %v1011 = vpop.permute.xlu0 %1010
        %1012 = vrot.lane.b32.xlu0 %v512, 16
        %v1013 = vpop.permute.xlu0 %1012
        %1014 = vrot.lane.b32.xlu0 %v519, 16
        %v1015 = vpop.permute.xlu0 %1014
        %1016 = vrot.lane.b32.xlu0 %v526, 16
        %v1017 = vpop.permute.xlu0 %1016
        %1018 = vrot.lane.b32.xlu0 %v533, 16
        %v1019 = vpop.permute.xlu0 %1018
        %1020 = vrot.lane.b32.xlu0 %v984, 16
        %v1021 = vpop.permute.xlu0 %1020
        %1022 = vrot.lane.b32.xlu0 %v547, 16
        %v1023 = vpop.permute.xlu0 %1022
        %1024 = vrot.lane.b32.xlu0 %v554, 16
        %v1025 = vpop.permute.xlu0 %1024
        %1026 = vrot.lane.b32.xlu0 %v561, 16
        %v1027 = vpop.permute.xlu0 %1026
        %1028 = vrot.lane.b32.xlu0 %v568, 16
        %v1029 = vpop.permute.xlu0 %1028
        %1030 = vrot.lane.b32.xlu0 %v575, 16
        %v1031 = vpop.permute.xlu0 %1030
        %1032 = vrot.lane.b32.xlu0 %v582, 16
        %v1033 = vpop.permute.xlu0 %1032
        %1034 = vrot.lane.b32.xlu0 %v589, 16
        %v1035 = vpop.permute.xlu0 %1034
        %1036 = vrot.lane.b32.xlu0 %v991, 16
        %v1037 = vpop.permute.xlu0 %1036
        %1038 = vrot.lane.b32.xlu0 %v603, 16
        %v1039 = vpop.permute.xlu0 %1038
        %1040 = vrot.lane.b32.xlu0 %v610, 16
        %v1041 = vpop.permute.xlu0 %1040
        %1042 = vrot.lane.b32.xlu0 %v617, 16
        %v1043 = vpop.permute.xlu0 %1042
        %1044 = vrot.lane.b32.xlu0 %v624, 16
        %v1045 = vpop.permute.xlu0 %1044
        %1046 = vrot.lane.b32.xlu0 %v631, 16
        %v1047 = vpop.permute.xlu0 %1046
        %1048 = vrot.lane.b32.xlu0 %v638, 16
        %v1049 = vpop.permute.xlu0 %1048
        %1050 = vrot.lane.b32.xlu0 %v645, 16
        %v1051 = vpop.permute.xlu0 %1050
        %1052 = vrot.lane.b32.xlu0 %v998, 16
        %v1053 = vpop.permute.xlu0 %1052
        %1054 = vrot.lane.b32.xlu0 %v659, 16
        %v1055 = vpop.permute.xlu0 %1054
        %1056 = vrot.lane.b32.xlu0 %v666, 16
        %v1057 = vpop.permute.xlu0 %1056
        %1058 = vrot.lane.b32.xlu0 %v673, 16
        %v1059 = vpop.permute.xlu0 %1058
        %1060 = vrot.lane.b32.xlu0 %v680, 16
        %v1061 = vpop.permute.xlu0 %1060
        %1062 = vrot.lane.b32.xlu0 %v687, 16
        %v1063 = vpop.permute.xlu0 %1062
        %1064 = vrot.lane.b32.xlu0 %v694, 16
        %v1065 = vpop.permute.xlu0 %1064
        %1066 = vrot.lane.b32.xlu0 %v701, 16
        %v1067 = vpop.permute.xlu0 %1066
        %1068 = vrot.lane.b32.xlu0 %v1005, 16
        %v1069 = vpop.permute.xlu0 %1068
        %v1070 = vrot.slane %v974, 1
        %v1071 = vrot.slane %v975, 1
        %v1072 = vrot.slane %v976, 1
        %v1073 = vrot.slane %v977, 1
        %1074 = vrot.lane.b32.xlu0 %v767, 20
        %v1075 = vpop.permute.xlu0 %1074
        %1076 = vrot.lane.b32.xlu0 %v768, 20
        %v1077 = vpop.permute.xlu0 %1076
        %1078 = vrot.lane.b32.xlu0 %v769, 20
        %v1079 = vpop.permute.xlu0 %1078
        %1080 = vrot.lane.b32.xlu0 %v770, 20
        %v1081 = vpop.permute.xlu0 %1080
        %1082 = vrot.lane.b32.xlu0 %v771, 20
        %v1083 = vpop.permute.xlu0 %1082
        %1084 = vrot.lane.b32.xlu0 %v772, 20
        %v1085 = vpop.permute.xlu0 %1084
        %1086 = vrot.lane.b32.xlu0 %v773, 20
        %v1087 = vpop.permute.xlu0 %1086
        %1088 = vrot.lane.b32.xlu0 %v1070, 20
        %v1089 = vpop.permute.xlu0 %1088
        %1090 = vrot.lane.b32.xlu0 %v775, 20
        %v1091 = vpop.permute.xlu0 %1090
        %1092 = vrot.lane.b32.xlu0 %v776, 20
        %v1093 = vpop.permute.xlu0 %1092
        %1094 = vrot.lane.b32.xlu0 %v777, 20
        %v1095 = vpop.permute.xlu0 %1094
        %1096 = vrot.lane.b32.xlu0 %v778, 20
        %v1097 = vpop.permute.xlu0 %1096
        %1098 = vrot.lane.b32.xlu0 %v779, 20
        %v1099 = vpop.permute.xlu0 %1098
        %1100 = vrot.lane.b32.xlu0 %v780, 20
        %v1101 = vpop.permute.xlu0 %1100
        %1102 = vrot.lane.b32.xlu0 %v781, 20
        %v1103 = vpop.permute.xlu0 %1102
        %1104 = vrot.lane.b32.xlu0 %v1071, 20
        %v1105 = vpop.permute.xlu0 %1104
        %1106 = vrot.lane.b32.xlu0 %v783, 20
        %v1107 = vpop.permute.xlu0 %1106
        %1108 = vrot.lane.b32.xlu0 %v784, 20
        %v1109 = vpop.permute.xlu0 %1108
        %1110 = vrot.lane.b32.xlu0 %v785, 20
        %v1111 = vpop.permute.xlu0 %1110
        %1112 = vrot.lane.b32.xlu0 %v786, 20
        %v1113 = vpop.permute.xlu0 %1112
        %1114 = vrot.lane.b32.xlu0 %v787, 20
        %v1115 = vpop.permute.xlu0 %1114
        %1116 = vrot.lane.b32.xlu0 %v788, 20
        %v1117 = vpop.permute.xlu0 %1116
        %1118 = vrot.lane.b32.xlu0 %v789, 20
        %v1119 = vpop.permute.xlu0 %1118
        %1120 = vrot.lane.b32.xlu0 %v1072, 20
        %v1121 = vpop.permute.xlu0 %1120
        %1122 = vrot.lane.b32.xlu0 %v791, 20
        %v1123 = vpop.permute.xlu0 %1122
        %1124 = vrot.lane.b32.xlu0 %v792, 20
        %v1125 = vpop.permute.xlu0 %1124
        %1126 = vrot.lane.b32.xlu0 %v793, 20
        %v1127 = vpop.permute.xlu0 %1126
        %1128 = vrot.lane.b32.xlu0 %v794, 20
        %v1129 = vpop.permute.xlu0 %1128
        %1130 = vrot.lane.b32.xlu0 %v795, 20
        %v1131 = vpop.permute.xlu0 %1130
        %1132 = vrot.lane.b32.xlu0 %v796, 20
        %v1133 = vpop.permute.xlu0 %1132
        %1134 = vrot.lane.b32.xlu0 %v797, 20
        %v1135 = vpop.permute.xlu0 %1134
        %1136 = vrot.lane.b32.xlu0 %v1073, 20
        %v1137 = vpop.permute.xlu0 %1136
        %v1142 = vunpack.c.l.b16 %v216
        %v1143 = vunpack.c.l.b16 %v236
        %v1144 = vunpack.c.l.b16 %v256
        %v1145 = vunpack.c.l.b16 %v276
        %v1146 = vpack.c.b16 %v1142, %v1142
        %v1147 = vpack.c.b16 %v1143, %v1143
        %v1148 = vpack.c.b16 %v1144, %v1144
        %v1149 = vpack.c.b16 %v1145, %v1145
        %1150 = vrot.lane.b32.xlu0 %v871, 24
        %v1151 = vpop.permute.xlu0 %1150
        %1152 = vrot.lane.b32.xlu0 %v872, 24
        %v1153 = vpop.permute.xlu0 %1152
        %1154 = vrot.lane.b32.xlu0 %v873, 24
        %v1155 = vpop.permute.xlu0 %1154
        %1156 = vrot.lane.b32.xlu0 %v874, 24
        %v1157 = vpop.permute.xlu0 %1156
        %1158 = vrot.lane.b32.xlu0 %v875, 24
        %v1159 = vpop.permute.xlu0 %1158
        %1160 = vrot.lane.b32.xlu0 %v876, 24
        %v1161 = vpop.permute.xlu0 %1160
        %1162 = vrot.lane.b32.xlu0 %v877, 24
        %v1163 = vpop.permute.xlu0 %1162
        %1164 = vrot.lane.b32.xlu0 %v1146, 24
        %v1165 = vpop.permute.xlu0 %1164
        %1166 = vrot.lane.b32.xlu0 %v879, 24
        %v1167 = vpop.permute.xlu0 %1166
        %1168 = vrot.lane.b32.xlu0 %v880, 24
        %v1169 = vpop.permute.xlu0 %1168
        %1170 = vrot.lane.b32.xlu0 %v881, 24
        %v1171 = vpop.permute.xlu0 %1170
        %1172 = vrot.lane.b32.xlu0 %v882, 24
        %v1173 = vpop.permute.xlu0 %1172
        %1174 = vrot.lane.b32.xlu0 %v883, 24
        %v1175 = vpop.permute.xlu0 %1174
        %1176 = vrot.lane.b32.xlu0 %v884, 24
        %v1177 = vpop.permute.xlu0 %1176
        %1178 = vrot.lane.b32.xlu0 %v885, 24
        %v1179 = vpop.permute.xlu0 %1178
        %1180 = vrot.lane.b32.xlu0 %v1147, 24
        %v1181 = vpop.permute.xlu0 %1180
        %1182 = vrot.lane.b32.xlu0 %v887, 24
        %v1183 = vpop.permute.xlu0 %1182
        %1184 = vrot.lane.b32.xlu0 %v888, 24
        %v1185 = vpop.permute.xlu0 %1184
        %1186 = vrot.lane.b32.xlu0 %v889, 24
        %v1187 = vpop.permute.xlu0 %1186
        %1188 = vrot.lane.b32.xlu0 %v890, 24
        %v1189 = vpop.permute.xlu0 %1188
        %1190 = vrot.lane.b32.xlu0 %v891, 24
        %v1191 = vpop.permute.xlu0 %1190
        %1192 = vrot.lane.b32.xlu0 %v892, 24
        %v1193 = vpop.permute.xlu0 %1192
        %1194 = vrot.lane.b32.xlu0 %v893, 24
        %v1195 = vpop.permute.xlu0 %1194
        %1196 = vrot.lane.b32.xlu0 %v1148, 24
        %v1197 = vpop.permute.xlu0 %1196
        %1198 = vrot.lane.b32.xlu0 %v895, 24
        %v1199 = vpop.permute.xlu0 %1198
        %1200 = vrot.lane.b32.xlu0 %v896, 24
        %v1201 = vpop.permute.xlu0 %1200
        %1202 = vrot.lane.b32.xlu0 %v897, 24
        %v1203 = vpop.permute.xlu0 %1202
        %1204 = vrot.lane.b32.xlu0 %v898, 24
        %v1205 = vpop.permute.xlu0 %1204
        %1206 = vrot.lane.b32.xlu0 %v899, 24
        %v1207 = vpop.permute.xlu0 %1206
        %1208 = vrot.lane.b32.xlu0 %v900, 24
        %v1209 = vpop.permute.xlu0 %1208
        %1210 = vrot.lane.b32.xlu0 %v901, 24
        %v1211 = vpop.permute.xlu0 %1210
        %1212 = vrot.lane.b32.xlu0 %v1149, 24
        %v1213 = vpop.permute.xlu0 %1212
        %v1218 = vunpack.c.l.b16 %v217
        %v1219 = vunpack.c.l.b16 %v237
        %v1220 = vunpack.c.l.b16 %v257
        %v1221 = vunpack.c.l.b16 %v277
        %v1222 = vpack.c.b16 %v1218, %v1142
        %v1223 = vpack.c.b16 %v1219, %v1143
        %v1224 = vpack.c.b16 %v1220, %v1144
        %v1225 = vpack.c.b16 %v1221, %v1145
        %v1227 = vshrl.u32 %v1222, 16
        %v1229 = vshll.u32 %v1222, 16
        %v1231 = vrot.slane %v1229, 1
        %v1232 = vor.u32 %v1227, %v1231
        %v1234 = vshrl.u32 %v1223, 16
        %v1236 = vshll.u32 %v1223, 16
        %v1238 = vrot.slane %v1236, 1
        %v1239 = vor.u32 %v1234, %v1238
        %v1241 = vshrl.u32 %v1224, 16
        %v1243 = vshll.u32 %v1224, 16
        %v1245 = vrot.slane %v1243, 1
        %v1246 = vor.u32 %v1241, %v1245
        %v1248 = vshrl.u32 %v1225, 16
        %v1250 = vshll.u32 %v1225, 16
        %v1252 = vrot.slane %v1250, 1
        %v1253 = vor.u32 %v1248, %v1252
        %1254 = vrot.lane.b32.xlu0 %v498, 28
        %v1255 = vpop.permute.xlu0 %1254
        %1256 = vrot.lane.b32.xlu0 %v505, 28
        %v1257 = vpop.permute.xlu0 %1256
        %1258 = vrot.lane.b32.xlu0 %v512, 28
        %v1259 = vpop.permute.xlu0 %1258
        %1260 = vrot.lane.b32.xlu0 %v519, 28
        %v1261 = vpop.permute.xlu0 %1260
        %1262 = vrot.lane.b32.xlu0 %v526, 28
        %v1263 = vpop.permute.xlu0 %1262
        %1264 = vrot.lane.b32.xlu0 %v533, 28
        %v1265 = vpop.permute.xlu0 %1264
        %1266 = vrot.lane.b32.xlu0 %v984, 28
        %v1267 = vpop.permute.xlu0 %1266
        %1268 = vrot.lane.b32.xlu0 %v1232, 28
        %v1269 = vpop.permute.xlu0 %1268
        %1270 = vrot.lane.b32.xlu0 %v554, 28
        %v1271 = vpop.permute.xlu0 %1270
        %1272 = vrot.lane.b32.xlu0 %v561, 28
        %v1273 = vpop.permute.xlu0 %1272
        %1274 = vrot.lane.b32.xlu0 %v568, 28
        %v1275 = vpop.permute.xlu0 %1274
        %1276 = vrot.lane.b32.xlu0 %v575, 28
        %v1277 = vpop.permute.xlu0 %1276
        %1278 = vrot.lane.b32.xlu0 %v582, 28
        %v1279 = vpop.permute.xlu0 %1278
        %1280 = vrot.lane.b32.xlu0 %v589, 28
        %v1281 = vpop.permute.xlu0 %1280
        %1282 = vrot.lane.b32.xlu0 %v991, 28
        %v1283 = vpop.permute.xlu0 %1282
        %1284 = vrot.lane.b32.xlu0 %v1239, 28
        %v1285 = vpop.permute.xlu0 %1284
        %1286 = vrot.lane.b32.xlu0 %v610, 28
        %v1287 = vpop.permute.xlu0 %1286
        %1288 = vrot.lane.b32.xlu0 %v617, 28
        %v1289 = vpop.permute.xlu0 %1288
        %1290 = vrot.lane.b32.xlu0 %v624, 28
        %v1291 = vpop.permute.xlu0 %1290
        %1292 = vrot.lane.b32.xlu0 %v631, 28
        %v1293 = vpop.permute.xlu0 %1292
        %1294 = vrot.lane.b32.xlu0 %v638, 28
        %v1295 = vpop.permute.xlu0 %1294
        %1296 = vrot.lane.b32.xlu0 %v645, 28
        %v1297 = vpop.permute.xlu0 %1296
        %1298 = vrot.lane.b32.xlu0 %v998, 28
        %v1299 = vpop.permute.xlu0 %1298
        %1300 = vrot.lane.b32.xlu0 %v1246, 28
        %v1301 = vpop.permute.xlu0 %1300
        %1302 = vrot.lane.b32.xlu0 %v666, 28
        %v1303 = vpop.permute.xlu0 %1302
        %1304 = vrot.lane.b32.xlu0 %v673, 28
        %v1305 = vpop.permute.xlu0 %1304
        %1306 = vrot.lane.b32.xlu0 %v680, 28
        %v1307 = vpop.permute.xlu0 %1306
        %1308 = vrot.lane.b32.xlu0 %v687, 28
        %v1309 = vpop.permute.xlu0 %1308
        %1310 = vrot.lane.b32.xlu0 %v694, 28
        %v1311 = vpop.permute.xlu0 %1310
        %1312 = vrot.lane.b32.xlu0 %v701, 28
        %v1313 = vpop.permute.xlu0 %1312
        %1314 = vrot.lane.b32.xlu0 %v1005, 28
        %v1315 = vpop.permute.xlu0 %1314
        %1316 = vrot.lane.b32.xlu0 %v1253, 28
        %v1317 = vpop.permute.xlu0 %1316
        %v1318 = vrot.slane %v1222, 1
        %v1319 = vrot.slane %v1223, 1
        %v1320 = vrot.slane %v1224, 1
        %v1321 = vrot.slane %v1225, 1
        %1322 = vrot.lane.b32.xlu0 %v768, 32
        %v1323 = vpop.permute.xlu0 %1322
        %1324 = vrot.lane.b32.xlu0 %v769, 32
        %v1325 = vpop.permute.xlu0 %1324
        %1326 = vrot.lane.b32.xlu0 %v770, 32
        %v1327 = vpop.permute.xlu0 %1326
        %1328 = vrot.lane.b32.xlu0 %v771, 32
        %v1329 = vpop.permute.xlu0 %1328
        %1330 = vrot.lane.b32.xlu0 %v772, 32
        %v1331 = vpop.permute.xlu0 %1330
        %1332 = vrot.lane.b32.xlu0 %v773, 32
        %v1333 = vpop.permute.xlu0 %1332
        %1334 = vrot.lane.b32.xlu0 %v1070, 32
        %v1335 = vpop.permute.xlu0 %1334
        %1336 = vrot.lane.b32.xlu0 %v1318, 32
        %v1337 = vpop.permute.xlu0 %1336
        %1338 = vrot.lane.b32.xlu0 %v776, 32
        %v1339 = vpop.permute.xlu0 %1338
        %1340 = vrot.lane.b32.xlu0 %v777, 32
        %v1341 = vpop.permute.xlu0 %1340
        %1342 = vrot.lane.b32.xlu0 %v778, 32
        %v1343 = vpop.permute.xlu0 %1342
        %1344 = vrot.lane.b32.xlu0 %v779, 32
        %v1345 = vpop.permute.xlu0 %1344
        %1346 = vrot.lane.b32.xlu0 %v780, 32
        %v1347 = vpop.permute.xlu0 %1346
        %1348 = vrot.lane.b32.xlu0 %v781, 32
        %v1349 = vpop.permute.xlu0 %1348
        %1350 = vrot.lane.b32.xlu0 %v1071, 32
        %v1351 = vpop.permute.xlu0 %1350
        %1352 = vrot.lane.b32.xlu0 %v1319, 32
        %v1353 = vpop.permute.xlu0 %1352
        %1354 = vrot.lane.b32.xlu0 %v784, 32
        %v1355 = vpop.permute.xlu0 %1354
        %1356 = vrot.lane.b32.xlu0 %v785, 32
        %v1357 = vpop.permute.xlu0 %1356
        %1358 = vrot.lane.b32.xlu0 %v786, 32
        %v1359 = vpop.permute.xlu0 %1358
        %1360 = vrot.lane.b32.xlu0 %v787, 32
        %v1361 = vpop.permute.xlu0 %1360
        %1362 = vrot.lane.b32.xlu0 %v788, 32
        %v1363 = vpop.permute.xlu0 %1362
        %1364 = vrot.lane.b32.xlu0 %v789, 32
        %v1365 = vpop.permute.xlu0 %1364
        %1366 = vrot.lane.b32.xlu0 %v1072, 32
        %v1367 = vpop.permute.xlu0 %1366
        %1368 = vrot.lane.b32.xlu0 %v1320, 32
        %v1369 = vpop.permute.xlu0 %1368
        %1370 = vrot.lane.b32.xlu0 %v792, 32
        %v1371 = vpop.permute.xlu0 %1370
        %1372 = vrot.lane.b32.xlu0 %v793, 32
        %v1373 = vpop.permute.xlu0 %1372
        %1374 = vrot.lane.b32.xlu0 %v794, 32
        %v1375 = vpop.permute.xlu0 %1374
        %1376 = vrot.lane.b32.xlu0 %v795, 32
        %v1377 = vpop.permute.xlu0 %1376
        %1378 = vrot.lane.b32.xlu0 %v796, 32
        %v1379 = vpop.permute.xlu0 %1378
        %1380 = vrot.lane.b32.xlu0 %v797, 32
        %v1381 = vpop.permute.xlu0 %1380
        %1382 = vrot.lane.b32.xlu0 %v1073, 32
        %v1383 = vpop.permute.xlu0 %1382
        %1384 = vrot.lane.b32.xlu0 %v1321, 32
        %v1385 = vpop.permute.xlu0 %1384
        %v1394 = vunpack.c.l.b16 %v278
        %v1395 = vunpack.c.l.b16 %v280
        %v1396 = vunpack.c.l.b16 %v282
        %v1397 = vunpack.c.l.b16 %v284
        %v1398 = vunpack.c.l.b16 %v286
        %v1399 = vunpack.c.l.b16 %v288
        %v1400 = vunpack.c.l.b16 %v290
        %v1401 = vunpack.c.l.b16 %v292
        %v1402 = vpack.c.b16 %v398, %v398
        %v1403 = vpack.c.b16 %v414, %v414
        %v1404 = vpack.c.b16 %v430, %v430
        %v1405 = vpack.c.b16 %v1394, %v1394
        %v1406 = vpack.c.b16 %v1395, %v1395
        %v1407 = vpack.c.b16 %v1396, %v1396
        %v1408 = vpack.c.b16 %v1397, %v1397
        %v1409 = vpack.c.b16 %v1398, %v1398
        %v1410 = vpack.c.b16 %v1399, %v1399
        %v1411 = vpack.c.b16 %v1400, %v1400
        %v1412 = vpack.c.b16 %v1401, %v1401
        %1413 = vrot.lane.b32.xlu0 %v1402, 36
        %v1414 = vpop.permute.xlu0 %1413
        %1415 = vrot.lane.b32.xlu0 %v878, 36
        %v1416 = vpop.permute.xlu0 %1415
        %1417 = vrot.lane.b32.xlu0 %v879, 36
        %v1418 = vpop.permute.xlu0 %1417
        %1419 = vrot.lane.b32.xlu0 %v880, 36
        %v1420 = vpop.permute.xlu0 %1419
        %1421 = vrot.lane.b32.xlu0 %v881, 36
        %v1422 = vpop.permute.xlu0 %1421
        %1423 = vrot.lane.b32.xlu0 %v882, 36
        %v1424 = vpop.permute.xlu0 %1423
        %1425 = vrot.lane.b32.xlu0 %v883, 36
        %v1426 = vpop.permute.xlu0 %1425
        %1427 = vrot.lane.b32.xlu0 %v884, 36
        %v1428 = vpop.permute.xlu0 %1427
        %1429 = vrot.lane.b32.xlu0 %v1403, 36
        %v1430 = vpop.permute.xlu0 %1429
        %1431 = vrot.lane.b32.xlu0 %v886, 36
        %v1432 = vpop.permute.xlu0 %1431
        %1433 = vrot.lane.b32.xlu0 %v887, 36
        %v1434 = vpop.permute.xlu0 %1433
        %1435 = vrot.lane.b32.xlu0 %v888, 36
        %v1436 = vpop.permute.xlu0 %1435
        %1437 = vrot.lane.b32.xlu0 %v889, 36
        %v1438 = vpop.permute.xlu0 %1437
        %1439 = vrot.lane.b32.xlu0 %v890, 36
        %v1440 = vpop.permute.xlu0 %1439
        %1441 = vrot.lane.b32.xlu0 %v891, 36
        %v1442 = vpop.permute.xlu0 %1441
        %1443 = vrot.lane.b32.xlu0 %v892, 36
        %v1444 = vpop.permute.xlu0 %1443
        %1445 = vrot.lane.b32.xlu0 %v1404, 36
        %v1446 = vpop.permute.xlu0 %1445
        %1447 = vrot.lane.b32.xlu0 %v894, 36
        %v1448 = vpop.permute.xlu0 %1447
        %1449 = vrot.lane.b32.xlu0 %v895, 36
        %v1450 = vpop.permute.xlu0 %1449
        %1451 = vrot.lane.b32.xlu0 %v896, 36
        %v1452 = vpop.permute.xlu0 %1451
        %1453 = vrot.lane.b32.xlu0 %v897, 36
        %v1454 = vpop.permute.xlu0 %1453
        %1455 = vrot.lane.b32.xlu0 %v898, 36
        %v1456 = vpop.permute.xlu0 %1455
        %1457 = vrot.lane.b32.xlu0 %v899, 36
        %v1458 = vpop.permute.xlu0 %1457
        %1459 = vrot.lane.b32.xlu0 %v900, 36
        %v1460 = vpop.permute.xlu0 %1459
        %1461 = vrot.lane.b32.xlu0 %v1405, 36
        %v1462 = vpop.permute.xlu0 %1461
        %1463 = vrot.lane.b32.xlu0 %v1406, 36
        %v1464 = vpop.permute.xlu0 %1463
        %1465 = vrot.lane.b32.xlu0 %v1407, 36
        %v1466 = vpop.permute.xlu0 %1465
        %1467 = vrot.lane.b32.xlu0 %v1408, 36
        %v1468 = vpop.permute.xlu0 %1467
        %1469 = vrot.lane.b32.xlu0 %v1409, 36
        %v1470 = vpop.permute.xlu0 %1469
        %1471 = vrot.lane.b32.xlu0 %v1410, 36
        %v1472 = vpop.permute.xlu0 %1471
        %1473 = vrot.lane.b32.xlu0 %v1411, 36
        %v1474 = vpop.permute.xlu0 %1473
        %1475 = vrot.lane.b32.xlu0 %v1412, 36
        %v1476 = vpop.permute.xlu0 %1475
        %v1485 = vunpack.c.l.b16 %v279
        %v1486 = vunpack.c.l.b16 %v281
        %v1487 = vunpack.c.l.b16 %v283
        %v1488 = vunpack.c.l.b16 %v285
        %v1489 = vunpack.c.l.b16 %v287
        %v1490 = vunpack.c.l.b16 %v289
        %v1491 = vunpack.c.l.b16 %v291
        %v1492 = vunpack.c.l.b16 %v293
        %v1493 = vpack.c.b16 %v1485, %v1394
        %v1494 = vpack.c.b16 %v1486, %v1395
        %v1495 = vpack.c.b16 %v1487, %v1396
        %v1496 = vpack.c.b16 %v1488, %v1397
        %v1497 = vpack.c.b16 %v1489, %v1398
        %v1498 = vpack.c.b16 %v1490, %v1399
        %v1499 = vpack.c.b16 %v1491, %v1400
        %v1500 = vpack.c.b16 %v1492, %v1401
        %v1502 = vshrl.u32 %v1493, 16
        %v1504 = vshll.u32 %v1493, 16
        %v1506 = vrot.slane %v1504, 1
        %v1507 = vor.u32 %v1502, %v1506
        %v1509 = vshrl.u32 %v1494, 16
        %v1511 = vshll.u32 %v1494, 16
        %v1513 = vrot.slane %v1511, 1
        %v1514 = vor.u32 %v1509, %v1513
        %v1516 = vshrl.u32 %v1495, 16
        %v1518 = vshll.u32 %v1495, 16
        %v1520 = vrot.slane %v1518, 1
        %v1521 = vor.u32 %v1516, %v1520
        %v1523 = vshrl.u32 %v1496, 16
        %v1525 = vshll.u32 %v1496, 16
        %v1527 = vrot.slane %v1525, 1
        %v1528 = vor.u32 %v1523, %v1527
        %v1530 = vshrl.u32 %v1497, 16
        %v1532 = vshll.u32 %v1497, 16
        %v1534 = vrot.slane %v1532, 1
        %v1535 = vor.u32 %v1530, %v1534
        %v1537 = vshrl.u32 %v1498, 16
        %v1539 = vshll.u32 %v1498, 16
        %v1541 = vrot.slane %v1539, 1
        %v1542 = vor.u32 %v1537, %v1541
        %v1544 = vshrl.u32 %v1499, 16
        %v1546 = vshll.u32 %v1499, 16
        %v1548 = vrot.slane %v1546, 1
        %v1549 = vor.u32 %v1544, %v1548
        %v1551 = vshrl.u32 %v1500, 16
        %v1553 = vshll.u32 %v1500, 16
        %v1555 = vrot.slane %v1553, 1
        %v1556 = vor.u32 %v1551, %v1555
        %1557 = vrot.lane.b32.xlu0 %v540, 40
        %v1558 = vpop.permute.xlu0 %1557
        %1559 = vrot.lane.b32.xlu0 %v547, 40
        %v1560 = vpop.permute.xlu0 %1559
        %1561 = vrot.lane.b32.xlu0 %v554, 40
        %v1562 = vpop.permute.xlu0 %1561
        %1563 = vrot.lane.b32.xlu0 %v561, 40
        %v1564 = vpop.permute.xlu0 %1563
        %1565 = vrot.lane.b32.xlu0 %v568, 40
        %v1566 = vpop.permute.xlu0 %1565
        %1567 = vrot.lane.b32.xlu0 %v575, 40
        %v1568 = vpop.permute.xlu0 %1567
        %1569 = vrot.lane.b32.xlu0 %v582, 40
        %v1570 = vpop.permute.xlu0 %1569
        %1571 = vrot.lane.b32.xlu0 %v589, 40
        %v1572 = vpop.permute.xlu0 %1571
        %1573 = vrot.lane.b32.xlu0 %v596, 40
        %v1574 = vpop.permute.xlu0 %1573
        %1575 = vrot.lane.b32.xlu0 %v603, 40
        %v1576 = vpop.permute.xlu0 %1575
        %1577 = vrot.lane.b32.xlu0 %v610, 40
        %v1578 = vpop.permute.xlu0 %1577
        %1579 = vrot.lane.b32.xlu0 %v617, 40
        %v1580 = vpop.permute.xlu0 %1579
        %1581 = vrot.lane.b32.xlu0 %v624, 40
        %v1582 = vpop.permute.xlu0 %1581
        %1583 = vrot.lane.b32.xlu0 %v631, 40
        %v1584 = vpop.permute.xlu0 %1583
        %1585 = vrot.lane.b32.xlu0 %v638, 40
        %v1586 = vpop.permute.xlu0 %1585
        %1587 = vrot.lane.b32.xlu0 %v645, 40
        %v1588 = vpop.permute.xlu0 %1587
        %1589 = vrot.lane.b32.xlu0 %v652, 40
        %v1590 = vpop.permute.xlu0 %1589
        %1591 = vrot.lane.b32.xlu0 %v659, 40
        %v1592 = vpop.permute.xlu0 %1591
        %1593 = vrot.lane.b32.xlu0 %v666, 40
        %v1594 = vpop.permute.xlu0 %1593
        %1595 = vrot.lane.b32.xlu0 %v673, 40
        %v1596 = vpop.permute.xlu0 %1595
        %1597 = vrot.lane.b32.xlu0 %v680, 40
        %v1598 = vpop.permute.xlu0 %1597
        %1599 = vrot.lane.b32.xlu0 %v687, 40
        %v1600 = vpop.permute.xlu0 %1599
        %1601 = vrot.lane.b32.xlu0 %v694, 40
        %v1602 = vpop.permute.xlu0 %1601
        %1603 = vrot.lane.b32.xlu0 %v701, 40
        %v1604 = vpop.permute.xlu0 %1603
        %1605 = vrot.lane.b32.xlu0 %v1507, 40
        %v1606 = vpop.permute.xlu0 %1605
        %1607 = vrot.lane.b32.xlu0 %v1514, 40
        %v1608 = vpop.permute.xlu0 %1607
        %1609 = vrot.lane.b32.xlu0 %v1521, 40
        %v1610 = vpop.permute.xlu0 %1609
        %1611 = vrot.lane.b32.xlu0 %v1528, 40
        %v1612 = vpop.permute.xlu0 %1611
        %1613 = vrot.lane.b32.xlu0 %v1535, 40
        %v1614 = vpop.permute.xlu0 %1613
        %1615 = vrot.lane.b32.xlu0 %v1542, 40
        %v1616 = vpop.permute.xlu0 %1615
        %1617 = vrot.lane.b32.xlu0 %v1549, 40
        %v1618 = vpop.permute.xlu0 %1617
        %1619 = vrot.lane.b32.xlu0 %v1556, 40
        %v1620 = vpop.permute.xlu0 %1619
        %v1621 = vrot.slane %v1493, 1
        %v1622 = vrot.slane %v1494, 1
        %v1623 = vrot.slane %v1495, 1
        %v1624 = vrot.slane %v1496, 1
        %v1625 = vrot.slane %v1497, 1
        %v1626 = vrot.slane %v1498, 1
        %v1627 = vrot.slane %v1499, 1
        %v1628 = vrot.slane %v1500, 1
        %1629 = vrot.lane.b32.xlu0 %v774, 44
        %v1630 = vpop.permute.xlu0 %1629
        %1631 = vrot.lane.b32.xlu0 %v775, 44
        %v1632 = vpop.permute.xlu0 %1631
        %1633 = vrot.lane.b32.xlu0 %v776, 44
        %v1634 = vpop.permute.xlu0 %1633
        %1635 = vrot.lane.b32.xlu0 %v777, 44
        %v1636 = vpop.permute.xlu0 %1635
        %1637 = vrot.lane.b32.xlu0 %v778, 44
        %v1638 = vpop.permute.xlu0 %1637
        %1639 = vrot.lane.b32.xlu0 %v779, 44
        %v1640 = vpop.permute.xlu0 %1639
        %1641 = vrot.lane.b32.xlu0 %v780, 44
        %v1642 = vpop.permute.xlu0 %1641
        %1643 = vrot.lane.b32.xlu0 %v781, 44
        %v1644 = vpop.permute.xlu0 %1643
        %1645 = vrot.lane.b32.xlu0 %v782, 44
        %v1646 = vpop.permute.xlu0 %1645
        %1647 = vrot.lane.b32.xlu0 %v783, 44
        %v1648 = vpop.permute.xlu0 %1647
        %1649 = vrot.lane.b32.xlu0 %v784, 44
        %v1650 = vpop.permute.xlu0 %1649
        %1651 = vrot.lane.b32.xlu0 %v785, 44
        %v1652 = vpop.permute.xlu0 %1651
        %1653 = vrot.lane.b32.xlu0 %v786, 44
        %v1654 = vpop.permute.xlu0 %1653
        %1655 = vrot.lane.b32.xlu0 %v787, 44
        %v1656 = vpop.permute.xlu0 %1655
        %1657 = vrot.lane.b32.xlu0 %v788, 44
        %v1658 = vpop.permute.xlu0 %1657
        %1659 = vrot.lane.b32.xlu0 %v789, 44
        %v1660 = vpop.permute.xlu0 %1659
        %1661 = vrot.lane.b32.xlu0 %v790, 44
        %v1662 = vpop.permute.xlu0 %1661
        %1663 = vrot.lane.b32.xlu0 %v791, 44
        %v1664 = vpop.permute.xlu0 %1663
        %1665 = vrot.lane.b32.xlu0 %v792, 44
        %v1666 = vpop.permute.xlu0 %1665
        %1667 = vrot.lane.b32.xlu0 %v793, 44
        %v1668 = vpop.permute.xlu0 %1667
        %1669 = vrot.lane.b32.xlu0 %v794, 44
        %v1670 = vpop.permute.xlu0 %1669
        %1671 = vrot.lane.b32.xlu0 %v795, 44
        %v1672 = vpop.permute.xlu0 %1671
        %1673 = vrot.lane.b32.xlu0 %v796, 44
        %v1674 = vpop.permute.xlu0 %1673
        %1675 = vrot.lane.b32.xlu0 %v797, 44
        %v1676 = vpop.permute.xlu0 %1675
        %1677 = vrot.lane.b32.xlu0 %v1621, 44
        %v1678 = vpop.permute.xlu0 %1677
        %1679 = vrot.lane.b32.xlu0 %v1622, 44
        %v1680 = vpop.permute.xlu0 %1679
        %1681 = vrot.lane.b32.xlu0 %v1623, 44
        %v1682 = vpop.permute.xlu0 %1681
        %1683 = vrot.lane.b32.xlu0 %v1624, 44
        %v1684 = vpop.permute.xlu0 %1683
        %1685 = vrot.lane.b32.xlu0 %v1625, 44
        %v1686 = vpop.permute.xlu0 %1685
        %1687 = vrot.lane.b32.xlu0 %v1626, 44
        %v1688 = vpop.permute.xlu0 %1687
        %1689 = vrot.lane.b32.xlu0 %v1627, 44
        %v1690 = vpop.permute.xlu0 %1689
        %1691 = vrot.lane.b32.xlu0 %v1628, 44
        %v1692 = vpop.permute.xlu0 %1691
        %v1694 = vunpack.c.l.b16 %v294
        %v1695 = vpack.c.b16 %v1694, %v1694
        %1696 = vrot.lane.b32.xlu0 %v878, 48
        %v1697 = vpop.permute.xlu0 %1696
        %1698 = vrot.lane.b32.xlu0 %v879, 48
        %v1699 = vpop.permute.xlu0 %1698
        %1700 = vrot.lane.b32.xlu0 %v880, 48
        %v1701 = vpop.permute.xlu0 %1700
        %1702 = vrot.lane.b32.xlu0 %v881, 48
        %v1703 = vpop.permute.xlu0 %1702
        %1704 = vrot.lane.b32.xlu0 %v882, 48
        %v1705 = vpop.permute.xlu0 %1704
        %1706 = vrot.lane.b32.xlu0 %v883, 48
        %v1707 = vpop.permute.xlu0 %1706
        %1708 = vrot.lane.b32.xlu0 %v884, 48
        %v1709 = vpop.permute.xlu0 %1708
        %1710 = vrot.lane.b32.xlu0 %v885, 48
        %v1711 = vpop.permute.xlu0 %1710
        %1712 = vrot.lane.b32.xlu0 %v886, 48
        %v1713 = vpop.permute.xlu0 %1712
        %1714 = vrot.lane.b32.xlu0 %v887, 48
        %v1715 = vpop.permute.xlu0 %1714
        %1716 = vrot.lane.b32.xlu0 %v888, 48
        %v1717 = vpop.permute.xlu0 %1716
        %1718 = vrot.lane.b32.xlu0 %v889, 48
        %v1719 = vpop.permute.xlu0 %1718
        %1720 = vrot.lane.b32.xlu0 %v890, 48
        %v1721 = vpop.permute.xlu0 %1720
        %1722 = vrot.lane.b32.xlu0 %v891, 48
        %v1723 = vpop.permute.xlu0 %1722
        %1724 = vrot.lane.b32.xlu0 %v892, 48
        %v1725 = vpop.permute.xlu0 %1724
        %1726 = vrot.lane.b32.xlu0 %v893, 48
        %v1727 = vpop.permute.xlu0 %1726
        %1728 = vrot.lane.b32.xlu0 %v894, 48
        %v1729 = vpop.permute.xlu0 %1728
        %1730 = vrot.lane.b32.xlu0 %v895, 48
        %v1731 = vpop.permute.xlu0 %1730
        %1732 = vrot.lane.b32.xlu0 %v896, 48
        %v1733 = vpop.permute.xlu0 %1732
        %1734 = vrot.lane.b32.xlu0 %v897, 48
        %v1735 = vpop.permute.xlu0 %1734
        %1736 = vrot.lane.b32.xlu0 %v898, 48
        %v1737 = vpop.permute.xlu0 %1736
        %1738 = vrot.lane.b32.xlu0 %v899, 48
        %v1739 = vpop.permute.xlu0 %1738
        %1740 = vrot.lane.b32.xlu0 %v900, 48
        %v1741 = vpop.permute.xlu0 %1740
        %1742 = vrot.lane.b32.xlu0 %v901, 48
        %v1743 = vpop.permute.xlu0 %1742
        %1744 = vrot.lane.b32.xlu0 %v1406, 48
        %v1745 = vpop.permute.xlu0 %1744
        %1746 = vrot.lane.b32.xlu0 %v1407, 48
        %v1747 = vpop.permute.xlu0 %1746
        %1748 = vrot.lane.b32.xlu0 %v1408, 48
        %v1749 = vpop.permute.xlu0 %1748
        %1750 = vrot.lane.b32.xlu0 %v1409, 48
        %v1751 = vpop.permute.xlu0 %1750
        %1752 = vrot.lane.b32.xlu0 %v1410, 48
        %v1753 = vpop.permute.xlu0 %1752
        %1754 = vrot.lane.b32.xlu0 %v1411, 48
        %v1755 = vpop.permute.xlu0 %1754
        %1756 = vrot.lane.b32.xlu0 %v1412, 48
        %v1757 = vpop.permute.xlu0 %1756
        %1758 = vrot.lane.b32.xlu0 %v1695, 48
        %v1759 = vpop.permute.xlu0 %1758
        %v1761 = vunpack.c.l.b16 %v295
        %v1762 = vpack.c.b16 %v1761, %v1694
        %v1764 = vshrl.u32 %v1762, 16
        %v1766 = vshll.u32 %v1762, 16
        %v1768 = vrot.slane %v1766, 1
        %v1769 = vor.u32 %v1764, %v1768
        %1770 = vrot.lane.b32.xlu0 %v547, 52
        %v1771 = vpop.permute.xlu0 %1770
        %1772 = vrot.lane.b32.xlu0 %v554, 52
        %v1773 = vpop.permute.xlu0 %1772
        %1774 = vrot.lane.b32.xlu0 %v561, 52
        %v1775 = vpop.permute.xlu0 %1774
        %1776 = vrot.lane.b32.xlu0 %v568, 52
        %v1777 = vpop.permute.xlu0 %1776
        %1778 = vrot.lane.b32.xlu0 %v575, 52
        %v1779 = vpop.permute.xlu0 %1778
        %1780 = vrot.lane.b32.xlu0 %v582, 52
        %v1781 = vpop.permute.xlu0 %1780
        %1782 = vrot.lane.b32.xlu0 %v589, 52
        %v1783 = vpop.permute.xlu0 %1782
        %1784 = vrot.lane.b32.xlu0 %v991, 52
        %v1785 = vpop.permute.xlu0 %1784
        %1786 = vrot.lane.b32.xlu0 %v603, 52
        %v1787 = vpop.permute.xlu0 %1786
        %1788 = vrot.lane.b32.xlu0 %v610, 52
        %v1789 = vpop.permute.xlu0 %1788
        %1790 = vrot.lane.b32.xlu0 %v617, 52
        %v1791 = vpop.permute.xlu0 %1790
        %1792 = vrot.lane.b32.xlu0 %v624, 52
        %v1793 = vpop.permute.xlu0 %1792
        %1794 = vrot.lane.b32.xlu0 %v631, 52
        %v1795 = vpop.permute.xlu0 %1794
        %1796 = vrot.lane.b32.xlu0 %v638, 52
        %v1797 = vpop.permute.xlu0 %1796
        %1798 = vrot.lane.b32.xlu0 %v645, 52
        %v1799 = vpop.permute.xlu0 %1798
        %1800 = vrot.lane.b32.xlu0 %v998, 52
        %v1801 = vpop.permute.xlu0 %1800
        %1802 = vrot.lane.b32.xlu0 %v659, 52
        %v1803 = vpop.permute.xlu0 %1802
        %1804 = vrot.lane.b32.xlu0 %v666, 52
        %v1805 = vpop.permute.xlu0 %1804
        %1806 = vrot.lane.b32.xlu0 %v673, 52
        %v1807 = vpop.permute.xlu0 %1806
        %1808 = vrot.lane.b32.xlu0 %v680, 52
        %v1809 = vpop.permute.xlu0 %1808
        %1810 = vrot.lane.b32.xlu0 %v687, 52
        %v1811 = vpop.permute.xlu0 %1810
        %1812 = vrot.lane.b32.xlu0 %v694, 52
        %v1813 = vpop.permute.xlu0 %1812
        %1814 = vrot.lane.b32.xlu0 %v701, 52
        %v1815 = vpop.permute.xlu0 %1814
        %1816 = vrot.lane.b32.xlu0 %v1005, 52
        %v1817 = vpop.permute.xlu0 %1816
        %1818 = vrot.lane.b32.xlu0 %v1514, 52
        %v1819 = vpop.permute.xlu0 %1818
        %1820 = vrot.lane.b32.xlu0 %v1521, 52
        %v1821 = vpop.permute.xlu0 %1820
        %1822 = vrot.lane.b32.xlu0 %v1528, 52
        %v1823 = vpop.permute.xlu0 %1822
        %1824 = vrot.lane.b32.xlu0 %v1535, 52
        %v1825 = vpop.permute.xlu0 %1824
        %1826 = vrot.lane.b32.xlu0 %v1542, 52
        %v1827 = vpop.permute.xlu0 %1826
        %1828 = vrot.lane.b32.xlu0 %v1549, 52
        %v1829 = vpop.permute.xlu0 %1828
        %1830 = vrot.lane.b32.xlu0 %v1556, 52
        %v1831 = vpop.permute.xlu0 %1830
        %1832 = vrot.lane.b32.xlu0 %v1769, 52
        %v1833 = vpop.permute.xlu0 %1832
        %v1834 = vrot.slane %v1762, 1
        %1835 = vrot.lane.b32.xlu0 %v775, 56
        %v1836 = vpop.permute.xlu0 %1835
        %1837 = vrot.lane.b32.xlu0 %v776, 56
        %v1838 = vpop.permute.xlu0 %1837
        %1839 = vrot.lane.b32.xlu0 %v777, 56
        %v1840 = vpop.permute.xlu0 %1839
        %1841 = vrot.lane.b32.xlu0 %v778, 56
        %v1842 = vpop.permute.xlu0 %1841
        %1843 = vrot.lane.b32.xlu0 %v779, 56
        %v1844 = vpop.permute.xlu0 %1843
        %1845 = vrot.lane.b32.xlu0 %v780, 56
        %v1846 = vpop.permute.xlu0 %1845
        %1847 = vrot.lane.b32.xlu0 %v781, 56
        %v1848 = vpop.permute.xlu0 %1847
        %1849 = vrot.lane.b32.xlu0 %v1071, 56
        %v1850 = vpop.permute.xlu0 %1849
        %1851 = vrot.lane.b32.xlu0 %v783, 56
        %v1852 = vpop.permute.xlu0 %1851
        %1853 = vrot.lane.b32.xlu0 %v784, 56
        %v1854 = vpop.permute.xlu0 %1853
        %1855 = vrot.lane.b32.xlu0 %v785, 56
        %v1856 = vpop.permute.xlu0 %1855
        %1857 = vrot.lane.b32.xlu0 %v786, 56
        %v1858 = vpop.permute.xlu0 %1857
        %1859 = vrot.lane.b32.xlu0 %v787, 56
        %v1860 = vpop.permute.xlu0 %1859
        %1861 = vrot.lane.b32.xlu0 %v788, 56
        %v1862 = vpop.permute.xlu0 %1861
        %1863 = vrot.lane.b32.xlu0 %v789, 56
        %v1864 = vpop.permute.xlu0 %1863
        %1865 = vrot.lane.b32.xlu0 %v1072, 56
        %v1866 = vpop.permute.xlu0 %1865
        %1867 = vrot.lane.b32.xlu0 %v791, 56
        %v1868 = vpop.permute.xlu0 %1867
        %1869 = vrot.lane.b32.xlu0 %v792, 56
        %v1870 = vpop.permute.xlu0 %1869
        %1871 = vrot.lane.b32.xlu0 %v793, 56
        %v1872 = vpop.permute.xlu0 %1871
        %1873 = vrot.lane.b32.xlu0 %v794, 56
        %v1874 = vpop.permute.xlu0 %1873
        %1875 = vrot.lane.b32.xlu0 %v795, 56
        %v1876 = vpop.permute.xlu0 %1875
        %1877 = vrot.lane.b32.xlu0 %v796, 56
        %v1878 = vpop.permute.xlu0 %1877
        %1879 = vrot.lane.b32.xlu0 %v797, 56
        %v1880 = vpop.permute.xlu0 %1879
        %1881 = vrot.lane.b32.xlu0 %v1073, 56
        %v1882 = vpop.permute.xlu0 %1881
        %1883 = vrot.lane.b32.xlu0 %v1622, 56
        %v1884 = vpop.permute.xlu0 %1883
        %1885 = vrot.lane.b32.xlu0 %v1623, 56
        %v1886 = vpop.permute.xlu0 %1885
        %1887 = vrot.lane.b32.xlu0 %v1624, 56
        %v1888 = vpop.permute.xlu0 %1887
        %1889 = vrot.lane.b32.xlu0 %v1625, 56
        %v1890 = vpop.permute.xlu0 %1889
        %1891 = vrot.lane.b32.xlu0 %v1626, 56
        %v1892 = vpop.permute.xlu0 %1891
        %1893 = vrot.lane.b32.xlu0 %v1627, 56
        %v1894 = vpop.permute.xlu0 %1893
        %1895 = vrot.lane.b32.xlu0 %v1628, 56
        %v1896 = vpop.permute.xlu0 %1895
        %1897 = vrot.lane.b32.xlu0 %v1834, 56
        %v1898 = vpop.permute.xlu0 %1897
        %v1900 = vunpack.c.l.b16 %v296
        %v1901 = vpack.c.b16 %v1900, %v1900
        %1902 = vrot.lane.b32.xlu0 %v879, 60
        %v1903 = vpop.permute.xlu0 %1902
        %1904 = vrot.lane.b32.xlu0 %v880, 60
        %v1905 = vpop.permute.xlu0 %1904
        %1906 = vrot.lane.b32.xlu0 %v881, 60
        %v1907 = vpop.permute.xlu0 %1906
        %1908 = vrot.lane.b32.xlu0 %v882, 60
        %v1909 = vpop.permute.xlu0 %1908
        %1910 = vrot.lane.b32.xlu0 %v883, 60
        %v1911 = vpop.permute.xlu0 %1910
        %1912 = vrot.lane.b32.xlu0 %v884, 60
        %v1913 = vpop.permute.xlu0 %1912
        %1914 = vrot.lane.b32.xlu0 %v885, 60
        %v1915 = vpop.permute.xlu0 %1914
        %1916 = vrot.lane.b32.xlu0 %v1147, 60
        %v1917 = vpop.permute.xlu0 %1916
        %1918 = vrot.lane.b32.xlu0 %v887, 60
        %v1919 = vpop.permute.xlu0 %1918
        %1920 = vrot.lane.b32.xlu0 %v888, 60
        %v1921 = vpop.permute.xlu0 %1920
        %1922 = vrot.lane.b32.xlu0 %v889, 60
        %v1923 = vpop.permute.xlu0 %1922
        %1924 = vrot.lane.b32.xlu0 %v890, 60
        %v1925 = vpop.permute.xlu0 %1924
        %1926 = vrot.lane.b32.xlu0 %v891, 60
        %v1927 = vpop.permute.xlu0 %1926
        %1928 = vrot.lane.b32.xlu0 %v892, 60
        %v1929 = vpop.permute.xlu0 %1928
        %1930 = vrot.lane.b32.xlu0 %v893, 60
        %v1931 = vpop.permute.xlu0 %1930
        %1932 = vrot.lane.b32.xlu0 %v1148, 60
        %v1933 = vpop.permute.xlu0 %1932
        %1934 = vrot.lane.b32.xlu0 %v895, 60
        %v1935 = vpop.permute.xlu0 %1934
        %1936 = vrot.lane.b32.xlu0 %v896, 60
        %v1937 = vpop.permute.xlu0 %1936
        %1938 = vrot.lane.b32.xlu0 %v897, 60
        %v1939 = vpop.permute.xlu0 %1938
        %1940 = vrot.lane.b32.xlu0 %v898, 60
        %v1941 = vpop.permute.xlu0 %1940
        %1942 = vrot.lane.b32.xlu0 %v899, 60
        %v1943 = vpop.permute.xlu0 %1942
        %1944 = vrot.lane.b32.xlu0 %v900, 60
        %v1945 = vpop.permute.xlu0 %1944
        %1946 = vrot.lane.b32.xlu0 %v901, 60
        %v1947 = vpop.permute.xlu0 %1946
        %1948 = vrot.lane.b32.xlu0 %v1149, 60
        %v1949 = vpop.permute.xlu0 %1948
        %1950 = vrot.lane.b32.xlu0 %v1407, 60
        %v1951 = vpop.permute.xlu0 %1950
        %1952 = vrot.lane.b32.xlu0 %v1408, 60
        %v1953 = vpop.permute.xlu0 %1952
        %1954 = vrot.lane.b32.xlu0 %v1409, 60
        %v1955 = vpop.permute.xlu0 %1954
        %1956 = vrot.lane.b32.xlu0 %v1410, 60
        %v1957 = vpop.permute.xlu0 %1956
        %1958 = vrot.lane.b32.xlu0 %v1411, 60
        %v1959 = vpop.permute.xlu0 %1958
        %1960 = vrot.lane.b32.xlu0 %v1412, 60
        %v1961 = vpop.permute.xlu0 %1960
        %1962 = vrot.lane.b32.xlu0 %v1695, 60
        %v1963 = vpop.permute.xlu0 %1962
        %1964 = vrot.lane.b32.xlu0 %v1901, 60
        %v1965 = vpop.permute.xlu0 %1964
        %vm1966 = vcmask 31744
        %v1969 = vsel %vm1966, %v198, %v703
        %v1972 = vsel %vm1966, %v200, %v705
        %v1975 = vsel %vm1966, %v202, %v707
        %v1978 = vsel %vm1966, %v204, %v709
        %v1981 = vsel %vm1966, %v206, %v711
        %v1984 = vsel %vm1966, %v208, %v713
        %v1987 = vsel %vm1966, %v210, %v715
        %v1990 = vsel %vm1966, %v212, %v717
        %v1993 = vsel %vm1966, %v218, %v719
        %v1996 = vsel %vm1966, %v220, %v721
        %v1999 = vsel %vm1966, %v222, %v723
        %v2002 = vsel %vm1966, %v224, %v725
        %v2005 = vsel %vm1966, %v226, %v727
        %v2008 = vsel %vm1966, %v228, %v729
        %v2011 = vsel %vm1966, %v230, %v731
        %v2014 = vsel %vm1966, %v232, %v733
        %v2017 = vsel %vm1966, %v238, %v735
        %v2020 = vsel %vm1966, %v240, %v737
        %v2023 = vsel %vm1966, %v242, %v739
        %v2026 = vsel %vm1966, %v244, %v741
        %v2029 = vsel %vm1966, %v246, %v743
        %v2032 = vsel %vm1966, %v248, %v745
        %v2035 = vsel %vm1966, %v250, %v747
        %v2038 = vsel %vm1966, %v252, %v749
        %v2041 = vsel %vm1966, %v258, %v751
        %v2044 = vsel %vm1966, %v260, %v753
        %v2047 = vsel %vm1966, %v262, %v755
        %v2050 = vsel %vm1966, %v264, %v757
        %v2053 = vsel %vm1966, %v266, %v759
        %v2056 = vsel %vm1966, %v268, %v761
        %v2059 = vsel %vm1966, %v270, %v763
        %v2062 = vsel %vm1966, %v272, %v765
        %vm2063 = vcmask 64512
        %v2065 = vsel %vm2063, %v1969, %v799
        %v2067 = vsel %vm2063, %v1972, %v801
        %v2069 = vsel %vm2063, %v1975, %v803
        %v2071 = vsel %vm2063, %v1978, %v805
        %v2073 = vsel %vm2063, %v1981, %v807
        %v2075 = vsel %vm2063, %v1984, %v809
        %v2077 = vsel %vm2063, %v1987, %v811
        %v2079 = vsel %vm2063, %v1990, %v813
        %v2081 = vsel %vm2063, %v1993, %v815
        %v2083 = vsel %vm2063, %v1996, %v817
        %v2085 = vsel %vm2063, %v1999, %v819
        %v2087 = vsel %vm2063, %v2002, %v821
        %v2089 = vsel %vm2063, %v2005, %v823
        %v2091 = vsel %vm2063, %v2008, %v825
        %v2093 = vsel %vm2063, %v2011, %v827
        %v2095 = vsel %vm2063, %v2014, %v829
        %v2097 = vsel %vm2063, %v2017, %v831
        %v2099 = vsel %vm2063, %v2020, %v833
        %v2101 = vsel %vm2063, %v2023, %v835
        %v2103 = vsel %vm2063, %v2026, %v837
        %v2105 = vsel %vm2063, %v2029, %v839
        %v2107 = vsel %vm2063, %v2032, %v841
        %v2109 = vsel %vm2063, %v2035, %v843
        %v2111 = vsel %vm2063, %v2038, %v845
        %v2113 = vsel %vm2063, %v2041, %v847
        %v2115 = vsel %vm2063, %v2044, %v849
        %v2117 = vsel %vm2063, %v2047, %v851
        %v2119 = vsel %vm2063, %v2050, %v853
        %v2121 = vsel %vm2063, %v2053, %v855
        %v2123 = vsel %vm2063, %v2056, %v857
        %v2125 = vsel %vm2063, %v2059, %v859
        %v2127 = vsel %vm2063, %v2062, %v861
        %vm2128 = vcmask 97280
        %v2130 = vsel %vm2128, %v2065, %v903
        %v2132 = vsel %vm2128, %v2067, %v905
        %v2134 = vsel %vm2128, %v2069, %v907
        %v2136 = vsel %vm2128, %v2071, %v909
        %v2138 = vsel %vm2128, %v2073, %v911
        %v2140 = vsel %vm2128, %v2075, %v913
        %v2142 = vsel %vm2128, %v2077, %v915
        %v2144 = vsel %vm2128, %v2079, %v917
        %v2146 = vsel %vm2128, %v2081, %v919
        %v2148 = vsel %vm2128, %v2083, %v921
        %v2150 = vsel %vm2128, %v2085, %v923
        %v2152 = vsel %vm2128, %v2087, %v925
        %v2154 = vsel %vm2128, %v2089, %v927
        %v2156 = vsel %vm2128, %v2091, %v929
        %v2158 = vsel %vm2128, %v2093, %v931
        %v2160 = vsel %vm2128, %v2095, %v933
        %v2162 = vsel %vm2128, %v2097, %v935
        %v2164 = vsel %vm2128, %v2099, %v937
        %v2166 = vsel %vm2128, %v2101, %v939
        %v2168 = vsel %vm2128, %v2103, %v941
        %v2170 = vsel %vm2128, %v2105, %v943
        %v2172 = vsel %vm2128, %v2107, %v945
        %v2174 = vsel %vm2128, %v2109, %v947
        %v2176 = vsel %vm2128, %v2111, %v949
        %v2178 = vsel %vm2128, %v2113, %v951
        %v2180 = vsel %vm2128, %v2115, %v953
        %v2182 = vsel %vm2128, %v2117, %v955
        %v2184 = vsel %vm2128, %v2119, %v957
        %v2186 = vsel %vm2128, %v2121, %v959
        %v2188 = vsel %vm2128, %v2123, %v961
        %v2190 = vsel %vm2128, %v2125, %v963
        %v2192 = vsel %vm2128, %v2127, %v965
        %vm2193 = vcmask 130048
        %v2195 = vsel %vm2193, %v2130, %v1007
        %v2197 = vsel %vm2193, %v2132, %v1009
        %v2199 = vsel %vm2193, %v2134, %v1011
        %v2201 = vsel %vm2193, %v2136, %v1013
        %v2203 = vsel %vm2193, %v2138, %v1015
        %v2205 = vsel %vm2193, %v2140, %v1017
        %v2207 = vsel %vm2193, %v2142, %v1019
        %v2209 = vsel %vm2193, %v2144, %v1021
        %v2211 = vsel %vm2193, %v2146, %v1023
        %v2213 = vsel %vm2193, %v2148, %v1025
        %v2215 = vsel %vm2193, %v2150, %v1027
        %v2217 = vsel %vm2193, %v2152, %v1029
        %v2219 = vsel %vm2193, %v2154, %v1031
        %v2221 = vsel %vm2193, %v2156, %v1033
        %v2223 = vsel %vm2193, %v2158, %v1035
        %v2225 = vsel %vm2193, %v2160, %v1037
        %v2227 = vsel %vm2193, %v2162, %v1039
        %v2229 = vsel %vm2193, %v2164, %v1041
        %v2231 = vsel %vm2193, %v2166, %v1043
        %v2233 = vsel %vm2193, %v2168, %v1045
        %v2235 = vsel %vm2193, %v2170, %v1047
        %v2237 = vsel %vm2193, %v2172, %v1049
        %v2239 = vsel %vm2193, %v2174, %v1051
        %v2241 = vsel %vm2193, %v2176, %v1053
        %v2243 = vsel %vm2193, %v2178, %v1055
        %v2245 = vsel %vm2193, %v2180, %v1057
        %v2247 = vsel %vm2193, %v2182, %v1059
        %v2249 = vsel %vm2193, %v2184, %v1061
        %v2251 = vsel %vm2193, %v2186, %v1063
        %v2253 = vsel %vm2193, %v2188, %v1065
        %v2255 = vsel %vm2193, %v2190, %v1067
        %v2257 = vsel %vm2193, %v2192, %v1069
        %vm2258 = vcmask 162816
        %v2260 = vsel %vm2258, %v2195, %v1075
        %v2262 = vsel %vm2258, %v2197, %v1077
        %v2264 = vsel %vm2258, %v2199, %v1079
        %v2266 = vsel %vm2258, %v2201, %v1081
        %v2268 = vsel %vm2258, %v2203, %v1083
        %v2270 = vsel %vm2258, %v2205, %v1085
        %v2272 = vsel %vm2258, %v2207, %v1087
        %v2274 = vsel %vm2258, %v2209, %v1089
        %v2276 = vsel %vm2258, %v2211, %v1091
        %v2278 = vsel %vm2258, %v2213, %v1093
        %v2280 = vsel %vm2258, %v2215, %v1095
        %v2282 = vsel %vm2258, %v2217, %v1097
        %v2284 = vsel %vm2258, %v2219, %v1099
        %v2286 = vsel %vm2258, %v2221, %v1101
        %v2288 = vsel %vm2258, %v2223, %v1103
        %v2290 = vsel %vm2258, %v2225, %v1105
        %v2292 = vsel %vm2258, %v2227, %v1107
        %v2294 = vsel %vm2258, %v2229, %v1109
        %v2296 = vsel %vm2258, %v2231, %v1111
        %v2298 = vsel %vm2258, %v2233, %v1113
        %v2300 = vsel %vm2258, %v2235, %v1115
        %v2302 = vsel %vm2258, %v2237, %v1117
        %v2304 = vsel %vm2258, %v2239, %v1119
        %v2306 = vsel %vm2258, %v2241, %v1121
        %v2308 = vsel %vm2258, %v2243, %v1123
        %v2310 = vsel %vm2258, %v2245, %v1125
        %v2312 = vsel %vm2258, %v2247, %v1127
        %v2314 = vsel %vm2258, %v2249, %v1129
        %v2316 = vsel %vm2258, %v2251, %v1131
        %v2318 = vsel %vm2258, %v2253, %v1133
        %v2320 = vsel %vm2258, %v2255, %v1135
        %v2322 = vsel %vm2258, %v2257, %v1137
        %vm2323 = vcmask 195584
        %v2325 = vsel %vm2323, %v2260, %v1151
        %v2327 = vsel %vm2323, %v2262, %v1153
        %v2329 = vsel %vm2323, %v2264, %v1155
        %v2331 = vsel %vm2323, %v2266, %v1157
        %v2333 = vsel %vm2323, %v2268, %v1159
        %v2335 = vsel %vm2323, %v2270, %v1161
        %v2337 = vsel %vm2323, %v2272, %v1163
        %v2339 = vsel %vm2323, %v2274, %v1165
        %v2341 = vsel %vm2323, %v2276, %v1167
        %v2343 = vsel %vm2323, %v2278, %v1169
        %v2345 = vsel %vm2323, %v2280, %v1171
        %v2347 = vsel %vm2323, %v2282, %v1173
        %v2349 = vsel %vm2323, %v2284, %v1175
        %v2351 = vsel %vm2323, %v2286, %v1177
        %v2353 = vsel %vm2323, %v2288, %v1179
        %v2355 = vsel %vm2323, %v2290, %v1181
        %v2357 = vsel %vm2323, %v2292, %v1183
        %v2359 = vsel %vm2323, %v2294, %v1185
        %v2361 = vsel %vm2323, %v2296, %v1187
        %v2363 = vsel %vm2323, %v2298, %v1189
        %v2365 = vsel %vm2323, %v2300, %v1191
        %v2367 = vsel %vm2323, %v2302, %v1193
        %v2369 = vsel %vm2323, %v2304, %v1195
        %v2371 = vsel %vm2323, %v2306, %v1197
        %v2373 = vsel %vm2323, %v2308, %v1199
        %v2375 = vsel %vm2323, %v2310, %v1201
        %v2377 = vsel %vm2323, %v2312, %v1203
        %v2379 = vsel %vm2323, %v2314, %v1205
        %v2381 = vsel %vm2323, %v2316, %v1207
        %v2383 = vsel %vm2323, %v2318, %v1209
        %v2385 = vsel %vm2323, %v2320, %v1211
        %v2387 = vsel %vm2323, %v2322, %v1213
        %vm2388 = vcmask 228352
        %v2390 = vsel %vm2388, %v2325, %v1255
        %v2392 = vsel %vm2388, %v2327, %v1257
        %v2394 = vsel %vm2388, %v2329, %v1259
        %v2396 = vsel %vm2388, %v2331, %v1261
        %v2398 = vsel %vm2388, %v2333, %v1263
        %v2400 = vsel %vm2388, %v2335, %v1265
        %v2402 = vsel %vm2388, %v2337, %v1267
        %v2404 = vsel %vm2388, %v2339, %v1269
        %v2406 = vsel %vm2388, %v2341, %v1271
        %v2408 = vsel %vm2388, %v2343, %v1273
        %v2410 = vsel %vm2388, %v2345, %v1275
        %v2412 = vsel %vm2388, %v2347, %v1277
        %v2414 = vsel %vm2388, %v2349, %v1279
        %v2416 = vsel %vm2388, %v2351, %v1281
        %v2418 = vsel %vm2388, %v2353, %v1283
        %v2420 = vsel %vm2388, %v2355, %v1285
        %v2422 = vsel %vm2388, %v2357, %v1287
        %v2424 = vsel %vm2388, %v2359, %v1289
        %v2426 = vsel %vm2388, %v2361, %v1291
        %v2428 = vsel %vm2388, %v2363, %v1293
        %v2430 = vsel %vm2388, %v2365, %v1295
        %v2432 = vsel %vm2388, %v2367, %v1297
        %v2434 = vsel %vm2388, %v2369, %v1299
        %v2436 = vsel %vm2388, %v2371, %v1301
        %v2438 = vsel %vm2388, %v2373, %v1303
        %v2440 = vsel %vm2388, %v2375, %v1305
        %v2442 = vsel %vm2388, %v2377, %v1307
        %v2444 = vsel %vm2388, %v2379, %v1309
        %v2446 = vsel %vm2388, %v2381, %v1311
        %v2448 = vsel %vm2388, %v2383, %v1313
        %v2450 = vsel %vm2388, %v2385, %v1315
        %v2452 = vsel %vm2388, %v2387, %v1317
        %vm2453 = vcmask 261120
        %v2455 = vsel %vm2453, %v2390, %v1323
        %v2457 = vsel %vm2453, %v2392, %v1325
        %v2459 = vsel %vm2453, %v2394, %v1327
        %v2461 = vsel %vm2453, %v2396, %v1329
        %v2463 = vsel %vm2453, %v2398, %v1331
        %v2465 = vsel %vm2453, %v2400, %v1333
        %v2467 = vsel %vm2453, %v2402, %v1335
        %v2469 = vsel %vm2453, %v2404, %v1337
        %v2471 = vsel %vm2453, %v2406, %v1339
        %v2473 = vsel %vm2453, %v2408, %v1341
        %v2475 = vsel %vm2453, %v2410, %v1343
        %v2477 = vsel %vm2453, %v2412, %v1345
        %v2479 = vsel %vm2453, %v2414, %v1347
        %v2481 = vsel %vm2453, %v2416, %v1349
        %v2483 = vsel %vm2453, %v2418, %v1351
        %v2485 = vsel %vm2453, %v2420, %v1353
        %v2487 = vsel %vm2453, %v2422, %v1355
        %v2489 = vsel %vm2453, %v2424, %v1357
        %v2491 = vsel %vm2453, %v2426, %v1359
        %v2493 = vsel %vm2453, %v2428, %v1361
        %v2495 = vsel %vm2453, %v2430, %v1363
        %v2497 = vsel %vm2453, %v2432, %v1365
        %v2499 = vsel %vm2453, %v2434, %v1367
        %v2501 = vsel %vm2453, %v2436, %v1369
        %v2503 = vsel %vm2453, %v2438, %v1371
        %v2505 = vsel %vm2453, %v2440, %v1373
        %v2507 = vsel %vm2453, %v2442, %v1375
        %v2509 = vsel %vm2453, %v2444, %v1377
        %v2511 = vsel %vm2453, %v2446, %v1379
        %v2513 = vsel %vm2453, %v2448, %v1381
        %v2515 = vsel %vm2453, %v2450, %v1383
        %v2517 = vsel %vm2453, %v2452, %v1385
        %vm2518 = vcmask 293888
        %v2520 = vsel %vm2518, %v2455, %v1414
        %v2522 = vsel %vm2518, %v2457, %v1416
        %v2524 = vsel %vm2518, %v2459, %v1418
        %v2526 = vsel %vm2518, %v2461, %v1420
        %v2528 = vsel %vm2518, %v2463, %v1422
        %v2530 = vsel %vm2518, %v2465, %v1424
        %v2532 = vsel %vm2518, %v2467, %v1426
        %v2534 = vsel %vm2518, %v2469, %v1428
        %v2536 = vsel %vm2518, %v2471, %v1430
        %v2538 = vsel %vm2518, %v2473, %v1432
        %v2540 = vsel %vm2518, %v2475, %v1434
        %v2542 = vsel %vm2518, %v2477, %v1436
        %v2544 = vsel %vm2518, %v2479, %v1438
        %v2546 = vsel %vm2518, %v2481, %v1440
        %v2548 = vsel %vm2518, %v2483, %v1442
        %v2550 = vsel %vm2518, %v2485, %v1444
        %v2552 = vsel %vm2518, %v2487, %v1446
        %v2554 = vsel %vm2518, %v2489, %v1448
        %v2556 = vsel %vm2518, %v2491, %v1450
        %v2558 = vsel %vm2518, %v2493, %v1452
        %v2560 = vsel %vm2518, %v2495, %v1454
        %v2562 = vsel %vm2518, %v2497, %v1456
        %v2564 = vsel %vm2518, %v2499, %v1458
        %v2566 = vsel %vm2518, %v2501, %v1460
        %v2568 = vsel %vm2518, %v2503, %v1462
        %v2570 = vsel %vm2518, %v2505, %v1464
        %v2572 = vsel %vm2518, %v2507, %v1466
        %v2574 = vsel %vm2518, %v2509, %v1468
        %v2576 = vsel %vm2518, %v2511, %v1470
        %v2578 = vsel %vm2518, %v2513, %v1472
        %v2580 = vsel %vm2518, %v2515, %v1474
        %v2582 = vsel %vm2518, %v2517, %v1476
        %vm2583 = vcmask 326656
        %v2585 = vsel %vm2583, %v2520, %v1558
        %v2587 = vsel %vm2583, %v2522, %v1560
        %v2589 = vsel %vm2583, %v2524, %v1562
        %v2591 = vsel %vm2583, %v2526, %v1564
        %v2593 = vsel %vm2583, %v2528, %v1566
        %v2595 = vsel %vm2583, %v2530, %v1568
        %v2597 = vsel %vm2583, %v2532, %v1570
        %v2599 = vsel %vm2583, %v2534, %v1572
        %v2601 = vsel %vm2583, %v2536, %v1574
        %v2603 = vsel %vm2583, %v2538, %v1576
        %v2605 = vsel %vm2583, %v2540, %v1578
        %v2607 = vsel %vm2583, %v2542, %v1580
        %v2609 = vsel %vm2583, %v2544, %v1582
        %v2611 = vsel %vm2583, %v2546, %v1584
        %v2613 = vsel %vm2583, %v2548, %v1586
        %v2615 = vsel %vm2583, %v2550, %v1588
        %v2617 = vsel %vm2583, %v2552, %v1590
        %v2619 = vsel %vm2583, %v2554, %v1592
        %v2621 = vsel %vm2583, %v2556, %v1594
        %v2623 = vsel %vm2583, %v2558, %v1596
        %v2625 = vsel %vm2583, %v2560, %v1598
        %v2627 = vsel %vm2583, %v2562, %v1600
        %v2629 = vsel %vm2583, %v2564, %v1602
        %v2631 = vsel %vm2583, %v2566, %v1604
        %v2633 = vsel %vm2583, %v2568, %v1606
        %v2635 = vsel %vm2583, %v2570, %v1608
        %v2637 = vsel %vm2583, %v2572, %v1610
        %v2639 = vsel %vm2583, %v2574, %v1612
        %v2641 = vsel %vm2583, %v2576, %v1614
        %v2643 = vsel %vm2583, %v2578, %v1616
        %v2645 = vsel %vm2583, %v2580, %v1618
        %v2647 = vsel %vm2583, %v2582, %v1620
        %vm2648 = vcmask 359424
        %v2650 = vsel %vm2648, %v2585, %v1630
        %v2652 = vsel %vm2648, %v2587, %v1632
        %v2654 = vsel %vm2648, %v2589, %v1634
        %v2656 = vsel %vm2648, %v2591, %v1636
        %v2658 = vsel %vm2648, %v2593, %v1638
        %v2660 = vsel %vm2648, %v2595, %v1640
        %v2662 = vsel %vm2648, %v2597, %v1642
        %v2664 = vsel %vm2648, %v2599, %v1644
        %v2666 = vsel %vm2648, %v2601, %v1646
        %v2668 = vsel %vm2648, %v2603, %v1648
        %v2670 = vsel %vm2648, %v2605, %v1650
        %v2672 = vsel %vm2648, %v2607, %v1652
        %v2674 = vsel %vm2648, %v2609, %v1654
        %v2676 = vsel %vm2648, %v2611, %v1656
        %v2678 = vsel %vm2648, %v2613, %v1658
        %v2680 = vsel %vm2648, %v2615, %v1660
        %v2682 = vsel %vm2648, %v2617, %v1662
        %v2684 = vsel %vm2648, %v2619, %v1664
        %v2686 = vsel %vm2648, %v2621, %v1666
        %v2688 = vsel %vm2648, %v2623, %v1668
        %v2690 = vsel %vm2648, %v2625, %v1670
        %v2692 = vsel %vm2648, %v2627, %v1672
        %v2694 = vsel %vm2648, %v2629, %v1674
        %v2696 = vsel %vm2648, %v2631, %v1676
        %v2698 = vsel %vm2648, %v2633, %v1678
        %v2700 = vsel %vm2648, %v2635, %v1680
        %v2702 = vsel %vm2648, %v2637, %v1682
        %v2704 = vsel %vm2648, %v2639, %v1684
        %v2706 = vsel %vm2648, %v2641, %v1686
        %v2708 = vsel %vm2648, %v2643, %v1688
        %v2710 = vsel %vm2648, %v2645, %v1690
        %v2712 = vsel %vm2648, %v2647, %v1692
        %vm2713 = vcmask 392192
        %v2715 = vsel %vm2713, %v2650, %v1697
        %v2717 = vsel %vm2713, %v2652, %v1699
        %v2719 = vsel %vm2713, %v2654, %v1701
        %v2721 = vsel %vm2713, %v2656, %v1703
        %v2723 = vsel %vm2713, %v2658, %v1705
        %v2725 = vsel %vm2713, %v2660, %v1707
        %v2727 = vsel %vm2713, %v2662, %v1709
        %v2729 = vsel %vm2713, %v2664, %v1711
        %v2731 = vsel %vm2713, %v2666, %v1713
        %v2733 = vsel %vm2713, %v2668, %v1715
        %v2735 = vsel %vm2713, %v2670, %v1717
        %v2737 = vsel %vm2713, %v2672, %v1719
        %v2739 = vsel %vm2713, %v2674, %v1721
        %v2741 = vsel %vm2713, %v2676, %v1723
        %v2743 = vsel %vm2713, %v2678, %v1725
        %v2745 = vsel %vm2713, %v2680, %v1727
        %v2747 = vsel %vm2713, %v2682, %v1729
        %v2749 = vsel %vm2713, %v2684, %v1731
        %v2751 = vsel %vm2713, %v2686, %v1733
        %v2753 = vsel %vm2713, %v2688, %v1735
        %v2755 = vsel %vm2713, %v2690, %v1737
        %v2757 = vsel %vm2713, %v2692, %v1739
        %v2759 = vsel %vm2713, %v2694, %v1741
        %v2761 = vsel %vm2713, %v2696, %v1743
        %v2763 = vsel %vm2713, %v2698, %v1745
        %v2765 = vsel %vm2713, %v2700, %v1747
        %v2767 = vsel %vm2713, %v2702, %v1749
        %v2769 = vsel %vm2713, %v2704, %v1751
        %v2771 = vsel %vm2713, %v2706, %v1753
        %v2773 = vsel %vm2713, %v2708, %v1755
        %v2775 = vsel %vm2713, %v2710, %v1757
        %v2777 = vsel %vm2713, %v2712, %v1759
        %vm2778 = vcmask 424960
        %v2780 = vsel %vm2778, %v2715, %v1771
        %v2782 = vsel %vm2778, %v2717, %v1773
        %v2784 = vsel %vm2778, %v2719, %v1775
        %v2786 = vsel %vm2778, %v2721, %v1777
        %v2788 = vsel %vm2778, %v2723, %v1779
        %v2790 = vsel %vm2778, %v2725, %v1781
        %v2792 = vsel %vm2778, %v2727, %v1783
        %v2794 = vsel %vm2778, %v2729, %v1785
        %v2796 = vsel %vm2778, %v2731, %v1787
        %v2798 = vsel %vm2778, %v2733, %v1789
        %v2800 = vsel %vm2778, %v2735, %v1791
        %v2802 = vsel %vm2778, %v2737, %v1793
        %v2804 = vsel %vm2778, %v2739, %v1795
        %v2806 = vsel %vm2778, %v2741, %v1797
        %v2808 = vsel %vm2778, %v2743, %v1799
        %v2810 = vsel %vm2778, %v2745, %v1801
        %v2812 = vsel %vm2778, %v2747, %v1803
        %v2814 = vsel %vm2778, %v2749, %v1805
        %v2816 = vsel %vm2778, %v2751, %v1807
        %v2818 = vsel %vm2778, %v2753, %v1809
        %v2820 = vsel %vm2778, %v2755, %v1811
        %v2822 = vsel %vm2778, %v2757, %v1813
        %v2824 = vsel %vm2778, %v2759, %v1815
        %v2826 = vsel %vm2778, %v2761, %v1817
        %v2828 = vsel %vm2778, %v2763, %v1819
        %v2830 = vsel %vm2778, %v2765, %v1821
        %v2832 = vsel %vm2778, %v2767, %v1823
        %v2834 = vsel %vm2778, %v2769, %v1825
        %v2836 = vsel %vm2778, %v2771, %v1827
        %v2838 = vsel %vm2778, %v2773, %v1829
        %v2840 = vsel %vm2778, %v2775, %v1831
        %v2842 = vsel %vm2778, %v2777, %v1833
        %vm2843 = vcmask 457728
        %v2845 = vsel %vm2843, %v2780, %v1836
        %v2847 = vsel %vm2843, %v2782, %v1838
        %v2849 = vsel %vm2843, %v2784, %v1840
        %v2851 = vsel %vm2843, %v2786, %v1842
        %v2853 = vsel %vm2843, %v2788, %v1844
        %v2855 = vsel %vm2843, %v2790, %v1846
        %v2857 = vsel %vm2843, %v2792, %v1848
        %v2859 = vsel %vm2843, %v2794, %v1850
        %v2861 = vsel %vm2843, %v2796, %v1852
        %v2863 = vsel %vm2843, %v2798, %v1854
        %v2865 = vsel %vm2843, %v2800, %v1856
        %v2867 = vsel %vm2843, %v2802, %v1858
        %v2869 = vsel %vm2843, %v2804, %v1860
        %v2871 = vsel %vm2843, %v2806, %v1862
        %v2873 = vsel %vm2843, %v2808, %v1864
        %v2875 = vsel %vm2843, %v2810, %v1866
        %v2877 = vsel %vm2843, %v2812, %v1868
        %v2879 = vsel %vm2843, %v2814, %v1870
        %v2881 = vsel %vm2843, %v2816, %v1872
        %v2883 = vsel %vm2843, %v2818, %v1874
        %v2885 = vsel %vm2843, %v2820, %v1876
        %v2887 = vsel %vm2843, %v2822, %v1878
        %v2889 = vsel %vm2843, %v2824, %v1880
        %v2891 = vsel %vm2843, %v2826, %v1882
        %v2893 = vsel %vm2843, %v2828, %v1884
        %v2895 = vsel %vm2843, %v2830, %v1886
        %v2897 = vsel %vm2843, %v2832, %v1888
        %v2899 = vsel %vm2843, %v2834, %v1890
        %v2901 = vsel %vm2843, %v2836, %v1892
        %v2903 = vsel %vm2843, %v2838, %v1894
        %v2905 = vsel %vm2843, %v2840, %v1896
        %v2907 = vsel %vm2843, %v2842, %v1898
        %vm2908 = vcmask 490496
        %v2910 = vsel %vm2908, %v2845, %v1903
        %v2912 = vsel %vm2908, %v2847, %v1905
        %v2914 = vsel %vm2908, %v2849, %v1907
        %v2916 = vsel %vm2908, %v2851, %v1909
        %v2918 = vsel %vm2908, %v2853, %v1911
        %v2920 = vsel %vm2908, %v2855, %v1913
        %v2922 = vsel %vm2908, %v2857, %v1915
        %v2924 = vsel %vm2908, %v2859, %v1917
        %v2926 = vsel %vm2908, %v2861, %v1919
        %v2928 = vsel %vm2908, %v2863, %v1921
        %v2930 = vsel %vm2908, %v2865, %v1923
        %v2932 = vsel %vm2908, %v2867, %v1925
        %v2934 = vsel %vm2908, %v2869, %v1927
        %v2936 = vsel %vm2908, %v2871, %v1929
        %v2938 = vsel %vm2908, %v2873, %v1931
        %v2940 = vsel %vm2908, %v2875, %v1933
        %v2942 = vsel %vm2908, %v2877, %v1935
        %v2944 = vsel %vm2908, %v2879, %v1937
        %v2946 = vsel %vm2908, %v2881, %v1939
        %v2948 = vsel %vm2908, %v2883, %v1941
        %v2950 = vsel %vm2908, %v2885, %v1943
        %v2952 = vsel %vm2908, %v2887, %v1945
        %v2954 = vsel %vm2908, %v2889, %v1947
        %v2956 = vsel %vm2908, %v2891, %v1949
        %v2958 = vsel %vm2908, %v2893, %v1951
        %v2960 = vsel %vm2908, %v2895, %v1953
        %v2962 = vsel %vm2908, %v2897, %v1955
        %v2964 = vsel %vm2908, %v2899, %v1957
        %v2966 = vsel %vm2908, %v2901, %v1959
        %v2968 = vsel %vm2908, %v2903, %v1961
        %v2970 = vsel %vm2908, %v2905, %v1963
        %v2972 = vsel %vm2908, %v2907, %v1965
        %v2974 = vunpack.c.l.b16 %v297
        %v2975 = vpack.c.b16 %v2974, %v1900
        %v2977 = vshrl.u32 %v2975, 16
        %v2979 = vshll.u32 %v2975, 16
        %v2981 = vrot.slane %v2979, 1
        %v2982 = vor.u32 %v2977, %v2981
        %2983 = vrot.lane.b32.xlu0 %v991, 4
        %v2984 = vpop.permute.xlu0 %2983
        %2985 = vrot.lane.b32.xlu0 %v1239, 4
        %v2986 = vpop.permute.xlu0 %2985
        %2987 = vrot.lane.b32.xlu0 %v998, 4
        %v2988 = vpop.permute.xlu0 %2987
        %2989 = vrot.lane.b32.xlu0 %v1246, 4
        %v2990 = vpop.permute.xlu0 %2989
        %2991 = vrot.lane.b32.xlu0 %v1005, 4
        %v2992 = vpop.permute.xlu0 %2991
        %2993 = vrot.lane.b32.xlu0 %v1253, 4
        %v2994 = vpop.permute.xlu0 %2993
        %2995 = vrot.lane.b32.xlu0 %v1521, 4
        %v2996 = vpop.permute.xlu0 %2995
        %2997 = vrot.lane.b32.xlu0 %v1528, 4
        %v2998 = vpop.permute.xlu0 %2997
        %2999 = vrot.lane.b32.xlu0 %v1535, 4
        %v3000 = vpop.permute.xlu0 %2999
        %3001 = vrot.lane.b32.xlu0 %v1542, 4
        %v3002 = vpop.permute.xlu0 %3001
        %3003 = vrot.lane.b32.xlu0 %v1549, 4
        %v3004 = vpop.permute.xlu0 %3003
        %3005 = vrot.lane.b32.xlu0 %v1556, 4
        %v3006 = vpop.permute.xlu0 %3005
        %3007 = vrot.lane.b32.xlu0 %v1769, 4
        %v3008 = vpop.permute.xlu0 %3007
        %3009 = vrot.lane.b32.xlu0 %v2982, 4
        %v3010 = vpop.permute.xlu0 %3009
        %v3019 = vunpack.c.l.b16 %v298
        %v3020 = vunpack.c.l.b16 %v300
        %v3021 = vunpack.c.l.b16 %v302
        %v3022 = vunpack.c.l.b16 %v304
        %v3023 = vunpack.c.l.b16 %v306
        %v3024 = vunpack.c.l.b16 %v308
        %v3025 = vunpack.c.l.b16 %v310
        %v3026 = vunpack.c.l.b16 %v312
        %v3027 = vpack.c.b16 %v3019, %v3019
        %v3028 = vpack.c.b16 %v3020, %v3020
        %v3029 = vpack.c.b16 %v3021, %v3021
        %v3030 = vpack.c.b16 %v3022, %v3022
        %v3031 = vpack.c.b16 %v3023, %v3023
        %v3032 = vpack.c.b16 %v3024, %v3024
        %v3033 = vpack.c.b16 %v3025, %v3025
        %v3034 = vpack.c.b16 %v3026, %v3026
        %v3036 = vshrl.u32 %v1403, 16
        %v3038 = vrot.slane %v3036, 7
        %v3039 = vshll.u32 %v1403, 16
        %v3041 = vor.u32 %v3038, %v3039
        %v3043 = vshrl.u32 %v886, 16
        %v3045 = vrot.slane %v3043, 7
        %v3046 = vshll.u32 %v886, 16
        %v3048 = vor.u32 %v3045, %v3046
        %v3050 = vshrl.u32 %v887, 16
        %v3052 = vrot.slane %v3050, 7
        %v3053 = vshll.u32 %v887, 16
        %v3055 = vor.u32 %v3052, %v3053
        %v3057 = vshrl.u32 %v888, 16
        %v3059 = vrot.slane %v3057, 7
        %v3060 = vshll.u32 %v888, 16
        %v3062 = vor.u32 %v3059, %v3060
        %v3064 = vshrl.u32 %v889, 16
        %v3066 = vrot.slane %v3064, 7
        %v3067 = vshll.u32 %v889, 16
        %v3069 = vor.u32 %v3066, %v3067
        %v3071 = vshrl.u32 %v890, 16
        %v3073 = vrot.slane %v3071, 7
        %v3074 = vshll.u32 %v890, 16
        %v3076 = vor.u32 %v3073, %v3074
        %v3078 = vshrl.u32 %v891, 16
        %v3080 = vrot.slane %v3078, 7
        %v3081 = vshll.u32 %v891, 16
        %v3083 = vor.u32 %v3080, %v3081
        %v3085 = vshrl.u32 %v892, 16
        %v3087 = vrot.slane %v3085, 7
        %v3088 = vshll.u32 %v892, 16
        %v3090 = vor.u32 %v3087, %v3088
        %v3092 = vshrl.u32 %v1404, 16
        %v3094 = vrot.slane %v3092, 7
        %v3095 = vshll.u32 %v1404, 16
        %v3097 = vor.u32 %v3094, %v3095
        %v3099 = vshrl.u32 %v894, 16
        %v3101 = vrot.slane %v3099, 7
        %v3102 = vshll.u32 %v894, 16
        %v3104 = vor.u32 %v3101, %v3102
        %v3106 = vshrl.u32 %v895, 16
        %v3108 = vrot.slane %v3106, 7
        %v3109 = vshll.u32 %v895, 16
        %v3111 = vor.u32 %v3108, %v3109
        %v3113 = vshrl.u32 %v896, 16
        %v3115 = vrot.slane %v3113, 7
        %v3116 = vshll.u32 %v896, 16
        %v3118 = vor.u32 %v3115, %v3116
        %v3120 = vshrl.u32 %v897, 16
        %v3122 = vrot.slane %v3120, 7
        %v3123 = vshll.u32 %v897, 16
        %v3125 = vor.u32 %v3122, %v3123
        %v3127 = vshrl.u32 %v898, 16
        %v3129 = vrot.slane %v3127, 7
        %v3130 = vshll.u32 %v898, 16
        %v3132 = vor.u32 %v3129, %v3130
        %v3134 = vshrl.u32 %v899, 16
        %v3136 = vrot.slane %v3134, 7
        %v3137 = vshll.u32 %v899, 16
        %v3139 = vor.u32 %v3136, %v3137
        %v3141 = vshrl.u32 %v900, 16
        %v3143 = vrot.slane %v3141, 7
        %v3144 = vshll.u32 %v900, 16
        %v3146 = vor.u32 %v3143, %v3144
        %v3148 = vshrl.u32 %v1405, 16
        %v3150 = vrot.slane %v3148, 7
        %v3151 = vshll.u32 %v1405, 16
        %v3153 = vor.u32 %v3150, %v3151
        %v3155 = vshrl.u32 %v1406, 16
        %v3157 = vrot.slane %v3155, 7
        %v3158 = vshll.u32 %v1406, 16
        %v3160 = vor.u32 %v3157, %v3158
        %v3162 = vshrl.u32 %v1407, 16
        %v3164 = vrot.slane %v3162, 7
        %v3165 = vshll.u32 %v1407, 16
        %v3167 = vor.u32 %v3164, %v3165
        %v3169 = vshrl.u32 %v1408, 16
        %v3171 = vrot.slane %v3169, 7
        %v3172 = vshll.u32 %v1408, 16
        %v3174 = vor.u32 %v3171, %v3172
        %v3176 = vshrl.u32 %v1409, 16
        %v3178 = vrot.slane %v3176, 7
        %v3179 = vshll.u32 %v1409, 16
        %v3181 = vor.u32 %v3178, %v3179
        %v3183 = vshrl.u32 %v1410, 16
        %v3185 = vrot.slane %v3183, 7
        %v3186 = vshll.u32 %v1410, 16
        %v3188 = vor.u32 %v3185, %v3186
        %v3190 = vshrl.u32 %v1411, 16
        %v3192 = vrot.slane %v3190, 7
        %v3193 = vshll.u32 %v1411, 16
        %v3195 = vor.u32 %v3192, %v3193
        %v3197 = vshrl.u32 %v1412, 16
        %v3199 = vrot.slane %v3197, 7
        %v3200 = vshll.u32 %v1412, 16
        %v3202 = vor.u32 %v3199, %v3200
        %v3204 = vshrl.u32 %v3027, 16
        %v3206 = vrot.slane %v3204, 7
        %v3207 = vshll.u32 %v3027, 16
        %v3209 = vor.u32 %v3206, %v3207
        %v3211 = vshrl.u32 %v3028, 16
        %v3213 = vrot.slane %v3211, 7
        %v3214 = vshll.u32 %v3028, 16
        %v3216 = vor.u32 %v3213, %v3214
        %v3218 = vshrl.u32 %v3029, 16
        %v3220 = vrot.slane %v3218, 7
        %v3221 = vshll.u32 %v3029, 16
        %v3223 = vor.u32 %v3220, %v3221
        %v3225 = vshrl.u32 %v3030, 16
        %v3227 = vrot.slane %v3225, 7
        %v3228 = vshll.u32 %v3030, 16
        %v3230 = vor.u32 %v3227, %v3228
        %v3232 = vshrl.u32 %v3031, 16
        %v3234 = vrot.slane %v3232, 7
        %v3235 = vshll.u32 %v3031, 16
        %v3237 = vor.u32 %v3234, %v3235
        %v3239 = vshrl.u32 %v3032, 16
        %v3241 = vrot.slane %v3239, 7
        %v3242 = vshll.u32 %v3032, 16
        %v3244 = vor.u32 %v3241, %v3242
        %v3246 = vshrl.u32 %v3033, 16
        %v3248 = vrot.slane %v3246, 7
        %v3249 = vshll.u32 %v3033, 16
        %v3251 = vor.u32 %v3248, %v3249
        %v3253 = vshrl.u32 %v3034, 16
        %v3255 = vrot.slane %v3253, 7
        %v3256 = vshll.u32 %v3034, 16
        %v3258 = vor.u32 %v3255, %v3256
        %3259 = vrot.lane.b32.xlu0 %v3041, 8
        %v3260 = vpop.permute.xlu0 %3259
        %3261 = vrot.lane.b32.xlu0 %v3048, 8
        %v3262 = vpop.permute.xlu0 %3261
        %3263 = vrot.lane.b32.xlu0 %v3055, 8
        %v3264 = vpop.permute.xlu0 %3263
        %3265 = vrot.lane.b32.xlu0 %v3062, 8
        %v3266 = vpop.permute.xlu0 %3265
        %3267 = vrot.lane.b32.xlu0 %v3069, 8
        %v3268 = vpop.permute.xlu0 %3267
        %3269 = vrot.lane.b32.xlu0 %v3076, 8
        %v3270 = vpop.permute.xlu0 %3269
        %3271 = vrot.lane.b32.xlu0 %v3083, 8
        %v3272 = vpop.permute.xlu0 %3271
        %3273 = vrot.lane.b32.xlu0 %v3090, 8
        %v3274 = vpop.permute.xlu0 %3273
        %3275 = vrot.lane.b32.xlu0 %v3097, 8
        %v3276 = vpop.permute.xlu0 %3275
        %3277 = vrot.lane.b32.xlu0 %v3104, 8
        %v3278 = vpop.permute.xlu0 %3277
        %3279 = vrot.lane.b32.xlu0 %v3111, 8
        %v3280 = vpop.permute.xlu0 %3279
        %3281 = vrot.lane.b32.xlu0 %v3118, 8
        %v3282 = vpop.permute.xlu0 %3281
        %3283 = vrot.lane.b32.xlu0 %v3125, 8
        %v3284 = vpop.permute.xlu0 %3283
        %3285 = vrot.lane.b32.xlu0 %v3132, 8
        %v3286 = vpop.permute.xlu0 %3285
        %3287 = vrot.lane.b32.xlu0 %v3139, 8
        %v3288 = vpop.permute.xlu0 %3287
        %3289 = vrot.lane.b32.xlu0 %v3146, 8
        %v3290 = vpop.permute.xlu0 %3289
        %3291 = vrot.lane.b32.xlu0 %v3153, 8
        %v3292 = vpop.permute.xlu0 %3291
        %3293 = vrot.lane.b32.xlu0 %v3160, 8
        %v3294 = vpop.permute.xlu0 %3293
        %3295 = vrot.lane.b32.xlu0 %v3167, 8
        %v3296 = vpop.permute.xlu0 %3295
        %3297 = vrot.lane.b32.xlu0 %v3174, 8
        %v3298 = vpop.permute.xlu0 %3297
        %3299 = vrot.lane.b32.xlu0 %v3181, 8
        %v3300 = vpop.permute.xlu0 %3299
        %3301 = vrot.lane.b32.xlu0 %v3188, 8
        %v3302 = vpop.permute.xlu0 %3301
        %3303 = vrot.lane.b32.xlu0 %v3195, 8
        %v3304 = vpop.permute.xlu0 %3303
        %3305 = vrot.lane.b32.xlu0 %v3202, 8
        %v3306 = vpop.permute.xlu0 %3305
        %3307 = vrot.lane.b32.xlu0 %v3209, 8
        %v3308 = vpop.permute.xlu0 %3307
        %3309 = vrot.lane.b32.xlu0 %v3216, 8
        %v3310 = vpop.permute.xlu0 %3309
        %3311 = vrot.lane.b32.xlu0 %v3223, 8
        %v3312 = vpop.permute.xlu0 %3311
        %3313 = vrot.lane.b32.xlu0 %v3230, 8
        %v3314 = vpop.permute.xlu0 %3313
        %3315 = vrot.lane.b32.xlu0 %v3237, 8
        %v3316 = vpop.permute.xlu0 %3315
        %3317 = vrot.lane.b32.xlu0 %v3244, 8
        %v3318 = vpop.permute.xlu0 %3317
        %3319 = vrot.lane.b32.xlu0 %v3251, 8
        %v3320 = vpop.permute.xlu0 %3319
        %3321 = vrot.lane.b32.xlu0 %v3258, 8
        %v3322 = vpop.permute.xlu0 %3321
        %v3331 = vunpack.c.l.b16 %v299
        %v3332 = vunpack.c.l.b16 %v301
        %v3333 = vunpack.c.l.b16 %v303
        %v3334 = vunpack.c.l.b16 %v305
        %v3335 = vunpack.c.l.b16 %v307
        %v3336 = vunpack.c.l.b16 %v309
        %v3337 = vunpack.c.l.b16 %v311
        %v3338 = vunpack.c.l.b16 %v313
        %v3339 = vpack.c.b16 %v3331, %v3019
        %v3340 = vpack.c.b16 %v3332, %v3020
        %v3341 = vpack.c.b16 %v3333, %v3021
        %v3342 = vpack.c.b16 %v3334, %v3022
        %v3343 = vpack.c.b16 %v3335, %v3023
        %v3344 = vpack.c.b16 %v3336, %v3024
        %v3345 = vpack.c.b16 %v3337, %v3025
        %v3346 = vpack.c.b16 %v3338, %v3026
        %3347 = vrot.lane.b32.xlu0 %v462, 12
        %v3348 = vpop.permute.xlu0 %3347
        %3349 = vrot.lane.b32.xlu0 %v463, 12
        %v3350 = vpop.permute.xlu0 %3349
        %3351 = vrot.lane.b32.xlu0 %v464, 12
        %v3352 = vpop.permute.xlu0 %3351
        %3353 = vrot.lane.b32.xlu0 %v465, 12
        %v3354 = vpop.permute.xlu0 %3353
        %3355 = vrot.lane.b32.xlu0 %v466, 12
        %v3356 = vpop.permute.xlu0 %3355
        %3357 = vrot.lane.b32.xlu0 %v467, 12
        %v3358 = vpop.permute.xlu0 %3357
        %3359 = vrot.lane.b32.xlu0 %v468, 12
        %v3360 = vpop.permute.xlu0 %3359
        %3361 = vrot.lane.b32.xlu0 %v469, 12
        %v3362 = vpop.permute.xlu0 %3361
        %3363 = vrot.lane.b32.xlu0 %v470, 12
        %v3364 = vpop.permute.xlu0 %3363
        %3365 = vrot.lane.b32.xlu0 %v471, 12
        %v3366 = vpop.permute.xlu0 %3365
        %3367 = vrot.lane.b32.xlu0 %v472, 12
        %v3368 = vpop.permute.xlu0 %3367
        %3369 = vrot.lane.b32.xlu0 %v473, 12
        %v3370 = vpop.permute.xlu0 %3369
        %3371 = vrot.lane.b32.xlu0 %v474, 12
        %v3372 = vpop.permute.xlu0 %3371
        %3373 = vrot.lane.b32.xlu0 %v475, 12
        %v3374 = vpop.permute.xlu0 %3373
        %3375 = vrot.lane.b32.xlu0 %v476, 12
        %v3376 = vpop.permute.xlu0 %3375
        %3377 = vrot.lane.b32.xlu0 %v477, 12
        %v3378 = vpop.permute.xlu0 %3377
        %3379 = vrot.lane.b32.xlu0 %v1493, 12
        %v3380 = vpop.permute.xlu0 %3379
        %3381 = vrot.lane.b32.xlu0 %v1494, 12
        %v3382 = vpop.permute.xlu0 %3381
        %3383 = vrot.lane.b32.xlu0 %v1495, 12
        %v3384 = vpop.permute.xlu0 %3383
        %3385 = vrot.lane.b32.xlu0 %v1496, 12
        %v3386 = vpop.permute.xlu0 %3385
        %3387 = vrot.lane.b32.xlu0 %v1497, 12
        %v3388 = vpop.permute.xlu0 %3387
        %3389 = vrot.lane.b32.xlu0 %v1498, 12
        %v3390 = vpop.permute.xlu0 %3389
        %3391 = vrot.lane.b32.xlu0 %v1499, 12
        %v3392 = vpop.permute.xlu0 %3391
        %3393 = vrot.lane.b32.xlu0 %v1500, 12
        %v3394 = vpop.permute.xlu0 %3393
        %3395 = vrot.lane.b32.xlu0 %v3339, 12
        %v3396 = vpop.permute.xlu0 %3395
        %3397 = vrot.lane.b32.xlu0 %v3340, 12
        %v3398 = vpop.permute.xlu0 %3397
        %3399 = vrot.lane.b32.xlu0 %v3341, 12
        %v3400 = vpop.permute.xlu0 %3399
        %3401 = vrot.lane.b32.xlu0 %v3342, 12
        %v3402 = vpop.permute.xlu0 %3401
        %3403 = vrot.lane.b32.xlu0 %v3343, 12
        %v3404 = vpop.permute.xlu0 %3403
        %3405 = vrot.lane.b32.xlu0 %v3344, 12
        %v3406 = vpop.permute.xlu0 %3405
        %3407 = vrot.lane.b32.xlu0 %v3345, 12
        %v3408 = vpop.permute.xlu0 %3407
        %3409 = vrot.lane.b32.xlu0 %v3346, 12
        %v3410 = vpop.permute.xlu0 %3409
        %v3412 = vshrl.u32 %v3339, 16
        %v3414 = vshll.u32 %v3339, 16
        %v3416 = vrot.slane %v3414, 1
        %v3417 = vor.u32 %v3412, %v3416
        %v3419 = vshrl.u32 %v3340, 16
        %v3421 = vshll.u32 %v3340, 16
        %v3423 = vrot.slane %v3421, 1
        %v3424 = vor.u32 %v3419, %v3423
        %v3426 = vshrl.u32 %v3341, 16
        %v3428 = vshll.u32 %v3341, 16
        %v3430 = vrot.slane %v3428, 1
        %v3431 = vor.u32 %v3426, %v3430
        %v3433 = vshrl.u32 %v3342, 16
        %v3435 = vshll.u32 %v3342, 16
        %v3437 = vrot.slane %v3435, 1
        %v3438 = vor.u32 %v3433, %v3437
        %v3440 = vshrl.u32 %v3343, 16
        %v3442 = vshll.u32 %v3343, 16
        %v3444 = vrot.slane %v3442, 1
        %v3445 = vor.u32 %v3440, %v3444
        %v3447 = vshrl.u32 %v3344, 16
        %v3449 = vshll.u32 %v3344, 16
        %v3451 = vrot.slane %v3449, 1
        %v3452 = vor.u32 %v3447, %v3451
        %v3454 = vshrl.u32 %v3345, 16
        %v3456 = vshll.u32 %v3345, 16
        %v3458 = vrot.slane %v3456, 1
        %v3459 = vor.u32 %v3454, %v3458
        %v3461 = vshrl.u32 %v3346, 16
        %v3463 = vshll.u32 %v3346, 16
        %v3465 = vrot.slane %v3463, 1
        %v3466 = vor.u32 %v3461, %v3465
        %3467 = vrot.lane.b32.xlu0 %v596, 16
        %v3468 = vpop.permute.xlu0 %3467
        %3469 = vrot.lane.b32.xlu0 %v652, 16
        %v3470 = vpop.permute.xlu0 %3469
        %3471 = vrot.lane.b32.xlu0 %v1507, 16
        %v3472 = vpop.permute.xlu0 %3471
        %3473 = vrot.lane.b32.xlu0 %v1514, 16
        %v3474 = vpop.permute.xlu0 %3473
        %3475 = vrot.lane.b32.xlu0 %v1521, 16
        %v3476 = vpop.permute.xlu0 %3475
        %3477 = vrot.lane.b32.xlu0 %v1528, 16
        %v3478 = vpop.permute.xlu0 %3477
        %3479 = vrot.lane.b32.xlu0 %v1535, 16
        %v3480 = vpop.permute.xlu0 %3479
        %3481 = vrot.lane.b32.xlu0 %v1542, 16
        %v3482 = vpop.permute.xlu0 %3481
        %3483 = vrot.lane.b32.xlu0 %v1549, 16
        %v3484 = vpop.permute.xlu0 %3483
        %3485 = vrot.lane.b32.xlu0 %v1556, 16
        %v3486 = vpop.permute.xlu0 %3485
        %3487 = vrot.lane.b32.xlu0 %v3417, 16
        %v3488 = vpop.permute.xlu0 %3487
        %3489 = vrot.lane.b32.xlu0 %v3424, 16
        %v3490 = vpop.permute.xlu0 %3489
        %3491 = vrot.lane.b32.xlu0 %v3431, 16
        %v3492 = vpop.permute.xlu0 %3491
        %3493 = vrot.lane.b32.xlu0 %v3438, 16
        %v3494 = vpop.permute.xlu0 %3493
        %3495 = vrot.lane.b32.xlu0 %v3445, 16
        %v3496 = vpop.permute.xlu0 %3495
        %3497 = vrot.lane.b32.xlu0 %v3452, 16
        %v3498 = vpop.permute.xlu0 %3497
        %3499 = vrot.lane.b32.xlu0 %v3459, 16
        %v3500 = vpop.permute.xlu0 %3499
        %3501 = vrot.lane.b32.xlu0 %v3466, 16
        %v3502 = vpop.permute.xlu0 %3501
        %v3504 = vunpack.c.l.b16 %v314
        %v3505 = vpack.c.b16 %v3504, %v3504
        %v3507 = vshrl.u32 %v893, 16
        %v3509 = vrot.slane %v3507, 7
        %v3510 = vshll.u32 %v893, 16
        %v3512 = vor.u32 %v3509, %v3510
        %v3514 = vshrl.u32 %v901, 16
        %v3516 = vrot.slane %v3514, 7
        %v3517 = vshll.u32 %v901, 16
        %v3519 = vor.u32 %v3516, %v3517
        %v3521 = vshrl.u32 %v1695, 16
        %v3523 = vrot.slane %v3521, 7
        %v3524 = vshll.u32 %v1695, 16
        %v3526 = vor.u32 %v3523, %v3524
        %v3528 = vshrl.u32 %v3505, 16
        %v3530 = vrot.slane %v3528, 7
        %v3531 = vshll.u32 %v3505, 16
        %v3533 = vor.u32 %v3530, %v3531
        %3534 = vrot.lane.b32.xlu0 %v3048, 20
        %v3535 = vpop.permute.xlu0 %3534
        %3536 = vrot.lane.b32.xlu0 %v3055, 20
        %v3537 = vpop.permute.xlu0 %3536
        %3538 = vrot.lane.b32.xlu0 %v3062, 20
        %v3539 = vpop.permute.xlu0 %3538
        %3540 = vrot.lane.b32.xlu0 %v3069, 20
        %v3541 = vpop.permute.xlu0 %3540
        %3542 = vrot.lane.b32.xlu0 %v3076, 20
        %v3543 = vpop.permute.xlu0 %3542
        %3544 = vrot.lane.b32.xlu0 %v3083, 20
        %v3545 = vpop.permute.xlu0 %3544
        %3546 = vrot.lane.b32.xlu0 %v3090, 20
        %v3547 = vpop.permute.xlu0 %3546
        %3548 = vrot.lane.b32.xlu0 %v3512, 20
        %v3549 = vpop.permute.xlu0 %3548
        %3550 = vrot.lane.b32.xlu0 %v3104, 20
        %v3551 = vpop.permute.xlu0 %3550
        %3552 = vrot.lane.b32.xlu0 %v3111, 20
        %v3553 = vpop.permute.xlu0 %3552
        %3554 = vrot.lane.b32.xlu0 %v3118, 20
        %v3555 = vpop.permute.xlu0 %3554
        %3556 = vrot.lane.b32.xlu0 %v3125, 20
        %v3557 = vpop.permute.xlu0 %3556
        %3558 = vrot.lane.b32.xlu0 %v3132, 20
        %v3559 = vpop.permute.xlu0 %3558
        %3560 = vrot.lane.b32.xlu0 %v3139, 20
        %v3561 = vpop.permute.xlu0 %3560
        %3562 = vrot.lane.b32.xlu0 %v3146, 20
        %v3563 = vpop.permute.xlu0 %3562
        %3564 = vrot.lane.b32.xlu0 %v3519, 20
        %v3565 = vpop.permute.xlu0 %3564
        %3566 = vrot.lane.b32.xlu0 %v3160, 20
        %v3567 = vpop.permute.xlu0 %3566
        %3568 = vrot.lane.b32.xlu0 %v3167, 20
        %v3569 = vpop.permute.xlu0 %3568
        %3570 = vrot.lane.b32.xlu0 %v3174, 20
        %v3571 = vpop.permute.xlu0 %3570
        %3572 = vrot.lane.b32.xlu0 %v3181, 20
        %v3573 = vpop.permute.xlu0 %3572
        %3574 = vrot.lane.b32.xlu0 %v3188, 20
        %v3575 = vpop.permute.xlu0 %3574
        %3576 = vrot.lane.b32.xlu0 %v3195, 20
        %v3577 = vpop.permute.xlu0 %3576
        %3578 = vrot.lane.b32.xlu0 %v3202, 20
        %v3579 = vpop.permute.xlu0 %3578
        %3580 = vrot.lane.b32.xlu0 %v3526, 20
        %v3581 = vpop.permute.xlu0 %3580
        %3582 = vrot.lane.b32.xlu0 %v3216, 20
        %v3583 = vpop.permute.xlu0 %3582
        %3584 = vrot.lane.b32.xlu0 %v3223, 20
        %v3585 = vpop.permute.xlu0 %3584
        %3586 = vrot.lane.b32.xlu0 %v3230, 20
        %v3587 = vpop.permute.xlu0 %3586
        %3588 = vrot.lane.b32.xlu0 %v3237, 20
        %v3589 = vpop.permute.xlu0 %3588
        %3590 = vrot.lane.b32.xlu0 %v3244, 20
        %v3591 = vpop.permute.xlu0 %3590
        %3592 = vrot.lane.b32.xlu0 %v3251, 20
        %v3593 = vpop.permute.xlu0 %3592
        %3594 = vrot.lane.b32.xlu0 %v3258, 20
        %v3595 = vpop.permute.xlu0 %3594
        %3596 = vrot.lane.b32.xlu0 %v3533, 20
        %v3597 = vpop.permute.xlu0 %3596
        %v3599 = vunpack.c.l.b16 %v315
        %v3600 = vpack.c.b16 %v3599, %v3504
        %3601 = vrot.lane.b32.xlu0 %v463, 24
        %v3602 = vpop.permute.xlu0 %3601
        %3603 = vrot.lane.b32.xlu0 %v464, 24
        %v3604 = vpop.permute.xlu0 %3603
        %3605 = vrot.lane.b32.xlu0 %v465, 24
        %v3606 = vpop.permute.xlu0 %3605
        %3607 = vrot.lane.b32.xlu0 %v466, 24
        %v3608 = vpop.permute.xlu0 %3607
        %3609 = vrot.lane.b32.xlu0 %v467, 24
        %v3610 = vpop.permute.xlu0 %3609
        %3611 = vrot.lane.b32.xlu0 %v468, 24
        %v3612 = vpop.permute.xlu0 %3611
        %3613 = vrot.lane.b32.xlu0 %v469, 24
        %v3614 = vpop.permute.xlu0 %3613
        %3615 = vrot.lane.b32.xlu0 %v976, 24
        %v3616 = vpop.permute.xlu0 %3615
        %3617 = vrot.lane.b32.xlu0 %v471, 24
        %v3618 = vpop.permute.xlu0 %3617
        %3619 = vrot.lane.b32.xlu0 %v472, 24
        %v3620 = vpop.permute.xlu0 %3619
        %3621 = vrot.lane.b32.xlu0 %v473, 24
        %v3622 = vpop.permute.xlu0 %3621
        %3623 = vrot.lane.b32.xlu0 %v474, 24
        %v3624 = vpop.permute.xlu0 %3623
        %3625 = vrot.lane.b32.xlu0 %v475, 24
        %v3626 = vpop.permute.xlu0 %3625
        %3627 = vrot.lane.b32.xlu0 %v476, 24
        %v3628 = vpop.permute.xlu0 %3627
        %3629 = vrot.lane.b32.xlu0 %v477, 24
        %v3630 = vpop.permute.xlu0 %3629
        %3631 = vrot.lane.b32.xlu0 %v977, 24
        %v3632 = vpop.permute.xlu0 %3631
        %3633 = vrot.lane.b32.xlu0 %v1494, 24
        %v3634 = vpop.permute.xlu0 %3633
        %3635 = vrot.lane.b32.xlu0 %v1495, 24
        %v3636 = vpop.permute.xlu0 %3635
        %3637 = vrot.lane.b32.xlu0 %v1496, 24
        %v3638 = vpop.permute.xlu0 %3637
        %3639 = vrot.lane.b32.xlu0 %v1497, 24
        %v3640 = vpop.permute.xlu0 %3639
        %3641 = vrot.lane.b32.xlu0 %v1498, 24
        %v3642 = vpop.permute.xlu0 %3641
        %3643 = vrot.lane.b32.xlu0 %v1499, 24
        %v3644 = vpop.permute.xlu0 %3643
        %3645 = vrot.lane.b32.xlu0 %v1500, 24
        %v3646 = vpop.permute.xlu0 %3645
        %3647 = vrot.lane.b32.xlu0 %v1762, 24
        %v3648 = vpop.permute.xlu0 %3647
        %3649 = vrot.lane.b32.xlu0 %v3340, 24
        %v3650 = vpop.permute.xlu0 %3649
        %3651 = vrot.lane.b32.xlu0 %v3341, 24
        %v3652 = vpop.permute.xlu0 %3651
        %3653 = vrot.lane.b32.xlu0 %v3342, 24
        %v3654 = vpop.permute.xlu0 %3653
        %3655 = vrot.lane.b32.xlu0 %v3343, 24
        %v3656 = vpop.permute.xlu0 %3655
        %3657 = vrot.lane.b32.xlu0 %v3344, 24
        %v3658 = vpop.permute.xlu0 %3657
        %3659 = vrot.lane.b32.xlu0 %v3345, 24
        %v3660 = vpop.permute.xlu0 %3659
        %3661 = vrot.lane.b32.xlu0 %v3346, 24
        %v3662 = vpop.permute.xlu0 %3661
        %3663 = vrot.lane.b32.xlu0 %v3600, 24
        %v3664 = vpop.permute.xlu0 %3663
        %v3666 = vshrl.u32 %v3600, 16
        %v3668 = vshll.u32 %v3600, 16
        %v3670 = vrot.slane %v3668, 1
        %v3671 = vor.u32 %v3666, %v3670
        %3672 = vrot.lane.b32.xlu0 %v603, 28
        %v3673 = vpop.permute.xlu0 %3672
        %3674 = vrot.lane.b32.xlu0 %v659, 28
        %v3675 = vpop.permute.xlu0 %3674
        %3676 = vrot.lane.b32.xlu0 %v1514, 28
        %v3677 = vpop.permute.xlu0 %3676
        %3678 = vrot.lane.b32.xlu0 %v1521, 28
        %v3679 = vpop.permute.xlu0 %3678
        %3680 = vrot.lane.b32.xlu0 %v1528, 28
        %v3681 = vpop.permute.xlu0 %3680
        %3682 = vrot.lane.b32.xlu0 %v1535, 28
        %v3683 = vpop.permute.xlu0 %3682
        %3684 = vrot.lane.b32.xlu0 %v1542, 28
        %v3685 = vpop.permute.xlu0 %3684
        %3686 = vrot.lane.b32.xlu0 %v1549, 28
        %v3687 = vpop.permute.xlu0 %3686
        %3688 = vrot.lane.b32.xlu0 %v1556, 28
        %v3689 = vpop.permute.xlu0 %3688
        %3690 = vrot.lane.b32.xlu0 %v1769, 28
        %v3691 = vpop.permute.xlu0 %3690
        %3692 = vrot.lane.b32.xlu0 %v3424, 28
        %v3693 = vpop.permute.xlu0 %3692
        %3694 = vrot.lane.b32.xlu0 %v3431, 28
        %v3695 = vpop.permute.xlu0 %3694
        %3696 = vrot.lane.b32.xlu0 %v3438, 28
        %v3697 = vpop.permute.xlu0 %3696
        %3698 = vrot.lane.b32.xlu0 %v3445, 28
        %v3699 = vpop.permute.xlu0 %3698
        %3700 = vrot.lane.b32.xlu0 %v3452, 28
        %v3701 = vpop.permute.xlu0 %3700
        %3702 = vrot.lane.b32.xlu0 %v3459, 28
        %v3703 = vpop.permute.xlu0 %3702
        %3704 = vrot.lane.b32.xlu0 %v3466, 28
        %v3705 = vpop.permute.xlu0 %3704
        %3706 = vrot.lane.b32.xlu0 %v3671, 28
        %v3707 = vpop.permute.xlu0 %3706
        %v3709 = vunpack.c.l.b16 %v316
        %v3710 = vpack.c.b16 %v3709, %v3709
        %v3712 = vshrl.u32 %v1148, 16
        %v3714 = vrot.slane %v3712, 7
        %v3715 = vshll.u32 %v1148, 16
        %v3717 = vor.u32 %v3714, %v3715
        %v3719 = vshrl.u32 %v1149, 16
        %v3721 = vrot.slane %v3719, 7
        %v3722 = vshll.u32 %v1149, 16
        %v3724 = vor.u32 %v3721, %v3722
        %v3726 = vshrl.u32 %v1901, 16
        %v3728 = vrot.slane %v3726, 7
        %v3729 = vshll.u32 %v1901, 16
        %v3731 = vor.u32 %v3728, %v3729
        %v3733 = vshrl.u32 %v3710, 16
        %v3735 = vrot.slane %v3733, 7
        %v3736 = vshll.u32 %v3710, 16
        %v3738 = vor.u32 %v3735, %v3736
        %3739 = vrot.lane.b32.xlu0 %v3055, 32
        %v3740 = vpop.permute.xlu0 %3739
        %3741 = vrot.lane.b32.xlu0 %v3062, 32
        %v3742 = vpop.permute.xlu0 %3741
        %3743 = vrot.lane.b32.xlu0 %v3069, 32
        %v3744 = vpop.permute.xlu0 %3743
        %3745 = vrot.lane.b32.xlu0 %v3076, 32
        %v3746 = vpop.permute.xlu0 %3745
        %3747 = vrot.lane.b32.xlu0 %v3083, 32
        %v3748 = vpop.permute.xlu0 %3747
        %3749 = vrot.lane.b32.xlu0 %v3090, 32
        %v3750 = vpop.permute.xlu0 %3749
        %3751 = vrot.lane.b32.xlu0 %v3512, 32
        %v3752 = vpop.permute.xlu0 %3751
        %3753 = vrot.lane.b32.xlu0 %v3717, 32
        %v3754 = vpop.permute.xlu0 %3753
        %3755 = vrot.lane.b32.xlu0 %v3111, 32
        %v3756 = vpop.permute.xlu0 %3755
        %3757 = vrot.lane.b32.xlu0 %v3118, 32
        %v3758 = vpop.permute.xlu0 %3757
        %3759 = vrot.lane.b32.xlu0 %v3125, 32
        %v3760 = vpop.permute.xlu0 %3759
        %3761 = vrot.lane.b32.xlu0 %v3132, 32
        %v3762 = vpop.permute.xlu0 %3761
        %3763 = vrot.lane.b32.xlu0 %v3139, 32
        %v3764 = vpop.permute.xlu0 %3763
        %3765 = vrot.lane.b32.xlu0 %v3146, 32
        %v3766 = vpop.permute.xlu0 %3765
        %3767 = vrot.lane.b32.xlu0 %v3519, 32
        %v3768 = vpop.permute.xlu0 %3767
        %3769 = vrot.lane.b32.xlu0 %v3724, 32
        %v3770 = vpop.permute.xlu0 %3769
        %3771 = vrot.lane.b32.xlu0 %v3167, 32
        %v3772 = vpop.permute.xlu0 %3771
        %3773 = vrot.lane.b32.xlu0 %v3174, 32
        %v3774 = vpop.permute.xlu0 %3773
        %3775 = vrot.lane.b32.xlu0 %v3181, 32
        %v3776 = vpop.permute.xlu0 %3775
        %3777 = vrot.lane.b32.xlu0 %v3188, 32
        %v3778 = vpop.permute.xlu0 %3777
        %3779 = vrot.lane.b32.xlu0 %v3195, 32
        %v3780 = vpop.permute.xlu0 %3779
        %3781 = vrot.lane.b32.xlu0 %v3202, 32
        %v3782 = vpop.permute.xlu0 %3781
        %3783 = vrot.lane.b32.xlu0 %v3526, 32
        %v3784 = vpop.permute.xlu0 %3783
        %3785 = vrot.lane.b32.xlu0 %v3731, 32
        %v3786 = vpop.permute.xlu0 %3785
        %3787 = vrot.lane.b32.xlu0 %v3223, 32
        %v3788 = vpop.permute.xlu0 %3787
        %3789 = vrot.lane.b32.xlu0 %v3230, 32
        %v3790 = vpop.permute.xlu0 %3789
        %3791 = vrot.lane.b32.xlu0 %v3237, 32
        %v3792 = vpop.permute.xlu0 %3791
        %3793 = vrot.lane.b32.xlu0 %v3244, 32
        %v3794 = vpop.permute.xlu0 %3793
        %3795 = vrot.lane.b32.xlu0 %v3251, 32
        %v3796 = vpop.permute.xlu0 %3795
        %3797 = vrot.lane.b32.xlu0 %v3258, 32
        %v3798 = vpop.permute.xlu0 %3797
        %3799 = vrot.lane.b32.xlu0 %v3533, 32
        %v3800 = vpop.permute.xlu0 %3799
        %3801 = vrot.lane.b32.xlu0 %v3738, 32
        %v3802 = vpop.permute.xlu0 %3801
        %v3804 = vunpack.c.l.b16 %v317
        %v3805 = vpack.c.b16 %v3804, %v3709
        %3806 = vrot.lane.b32.xlu0 %v464, 36
        %v3807 = vpop.permute.xlu0 %3806
        %3808 = vrot.lane.b32.xlu0 %v465, 36
        %v3809 = vpop.permute.xlu0 %3808
        %3810 = vrot.lane.b32.xlu0 %v466, 36
        %v3811 = vpop.permute.xlu0 %3810
        %3812 = vrot.lane.b32.xlu0 %v467, 36
        %v3813 = vpop.permute.xlu0 %3812
        %3814 = vrot.lane.b32.xlu0 %v468, 36
        %v3815 = vpop.permute.xlu0 %3814
        %3816 = vrot.lane.b32.xlu0 %v469, 36
        %v3817 = vpop.permute.xlu0 %3816
        %3818 = vrot.lane.b32.xlu0 %v976, 36
        %v3819 = vpop.permute.xlu0 %3818
        %3820 = vrot.lane.b32.xlu0 %v1224, 36
        %v3821 = vpop.permute.xlu0 %3820
        %3822 = vrot.lane.b32.xlu0 %v472, 36
        %v3823 = vpop.permute.xlu0 %3822
        %3824 = vrot.lane.b32.xlu0 %v473, 36
        %v3825 = vpop.permute.xlu0 %3824
        %3826 = vrot.lane.b32.xlu0 %v474, 36
        %v3827 = vpop.permute.xlu0 %3826
        %3828 = vrot.lane.b32.xlu0 %v475, 36
        %v3829 = vpop.permute.xlu0 %3828
        %3830 = vrot.lane.b32.xlu0 %v476, 36
        %v3831 = vpop.permute.xlu0 %3830
        %3832 = vrot.lane.b32.xlu0 %v477, 36
        %v3833 = vpop.permute.xlu0 %3832
        %3834 = vrot.lane.b32.xlu0 %v977, 36
        %v3835 = vpop.permute.xlu0 %3834
        %3836 = vrot.lane.b32.xlu0 %v1225, 36
        %v3837 = vpop.permute.xlu0 %3836
        %3838 = vrot.lane.b32.xlu0 %v1495, 36
        %v3839 = vpop.permute.xlu0 %3838
        %3840 = vrot.lane.b32.xlu0 %v1496, 36
        %v3841 = vpop.permute.xlu0 %3840
        %3842 = vrot.lane.b32.xlu0 %v1497, 36
        %v3843 = vpop.permute.xlu0 %3842
        %3844 = vrot.lane.b32.xlu0 %v1498, 36
        %v3845 = vpop.permute.xlu0 %3844
        %3846 = vrot.lane.b32.xlu0 %v1499, 36
        %v3847 = vpop.permute.xlu0 %3846
        %3848 = vrot.lane.b32.xlu0 %v1500, 36
        %v3849 = vpop.permute.xlu0 %3848
        %3850 = vrot.lane.b32.xlu0 %v1762, 36
        %v3851 = vpop.permute.xlu0 %3850
        %3852 = vrot.lane.b32.xlu0 %v2975, 36
        %v3853 = vpop.permute.xlu0 %3852
        %3854 = vrot.lane.b32.xlu0 %v3341, 36
        %v3855 = vpop.permute.xlu0 %3854
        %3856 = vrot.lane.b32.xlu0 %v3342, 36
        %v3857 = vpop.permute.xlu0 %3856
        %3858 = vrot.lane.b32.xlu0 %v3343, 36
        %v3859 = vpop.permute.xlu0 %3858
        %3860 = vrot.lane.b32.xlu0 %v3344, 36
        %v3861 = vpop.permute.xlu0 %3860
        %3862 = vrot.lane.b32.xlu0 %v3345, 36
        %v3863 = vpop.permute.xlu0 %3862
        %3864 = vrot.lane.b32.xlu0 %v3346, 36
        %v3865 = vpop.permute.xlu0 %3864
        %3866 = vrot.lane.b32.xlu0 %v3600, 36
        %v3867 = vpop.permute.xlu0 %3866
        %3868 = vrot.lane.b32.xlu0 %v3805, 36
        %v3869 = vpop.permute.xlu0 %3868
        %v3871 = vshrl.u32 %v3805, 16
        %v3873 = vshll.u32 %v3805, 16
        %v3875 = vrot.slane %v3873, 1
        %v3876 = vor.u32 %v3871, %v3875
        %3877 = vrot.lane.b32.xlu0 %v998, 40
        %v3878 = vpop.permute.xlu0 %3877
        %3879 = vrot.lane.b32.xlu0 %v1246, 40
        %v3880 = vpop.permute.xlu0 %3879
        %3881 = vrot.lane.b32.xlu0 %v1005, 40
        %v3882 = vpop.permute.xlu0 %3881
        %3883 = vrot.lane.b32.xlu0 %v1253, 40
        %v3884 = vpop.permute.xlu0 %3883
        %3885 = vrot.lane.b32.xlu0 %v1769, 40
        %v3886 = vpop.permute.xlu0 %3885
        %3887 = vrot.lane.b32.xlu0 %v2982, 40
        %v3888 = vpop.permute.xlu0 %3887
        %3889 = vrot.lane.b32.xlu0 %v3431, 40
        %v3890 = vpop.permute.xlu0 %3889
        %3891 = vrot.lane.b32.xlu0 %v3438, 40
        %v3892 = vpop.permute.xlu0 %3891
        %3893 = vrot.lane.b32.xlu0 %v3445, 40
        %v3894 = vpop.permute.xlu0 %3893
        %3895 = vrot.lane.b32.xlu0 %v3452, 40
        %v3896 = vpop.permute.xlu0 %3895
        %3897 = vrot.lane.b32.xlu0 %v3459, 40
        %v3898 = vpop.permute.xlu0 %3897
        %3899 = vrot.lane.b32.xlu0 %v3466, 40
        %v3900 = vpop.permute.xlu0 %3899
        %3901 = vrot.lane.b32.xlu0 %v3671, 40
        %v3902 = vpop.permute.xlu0 %3901
        %3903 = vrot.lane.b32.xlu0 %v3876, 40
        %v3904 = vpop.permute.xlu0 %3903
        %v3905 = vsel %vm1966, %v456, %v723
        %v3906 = vsel %vm1966, %v457, %v725
        %v3907 = vsel %vm1966, %v458, %v727
        %v3908 = vsel %vm1966, %v459, %v729
        %v3909 = vsel %vm1966, %v460, %v731
        %v3910 = vsel %vm1966, %v461, %v733
        %v3912 = vsel %vm1966, %v975, %v2984
        %v3914 = vsel %vm1966, %v1223, %v2986
        %v3915 = vsel %vm1966, %v464, %v739
        %v3916 = vsel %vm1966, %v465, %v741
        %v3917 = vsel %vm1966, %v466, %v743
        %v3918 = vsel %vm1966, %v467, %v745
        %v3919 = vsel %vm1966, %v468, %v747
        %v3920 = vsel %vm1966, %v469, %v749
        %v3922 = vsel %vm1966, %v976, %v2988
        %v3924 = vsel %vm1966, %v1224, %v2990
        %v3925 = vsel %vm1966, %v472, %v755
        %v3926 = vsel %vm1966, %v473, %v757
        %v3927 = vsel %vm1966, %v474, %v759
        %v3928 = vsel %vm1966, %v475, %v761
        %v3929 = vsel %vm1966, %v476, %v763
        %v3930 = vsel %vm1966, %v477, %v765
        %v3932 = vsel %vm1966, %v977, %v2992
        %v3934 = vsel %vm1966, %v1225, %v2994
        %v3936 = vsel %vm1966, %v1495, %v2996
        %v3938 = vsel %vm1966, %v1496, %v2998
        %v3940 = vsel %vm1966, %v1497, %v3000
        %v3942 = vsel %vm1966, %v1498, %v3002
        %v3944 = vsel %vm1966, %v1499, %v3004
        %v3946 = vsel %vm1966, %v1500, %v3006
        %v3948 = vsel %vm1966, %v1762, %v3008
        %v3950 = vsel %vm1966, %v2975, %v3010
        %v3952 = vsel %vm2063, %v3905, %v3260
        %v3954 = vsel %vm2063, %v3906, %v3262
        %v3956 = vsel %vm2063, %v3907, %v3264
        %v3958 = vsel %vm2063, %v3908, %v3266
        %v3960 = vsel %vm2063, %v3909, %v3268
        %v3962 = vsel %vm2063, %v3910, %v3270
        %v3964 = vsel %vm2063, %v3912, %v3272
        %v3966 = vsel %vm2063, %v3914, %v3274
        %v3968 = vsel %vm2063, %v3915, %v3276
        %v3970 = vsel %vm2063, %v3916, %v3278
        %v3972 = vsel %vm2063, %v3917, %v3280
        %v3974 = vsel %vm2063, %v3918, %v3282
        %v3976 = vsel %vm2063, %v3919, %v3284
        %v3978 = vsel %vm2063, %v3920, %v3286
        %v3980 = vsel %vm2063, %v3922, %v3288
        %v3982 = vsel %vm2063, %v3924, %v3290
        %v3984 = vsel %vm2063, %v3925, %v3292
        %v3986 = vsel %vm2063, %v3926, %v3294
        %v3988 = vsel %vm2063, %v3927, %v3296
        %v3990 = vsel %vm2063, %v3928, %v3298
        %v3992 = vsel %vm2063, %v3929, %v3300
        %v3994 = vsel %vm2063, %v3930, %v3302
        %v3996 = vsel %vm2063, %v3932, %v3304
        %v3998 = vsel %vm2063, %v3934, %v3306
        %v4000 = vsel %vm2063, %v3936, %v3308
        %v4002 = vsel %vm2063, %v3938, %v3310
        %v4004 = vsel %vm2063, %v3940, %v3312
        %v4006 = vsel %vm2063, %v3942, %v3314
        %v4008 = vsel %vm2063, %v3944, %v3316
        %v4010 = vsel %vm2063, %v3946, %v3318
        %v4012 = vsel %vm2063, %v3948, %v3320
        %v4014 = vsel %vm2063, %v3950, %v3322
        %v4016 = vsel %vm2128, %v3952, %v3348
        %v4018 = vsel %vm2128, %v3954, %v3350
        %v4020 = vsel %vm2128, %v3956, %v3352
        %v4022 = vsel %vm2128, %v3958, %v3354
        %v4024 = vsel %vm2128, %v3960, %v3356
        %v4026 = vsel %vm2128, %v3962, %v3358
        %v4028 = vsel %vm2128, %v3964, %v3360
        %v4030 = vsel %vm2128, %v3966, %v3362
        %v4032 = vsel %vm2128, %v3968, %v3364
        %v4034 = vsel %vm2128, %v3970, %v3366
        %v4036 = vsel %vm2128, %v3972, %v3368
        %v4038 = vsel %vm2128, %v3974, %v3370
        %v4040 = vsel %vm2128, %v3976, %v3372
        %v4042 = vsel %vm2128, %v3978, %v3374
        %v4044 = vsel %vm2128, %v3980, %v3376
        %v4046 = vsel %vm2128, %v3982, %v3378
        %v4048 = vsel %vm2128, %v3984, %v3380
        %v4050 = vsel %vm2128, %v3986, %v3382
        %v4052 = vsel %vm2128, %v3988, %v3384
        %v4054 = vsel %vm2128, %v3990, %v3386
        %v4056 = vsel %vm2128, %v3992, %v3388
        %v4058 = vsel %vm2128, %v3994, %v3390
        %v4060 = vsel %vm2128, %v3996, %v3392
        %v4062 = vsel %vm2128, %v3998, %v3394
        %v4064 = vsel %vm2128, %v4000, %v3396
        %v4066 = vsel %vm2128, %v4002, %v3398
        %v4068 = vsel %vm2128, %v4004, %v3400
        %v4070 = vsel %vm2128, %v4006, %v3402
        %v4072 = vsel %vm2128, %v4008, %v3404
        %v4074 = vsel %vm2128, %v4010, %v3406
        %v4076 = vsel %vm2128, %v4012, %v3408
        %v4078 = vsel %vm2128, %v4014, %v3410
        %v4080 = vsel %vm2193, %v4016, %v3468
        %v4081 = vsel %vm2193, %v4018, %v1039
        %v4082 = vsel %vm2193, %v4020, %v1041
        %v4083 = vsel %vm2193, %v4022, %v1043
        %v4084 = vsel %vm2193, %v4024, %v1045
        %v4085 = vsel %vm2193, %v4026, %v1047
        %v4086 = vsel %vm2193, %v4028, %v1049
        %v4087 = vsel %vm2193, %v4030, %v1051
        %v4089 = vsel %vm2193, %v4032, %v3470
        %v4090 = vsel %vm2193, %v4034, %v1055
        %v4091 = vsel %vm2193, %v4036, %v1057
        %v4092 = vsel %vm2193, %v4038, %v1059
        %v4093 = vsel %vm2193, %v4040, %v1061
        %v4094 = vsel %vm2193, %v4042, %v1063
        %v4095 = vsel %vm2193, %v4044, %v1065
        %v4096 = vsel %vm2193, %v4046, %v1067
        %v4098 = vsel %vm2193, %v4048, %v3472
        %v4100 = vsel %vm2193, %v4050, %v3474
        %v4102 = vsel %vm2193, %v4052, %v3476
        %v4104 = vsel %vm2193, %v4054, %v3478
        %v4106 = vsel %vm2193, %v4056, %v3480
        %v4108 = vsel %vm2193, %v4058, %v3482
        %v4110 = vsel %vm2193, %v4060, %v3484
        %v4112 = vsel %vm2193, %v4062, %v3486
        %v4114 = vsel %vm2193, %v4064, %v3488
        %v4116 = vsel %vm2193, %v4066, %v3490
        %v4118 = vsel %vm2193, %v4068, %v3492
        %v4120 = vsel %vm2193, %v4070, %v3494
        %v4122 = vsel %vm2193, %v4072, %v3496
        %v4124 = vsel %vm2193, %v4074, %v3498
        %v4126 = vsel %vm2193, %v4076, %v3500
        %v4128 = vsel %vm2193, %v4078, %v3502
        %v4130 = vsel %vm2258, %v4080, %v3535
        %v4132 = vsel %vm2258, %v4081, %v3537
        %v4134 = vsel %vm2258, %v4082, %v3539
        %v4136 = vsel %vm2258, %v4083, %v3541
        %v4138 = vsel %vm2258, %v4084, %v3543
        %v4140 = vsel %vm2258, %v4085, %v3545
        %v4142 = vsel %vm2258, %v4086, %v3547
        %v4144 = vsel %vm2258, %v4087, %v3549
        %v4146 = vsel %vm2258, %v4089, %v3551
        %v4148 = vsel %vm2258, %v4090, %v3553
        %v4150 = vsel %vm2258, %v4091, %v3555
        %v4152 = vsel %vm2258, %v4092, %v3557
        %v4154 = vsel %vm2258, %v4093, %v3559
        %v4156 = vsel %vm2258, %v4094, %v3561
        %v4158 = vsel %vm2258, %v4095, %v3563
        %v4160 = vsel %vm2258, %v4096, %v3565
        %v4162 = vsel %vm2258, %v4098, %v3567
        %v4164 = vsel %vm2258, %v4100, %v3569
        %v4166 = vsel %vm2258, %v4102, %v3571
        %v4168 = vsel %vm2258, %v4104, %v3573
        %v4170 = vsel %vm2258, %v4106, %v3575
        %v4172 = vsel %vm2258, %v4108, %v3577
        %v4174 = vsel %vm2258, %v4110, %v3579
        %v4176 = vsel %vm2258, %v4112, %v3581
        %v4178 = vsel %vm2258, %v4114, %v3583
        %v4180 = vsel %vm2258, %v4116, %v3585
        %v4182 = vsel %vm2258, %v4118, %v3587
        %v4184 = vsel %vm2258, %v4120, %v3589
        %v4186 = vsel %vm2258, %v4122, %v3591
        %v4188 = vsel %vm2258, %v4124, %v3593
        %v4190 = vsel %vm2258, %v4126, %v3595
        %v4192 = vsel %vm2258, %v4128, %v3597
        %v4194 = vsel %vm2323, %v4130, %v3602
        %v4196 = vsel %vm2323, %v4132, %v3604
        %v4198 = vsel %vm2323, %v4134, %v3606
        %v4200 = vsel %vm2323, %v4136, %v3608
        %v4202 = vsel %vm2323, %v4138, %v3610
        %v4204 = vsel %vm2323, %v4140, %v3612
        %v4206 = vsel %vm2323, %v4142, %v3614
        %v4208 = vsel %vm2323, %v4144, %v3616
        %v4210 = vsel %vm2323, %v4146, %v3618
        %v4212 = vsel %vm2323, %v4148, %v3620
        %v4214 = vsel %vm2323, %v4150, %v3622
        %v4216 = vsel %vm2323, %v4152, %v3624
        %v4218 = vsel %vm2323, %v4154, %v3626
        %v4220 = vsel %vm2323, %v4156, %v3628
        %v4222 = vsel %vm2323, %v4158, %v3630
        %v4224 = vsel %vm2323, %v4160, %v3632
        %v4226 = vsel %vm2323, %v4162, %v3634
        %v4228 = vsel %vm2323, %v4164, %v3636
        %v4230 = vsel %vm2323, %v4166, %v3638
        %v4232 = vsel %vm2323, %v4168, %v3640
        %v4234 = vsel %vm2323, %v4170, %v3642
        %v4236 = vsel %vm2323, %v4172, %v3644
        %v4238 = vsel %vm2323, %v4174, %v3646
        %v4240 = vsel %vm2323, %v4176, %v3648
        %v4242 = vsel %vm2323, %v4178, %v3650
        %v4244 = vsel %vm2323, %v4180, %v3652
        %v4246 = vsel %vm2323, %v4182, %v3654
        %v4248 = vsel %vm2323, %v4184, %v3656
        %v4250 = vsel %vm2323, %v4186, %v3658
        %v4252 = vsel %vm2323, %v4188, %v3660
        %v4254 = vsel %vm2323, %v4190, %v3662
        %v4256 = vsel %vm2323, %v4192, %v3664
        %v4258 = vsel %vm2388, %v4194, %v3673
        %v4259 = vsel %vm2388, %v4196, %v1287
        %v4260 = vsel %vm2388, %v4198, %v1289
        %v4261 = vsel %vm2388, %v4200, %v1291
        %v4262 = vsel %vm2388, %v4202, %v1293
        %v4263 = vsel %vm2388, %v4204, %v1295
        %v4264 = vsel %vm2388, %v4206, %v1297
        %v4265 = vsel %vm2388, %v4208, %v1299
        %v4267 = vsel %vm2388, %v4210, %v3675
        %v4268 = vsel %vm2388, %v4212, %v1303
        %v4269 = vsel %vm2388, %v4214, %v1305
        %v4270 = vsel %vm2388, %v4216, %v1307
        %v4271 = vsel %vm2388, %v4218, %v1309
        %v4272 = vsel %vm2388, %v4220, %v1311
        %v4273 = vsel %vm2388, %v4222, %v1313
        %v4274 = vsel %vm2388, %v4224, %v1315
        %v4276 = vsel %vm2388, %v4226, %v3677
        %v4278 = vsel %vm2388, %v4228, %v3679
        %v4280 = vsel %vm2388, %v4230, %v3681
        %v4282 = vsel %vm2388, %v4232, %v3683
        %v4284 = vsel %vm2388, %v4234, %v3685
        %v4286 = vsel %vm2388, %v4236, %v3687
        %v4288 = vsel %vm2388, %v4238, %v3689
        %v4290 = vsel %vm2388, %v4240, %v3691
        %v4292 = vsel %vm2388, %v4242, %v3693
        %v4294 = vsel %vm2388, %v4244, %v3695
        %v4296 = vsel %vm2388, %v4246, %v3697
        %v4298 = vsel %vm2388, %v4248, %v3699
        %v4300 = vsel %vm2388, %v4250, %v3701
        %v4302 = vsel %vm2388, %v4252, %v3703
        %v4304 = vsel %vm2388, %v4254, %v3705
        %v4306 = vsel %vm2388, %v4256, %v3707
        %v4308 = vsel %vm2453, %v4258, %v3740
        %v4310 = vsel %vm2453, %v4259, %v3742
        %v4312 = vsel %vm2453, %v4260, %v3744
        %v4314 = vsel %vm2453, %v4261, %v3746
        %v4316 = vsel %vm2453, %v4262, %v3748
        %v4318 = vsel %vm2453, %v4263, %v3750
        %v4320 = vsel %vm2453, %v4264, %v3752
        %v4322 = vsel %vm2453, %v4265, %v3754
        %v4324 = vsel %vm2453, %v4267, %v3756
        %v4326 = vsel %vm2453, %v4268, %v3758
        %v4328 = vsel %vm2453, %v4269, %v3760
        %v4330 = vsel %vm2453, %v4270, %v3762
        %v4332 = vsel %vm2453, %v4271, %v3764
        %v4334 = vsel %vm2453, %v4272, %v3766
        %v4336 = vsel %vm2453, %v4273, %v3768
        %v4338 = vsel %vm2453, %v4274, %v3770
        %v4340 = vsel %vm2453, %v4276, %v3772
        %v4342 = vsel %vm2453, %v4278, %v3774
        %v4344 = vsel %vm2453, %v4280, %v3776
        %v4346 = vsel %vm2453, %v4282, %v3778
        %v4348 = vsel %vm2453, %v4284, %v3780
        %v4350 = vsel %vm2453, %v4286, %v3782
        %v4352 = vsel %vm2453, %v4288, %v3784
        %v4354 = vsel %vm2453, %v4290, %v3786
        %v4356 = vsel %vm2453, %v4292, %v3788
        %v4358 = vsel %vm2453, %v4294, %v3790
        %v4360 = vsel %vm2453, %v4296, %v3792
        %v4362 = vsel %vm2453, %v4298, %v3794
        %v4364 = vsel %vm2453, %v4300, %v3796
        %v4366 = vsel %vm2453, %v4302, %v3798
        %v4368 = vsel %vm2453, %v4304, %v3800
        %v4370 = vsel %vm2453, %v4306, %v3802
        %v4372 = vsel %vm2518, %v4308, %v3807
        %v4374 = vsel %vm2518, %v4310, %v3809
        %v4376 = vsel %vm2518, %v4312, %v3811
        %v4378 = vsel %vm2518, %v4314, %v3813
        %v4380 = vsel %vm2518, %v4316, %v3815
        %v4382 = vsel %vm2518, %v4318, %v3817
        %v4384 = vsel %vm2518, %v4320, %v3819
        %v4386 = vsel %vm2518, %v4322, %v3821
        %v4388 = vsel %vm2518, %v4324, %v3823
        %v4390 = vsel %vm2518, %v4326, %v3825
        %v4392 = vsel %vm2518, %v4328, %v3827
        %v4394 = vsel %vm2518, %v4330, %v3829
        %v4396 = vsel %vm2518, %v4332, %v3831
        %v4398 = vsel %vm2518, %v4334, %v3833
        %v4400 = vsel %vm2518, %v4336, %v3835
        %v4402 = vsel %vm2518, %v4338, %v3837
        %v4404 = vsel %vm2518, %v4340, %v3839
        %v4406 = vsel %vm2518, %v4342, %v3841
        %v4408 = vsel %vm2518, %v4344, %v3843
        %v4410 = vsel %vm2518, %v4346, %v3845
        %v4412 = vsel %vm2518, %v4348, %v3847
        %v4414 = vsel %vm2518, %v4350, %v3849
        %v4416 = vsel %vm2518, %v4352, %v3851
        %v4418 = vsel %vm2518, %v4354, %v3853
        %v4420 = vsel %vm2518, %v4356, %v3855
        %v4422 = vsel %vm2518, %v4358, %v3857
        %v4424 = vsel %vm2518, %v4360, %v3859
        %v4426 = vsel %vm2518, %v4362, %v3861
        %v4428 = vsel %vm2518, %v4364, %v3863
        %v4430 = vsel %vm2518, %v4366, %v3865
        %v4432 = vsel %vm2518, %v4368, %v3867
        %v4434 = vsel %vm2518, %v4370, %v3869
        %v4435 = vsel %vm2583, %v4372, %v1578
        %v4436 = vsel %vm2583, %v4374, %v1580
        %v4437 = vsel %vm2583, %v4376, %v1582
        %v4438 = vsel %vm2583, %v4378, %v1584
        %v4439 = vsel %vm2583, %v4380, %v1586
        %v4440 = vsel %vm2583, %v4382, %v1588
        %v4442 = vsel %vm2583, %v4384, %v3878
        %v4444 = vsel %vm2583, %v4386, %v3880
        %v4445 = vsel %vm2583, %v4388, %v1594
        %v4446 = vsel %vm2583, %v4390, %v1596
        %v4447 = vsel %vm2583, %v4392, %v1598
        %v4448 = vsel %vm2583, %v4394, %v1600
        %v4449 = vsel %vm2583, %v4396, %v1602
        %v4450 = vsel %vm2583, %v4398, %v1604
        %v4452 = vsel %vm2583, %v4400, %v3882
        %v4454 = vsel %vm2583, %v4402, %v3884
        %v4455 = vsel %vm2583, %v4404, %v1610
        %v4456 = vsel %vm2583, %v4406, %v1612
        %v4457 = vsel %vm2583, %v4408, %v1614
        %v4458 = vsel %vm2583, %v4410, %v1616
        %v4459 = vsel %vm2583, %v4412, %v1618
        %v4460 = vsel %vm2583, %v4414, %v1620
        %v4462 = vsel %vm2583, %v4416, %v3886
        %v4464 = vsel %vm2583, %v4418, %v3888
        %v4466 = vsel %vm2583, %v4420, %v3890
        %v4468 = vsel %vm2583, %v4422, %v3892
        %v4470 = vsel %vm2583, %v4424, %v3894
        %v4472 = vsel %vm2583, %v4426, %v3896
        %v4474 = vsel %vm2583, %v4428, %v3898
        %v4476 = vsel %vm2583, %v4430, %v3900
        %v4478 = vsel %vm2583, %v4432, %v3902
        %v4480 = vsel %vm2583, %v4434, %v3904
        %v4481 = vshrl.u32 %v4435, 16
        %v4483 = vshll.u32 %v4435, 16
        %v4485 = vrot.slane %v4483, 1
        %v4486 = vor.u32 %v4481, %v4485
        %v4487 = vshrl.u32 %v4436, 16
        %v4489 = vshll.u32 %v4436, 16
        %v4491 = vrot.slane %v4489, 1
        %v4492 = vor.u32 %v4487, %v4491
        %v4493 = vshrl.u32 %v4437, 16
        %v4495 = vshll.u32 %v4437, 16
        %v4497 = vrot.slane %v4495, 1
        %v4498 = vor.u32 %v4493, %v4497
        %v4499 = vshrl.u32 %v4438, 16
        %v4501 = vshll.u32 %v4438, 16
        %v4503 = vrot.slane %v4501, 1
        %v4504 = vor.u32 %v4499, %v4503
        %v4505 = vshrl.u32 %v4439, 16
        %v4507 = vshll.u32 %v4439, 16
        %v4509 = vrot.slane %v4507, 1
        %v4510 = vor.u32 %v4505, %v4509
        %v4511 = vshrl.u32 %v4440, 16
        %v4513 = vshll.u32 %v4440, 16
        %v4515 = vrot.slane %v4513, 1
        %v4516 = vor.u32 %v4511, %v4515
        %v4517 = vshrl.u32 %v4442, 16
        %v4519 = vshll.u32 %v4442, 16
        %v4521 = vrot.slane %v4519, 1
        %v4522 = vor.u32 %v4517, %v4521
        %v4523 = vshrl.u32 %v4444, 16
        %v4525 = vshll.u32 %v4444, 16
        %v4527 = vrot.slane %v4525, 1
        %v4528 = vor.u32 %v4523, %v4527
        %v4529 = vshrl.u32 %v4445, 16
        %v4531 = vshll.u32 %v4445, 16
        %v4533 = vrot.slane %v4531, 1
        %v4534 = vor.u32 %v4529, %v4533
        %v4535 = vshrl.u32 %v4446, 16
        %v4537 = vshll.u32 %v4446, 16
        %v4539 = vrot.slane %v4537, 1
        %v4540 = vor.u32 %v4535, %v4539
        %v4541 = vshrl.u32 %v4447, 16
        %v4543 = vshll.u32 %v4447, 16
        %v4545 = vrot.slane %v4543, 1
        %v4546 = vor.u32 %v4541, %v4545
        %v4547 = vshrl.u32 %v4448, 16
        %v4549 = vshll.u32 %v4448, 16
        %v4551 = vrot.slane %v4549, 1
        %v4552 = vor.u32 %v4547, %v4551
        %v4553 = vshrl.u32 %v4449, 16
        %v4555 = vshll.u32 %v4449, 16
        %v4557 = vrot.slane %v4555, 1
        %v4558 = vor.u32 %v4553, %v4557
        %v4559 = vshrl.u32 %v4450, 16
        %v4561 = vshll.u32 %v4450, 16
        %v4563 = vrot.slane %v4561, 1
        %v4564 = vor.u32 %v4559, %v4563
        %v4565 = vshrl.u32 %v4452, 16
        %v4567 = vshll.u32 %v4452, 16
        %v4569 = vrot.slane %v4567, 1
        %v4570 = vor.u32 %v4565, %v4569
        %v4571 = vshrl.u32 %v4454, 16
        %v4573 = vshll.u32 %v4454, 16
        %v4575 = vrot.slane %v4573, 1
        %v4576 = vor.u32 %v4571, %v4575
        %v4577 = vshrl.u32 %v4455, 16
        %v4579 = vshll.u32 %v4455, 16
        %v4581 = vrot.slane %v4579, 1
        %v4582 = vor.u32 %v4577, %v4581
        %v4583 = vshrl.u32 %v4456, 16
        %v4585 = vshll.u32 %v4456, 16
        %v4587 = vrot.slane %v4585, 1
        %v4588 = vor.u32 %v4583, %v4587
        %v4589 = vshrl.u32 %v4457, 16
        %v4591 = vshll.u32 %v4457, 16
        %v4593 = vrot.slane %v4591, 1
        %v4594 = vor.u32 %v4589, %v4593
        %v4595 = vshrl.u32 %v4458, 16
        %v4597 = vshll.u32 %v4458, 16
        %v4599 = vrot.slane %v4597, 1
        %v4600 = vor.u32 %v4595, %v4599
        %v4601 = vshrl.u32 %v4459, 16
        %v4603 = vshll.u32 %v4459, 16
        %v4605 = vrot.slane %v4603, 1
        %v4606 = vor.u32 %v4601, %v4605
        %v4607 = vshrl.u32 %v4460, 16
        %v4609 = vshll.u32 %v4460, 16
        %v4611 = vrot.slane %v4609, 1
        %v4612 = vor.u32 %v4607, %v4611
        %v4613 = vshrl.u32 %v4462, 16
        %v4615 = vshll.u32 %v4462, 16
        %v4617 = vrot.slane %v4615, 1
        %v4618 = vor.u32 %v4613, %v4617
        %v4619 = vshrl.u32 %v4464, 16
        %v4621 = vshll.u32 %v4464, 16
        %v4623 = vrot.slane %v4621, 1
        %v4624 = vor.u32 %v4619, %v4623
        %v4625 = vshrl.u32 %v4466, 16
        %v4627 = vshll.u32 %v4466, 16
        %v4629 = vrot.slane %v4627, 1
        %v4630 = vor.u32 %v4625, %v4629
        %v4631 = vshrl.u32 %v4468, 16
        %v4633 = vshll.u32 %v4468, 16
        %v4635 = vrot.slane %v4633, 1
        %v4636 = vor.u32 %v4631, %v4635
        %v4637 = vshrl.u32 %v4470, 16
        %v4639 = vshll.u32 %v4470, 16
        %v4641 = vrot.slane %v4639, 1
        %v4642 = vor.u32 %v4637, %v4641
        %v4643 = vshrl.u32 %v4472, 16
        %v4645 = vshll.u32 %v4472, 16
        %v4647 = vrot.slane %v4645, 1
        %v4648 = vor.u32 %v4643, %v4647
        %v4649 = vshrl.u32 %v4474, 16
        %v4651 = vshll.u32 %v4474, 16
        %v4653 = vrot.slane %v4651, 1
        %v4654 = vor.u32 %v4649, %v4653
        %v4655 = vshrl.u32 %v4476, 16
        %v4657 = vshll.u32 %v4476, 16
        %v4659 = vrot.slane %v4657, 1
        %v4660 = vor.u32 %v4655, %v4659
        %v4661 = vshrl.u32 %v4478, 16
        %v4663 = vshll.u32 %v4478, 16
        %v4665 = vrot.slane %v4663, 1
        %v4666 = vor.u32 %v4661, %v4665
        %v4667 = vshrl.u32 %v4480, 16
        %v4669 = vshll.u32 %v4480, 16
        %v4671 = vrot.slane %v4669, 1
        %v4672 = vor.u32 %v4667, %v4671
        %4673 = vrot.lane.b32.xlu0 %v4486, 64
        %v4674 = vpop.permute.xlu0 %4673
        %4675 = vrot.lane.b32.xlu0 %v4492, 64
        %v4676 = vpop.permute.xlu0 %4675
        %4677 = vrot.lane.b32.xlu0 %v4498, 64
        %v4678 = vpop.permute.xlu0 %4677
        %4679 = vrot.lane.b32.xlu0 %v4504, 64
        %v4680 = vpop.permute.xlu0 %4679
        %4681 = vrot.lane.b32.xlu0 %v4510, 64
        %v4682 = vpop.permute.xlu0 %4681
        %4683 = vrot.lane.b32.xlu0 %v4516, 64
        %v4684 = vpop.permute.xlu0 %4683
        %4685 = vrot.lane.b32.xlu0 %v4522, 64
        %v4686 = vpop.permute.xlu0 %4685
        %4687 = vrot.lane.b32.xlu0 %v4528, 64
        %v4688 = vpop.permute.xlu0 %4687
        %4689 = vrot.lane.b32.xlu0 %v4534, 64
        %v4690 = vpop.permute.xlu0 %4689
        %4691 = vrot.lane.b32.xlu0 %v4540, 64
        %v4692 = vpop.permute.xlu0 %4691
        %4693 = vrot.lane.b32.xlu0 %v4546, 64
        %v4694 = vpop.permute.xlu0 %4693
        %4695 = vrot.lane.b32.xlu0 %v4552, 64
        %v4696 = vpop.permute.xlu0 %4695
        %4697 = vrot.lane.b32.xlu0 %v4558, 64
        %v4698 = vpop.permute.xlu0 %4697
        %4699 = vrot.lane.b32.xlu0 %v4564, 64
        %v4700 = vpop.permute.xlu0 %4699
        %4701 = vrot.lane.b32.xlu0 %v4570, 64
        %v4702 = vpop.permute.xlu0 %4701
        %4703 = vrot.lane.b32.xlu0 %v4576, 64
        %v4704 = vpop.permute.xlu0 %4703
        %4705 = vrot.lane.b32.xlu0 %v4582, 64
        %v4706 = vpop.permute.xlu0 %4705
        %4707 = vrot.lane.b32.xlu0 %v4588, 64
        %v4708 = vpop.permute.xlu0 %4707
        %4709 = vrot.lane.b32.xlu0 %v4594, 64
        %v4710 = vpop.permute.xlu0 %4709
        %4711 = vrot.lane.b32.xlu0 %v4600, 64
        %v4712 = vpop.permute.xlu0 %4711
        %4713 = vrot.lane.b32.xlu0 %v4606, 64
        %v4714 = vpop.permute.xlu0 %4713
        %4715 = vrot.lane.b32.xlu0 %v4612, 64
        %v4716 = vpop.permute.xlu0 %4715
        %4717 = vrot.lane.b32.xlu0 %v4618, 64
        %v4718 = vpop.permute.xlu0 %4717
        %4719 = vrot.lane.b32.xlu0 %v4624, 64
        %v4720 = vpop.permute.xlu0 %4719
        %4721 = vrot.lane.b32.xlu0 %v4630, 64
        %v4722 = vpop.permute.xlu0 %4721
        %4723 = vrot.lane.b32.xlu0 %v4636, 64
        %v4724 = vpop.permute.xlu0 %4723
        %4725 = vrot.lane.b32.xlu0 %v4642, 64
        %v4726 = vpop.permute.xlu0 %4725
        %4727 = vrot.lane.b32.xlu0 %v4648, 64
        %v4728 = vpop.permute.xlu0 %4727
        %4729 = vrot.lane.b32.xlu0 %v4654, 64
        %v4730 = vpop.permute.xlu0 %4729
        %4731 = vrot.lane.b32.xlu0 %v4660, 64
        %v4732 = vpop.permute.xlu0 %4731
        %4733 = vrot.lane.b32.xlu0 %v4666, 64
        %v4734 = vpop.permute.xlu0 %4733
        %4735 = vrot.lane.b32.xlu0 %v4672, 64
        %v4736 = vpop.permute.xlu0 %4735
        %vm4737 = vcmask 523264
        %v4739 = vsel %vm4737, %v2910, %v4674
        %v4741 = vsel %vm4737, %v2912, %v4676
        %v4743 = vsel %vm4737, %v2914, %v4678
        %v4745 = vsel %vm4737, %v2916, %v4680
        %v4747 = vsel %vm4737, %v2918, %v4682
        %v4749 = vsel %vm4737, %v2920, %v4684
        %v4751 = vsel %vm4737, %v2922, %v4686
        %v4753 = vsel %vm4737, %v2924, %v4688
        %v4755 = vsel %vm4737, %v2926, %v4690
        %v4757 = vsel %vm4737, %v2928, %v4692
        %v4759 = vsel %vm4737, %v2930, %v4694
        %v4761 = vsel %vm4737, %v2932, %v4696
        %v4763 = vsel %vm4737, %v2934, %v4698
        %v4765 = vsel %vm4737, %v2936, %v4700
        %v4767 = vsel %vm4737, %v2938, %v4702
        %v4769 = vsel %vm4737, %v2940, %v4704
        %v4771 = vsel %vm4737, %v2942, %v4706
        %v4773 = vsel %vm4737, %v2944, %v4708
        %v4775 = vsel %vm4737, %v2946, %v4710
        %v4777 = vsel %vm4737, %v2948, %v4712
        %v4779 = vsel %vm4737, %v2950, %v4714
        %v4781 = vsel %vm4737, %v2952, %v4716
        %v4783 = vsel %vm4737, %v2954, %v4718
        %v4785 = vsel %vm4737, %v2956, %v4720
        %v4787 = vsel %vm4737, %v2958, %v4722
        %v4789 = vsel %vm4737, %v2960, %v4724
        %v4791 = vsel %vm4737, %v2962, %v4726
        %v4793 = vsel %vm4737, %v2964, %v4728
        %v4795 = vsel %vm4737, %v2966, %v4730
        %v4797 = vsel %vm4737, %v2968, %v4732
        %v4799 = vsel %vm4737, %v2970, %v4734
        %v4801 = vsel %vm4737, %v2972, %v4736
        %v4802 = vld [vmem:[%s1] sm:$0xf]
        %v4803 = vld [vmem:[%s1 + $0x4] sm:$0xf]
        %v4804 = vld [vmem:[%s1 + $0x8] sm:$0xf]
        %v4805 = vld [vmem:[%s1 + $0xc] sm:$0xf]
        %v4806 = vld [vmem:[%s1 + $0x10] sm:$0xf]
        %v4807 = vld [vmem:[%s1 + $0x14] sm:$0xf]
        %v4808 = vld [vmem:[%s1 + $0x18] sm:$0xf]
        %v4809 = vld [vmem:[%s1 + $0x1c] sm:$0xf]
        %v4810 = vld [vmem:[%s1 + $0x20] sm:$0xf]
        %v4811 = vld [vmem:[%s1 + $0x24] sm:$0xf]
        %v4812 = vld [vmem:[%s1 + $0x28] sm:$0xf]
        %v4813 = vld [vmem:[%s1 + $0x2c] sm:$0xf]
        %v4814 = vld [vmem:[%s1 + $0x30] sm:$0xf]
        %v4815 = vld [vmem:[%s1 + $0x34] sm:$0x3]
        %v4816 = vld [vmem:[%s2] sm:$0x1]
        %v4818 = vperm.slane %v4816, 0
        %v4852 = vunpack.c.l.b16 %v4739
        %v4853 = vunpack.c.l.b16 %v4741
        %v4854 = vunpack.c.l.b16 %v4743
        %v4855 = vunpack.c.l.b16 %v4745
        %v4856 = vunpack.c.l.b16 %v4747
        %v4857 = vunpack.c.l.b16 %v4749
        %v4858 = vunpack.c.l.b16 %v4751
        %v4859 = vunpack.c.l.b16 %v4753
        %v4860 = vunpack.c.l.b16 %v4755
        %v4861 = vunpack.c.l.b16 %v4757
        %v4862 = vunpack.c.l.b16 %v4759
        %v4863 = vunpack.c.l.b16 %v4761
        %v4864 = vunpack.c.l.b16 %v4763
        %v4865 = vunpack.c.l.b16 %v4765
        %v4866 = vunpack.c.l.b16 %v4767
        %v4867 = vunpack.c.l.b16 %v4769
        %v4868 = vunpack.c.l.b16 %v4771
        %v4869 = vunpack.c.l.b16 %v4773
        %v4870 = vunpack.c.l.b16 %v4775
        %v4871 = vunpack.c.l.b16 %v4777
        %v4872 = vunpack.c.l.b16 %v4779
        %v4873 = vunpack.c.l.b16 %v4781
        %v4874 = vunpack.c.l.b16 %v4783
        %v4875 = vunpack.c.l.b16 %v4785
        %v4876 = vunpack.c.l.b16 %v4787
        %v4877 = vunpack.c.l.b16 %v4789
        %v4878 = vunpack.c.l.b16 %v4791
        %v4879 = vunpack.c.l.b16 %v4793
        %v4880 = vunpack.c.l.b16 %v4795
        %v4881 = vunpack.c.l.b16 %v4797
        %v4882 = vunpack.c.l.b16 %v4799
        %v4883 = vunpack.c.l.b16 %v4801
        %v4884 = vpack.c.b16 %v4853, %v4852
        %v4885 = vpack.c.b16 %v4855, %v4854
        %v4886 = vpack.c.b16 %v4857, %v4856
        %v4887 = vpack.c.b16 %v4859, %v4858
        %v4888 = vpack.c.b16 %v4861, %v4860
        %v4889 = vpack.c.b16 %v4863, %v4862
        %v4890 = vpack.c.b16 %v4865, %v4864
        %v4891 = vpack.c.b16 %v4867, %v4866
        %v4892 = vpack.c.b16 %v4869, %v4868
        %v4893 = vpack.c.b16 %v4871, %v4870
        %v4894 = vpack.c.b16 %v4873, %v4872
        %v4895 = vpack.c.b16 %v4875, %v4874
        %v4896 = vpack.c.b16 %v4877, %v4876
        %v4897 = vpack.c.b16 %v4879, %v4878
        %v4898 = vpack.c.b16 %v4881, %v4880
        %v4899 = vpack.c.b16 %v4883, %v4882
        %v4914 = vunpack.c.l.b16 %v4802
        %v4915 = vunpack.c.l.b16 %v4803
        %v4916 = vunpack.c.l.b16 %v4804
        %v4917 = vunpack.c.l.b16 %v4805
        %v4918 = vunpack.c.l.b16 %v4806
        %v4919 = vunpack.c.l.b16 %v4807
        %v4920 = vunpack.c.l.b16 %v4808
        %v4921 = vunpack.c.l.b16 %v4809
        %v4922 = vunpack.c.l.b16 %v4810
        %v4923 = vunpack.c.l.b16 %v4811
        %v4924 = vunpack.c.l.b16 %v4812
        %v4925 = vunpack.c.l.b16 %v4813
        %v4926 = vunpack.c.l.b16 %v4814
        %v4927 = vunpack.c.l.b16 %v4815
        %v4928 = vpack.c.b16 %v4915, %v4914
        %v4929 = vpack.c.b16 %v4917, %v4916
        %v4930 = vpack.c.b16 %v4919, %v4918
        %v4931 = vpack.c.b16 %v4921, %v4920
        %v4932 = vpack.c.b16 %v4923, %v4922
        %v4933 = vpack.c.b16 %v4925, %v4924
        %v4934 = vpack.c.b16 %v4927, %v4926
        %vm4941 = vcmask 883712
        %v4943 = vsel %vm4941, %v4884, 0
        %v4946 = vsel %vm4941, %v4885, 0
        %v4949 = vsel %vm4941, %v4886, 0
        %v4952 = vsel %vm4941, %v4887, 0
        %v4955 = vsel %vm4941, %v4888, 0
        %v4958 = vsel %vm4941, %v4889, 0
        %v4961 = vsel %vm4941, %v4890, 0
        %v4964 = vsel %vm4941, %v4891, 0
        %v4967 = vsel %vm4941, %v4892, 0
        %v4970 = vsel %vm4941, %v4893, 0
        %v4973 = vsel %vm4941, %v4894, 0
        %v4976 = vsel %vm4941, %v4895, 0
        %v4979 = vsel %vm4941, %v4896, 0
        %v4982 = vsel %vm4941, %v4897, 0
        %v4985 = vsel %vm4941, %v4898, 0
        %v4988 = vsel %vm4941, %v4899, 0
        %vm4990 = vcmask 1045504
        %v4992 = vsel %vm4990, %v4934, 0
        %4994 = vmatpush.bf16.msra.mxu0 0
        %4995 = vmatpush.bf16.msra.mxu0 %v4992
        %4996 = vmatpush.bf16.msra.mxu0 %v4933
        %4997 = vmatpush.bf16.msra.mxu0 %v4932
        %4998 = vmatpush.bf16.msra.mxu0 %v4931
        %4999 = vmatpush.bf16.msra.mxu0 %v4930
        %5000 = vmatpush.bf16.msra.mxu0 %v4929
        %5001 = vmatpush.bf16.msra.mxu0 %v4928
        %5002 = vmatmul.bf16.gmra.mxu0 %v4943
        %v5003 = vpop.f32.mrf.mxu0
        %v5004 = vadd.f32 %v4818, %v5003
        %v5005 = vpop.f32.mrf.mxu0
        %v5006 = vadd.f32 %v4818, %v5005
        %5007 = vmatmul.bf16.gmra.mxu0 %v4946
        %v5008 = vpop.f32.mrf.mxu0
        %v5009 = vadd.f32 %v4818, %v5008
        %v5010 = vpop.f32.mrf.mxu0
        %v5011 = vadd.f32 %v4818, %v5010
        %5012 = vmatmul.bf16.gmra.mxu0 %v4949
        %v5013 = vpop.f32.mrf.mxu0
        %v5014 = vadd.f32 %v4818, %v5013
        %v5015 = vpop.f32.mrf.mxu0
        %v5016 = vadd.f32 %v4818, %v5015
        %5017 = vmatmul.bf16.gmra.mxu0 %v4952
        %v5018 = vpop.f32.mrf.mxu0
        %v5019 = vadd.f32 %v4818, %v5018
        %v5020 = vpop.f32.mrf.mxu0
        %v5021 = vadd.f32 %v4818, %v5020
        %5022 = vmatmul.bf16.gmra.mxu0 %v4955
        %v5023 = vpop.f32.mrf.mxu0
        %v5024 = vadd.f32 %v4818, %v5023
        %v5025 = vpop.f32.mrf.mxu0
        %v5026 = vadd.f32 %v4818, %v5025
        %5027 = vmatmul.bf16.gmra.mxu0 %v4958
        %v5028 = vpop.f32.mrf.mxu0
        %v5029 = vadd.f32 %v4818, %v5028
        %v5030 = vpop.f32.mrf.mxu0
        %v5031 = vadd.f32 %v4818, %v5030
        %5032 = vmatmul.bf16.gmra.mxu0 %v4961
        %v5033 = vpop.f32.mrf.mxu0
        %v5034 = vadd.f32 %v4818, %v5033
        %v5035 = vpop.f32.mrf.mxu0
        %v5036 = vadd.f32 %v4818, %v5035
        %5037 = vmatmul.bf16.gmra.mxu0 %v4964
        %v5038 = vpop.f32.mrf.mxu0
        %v5039 = vadd.f32 %v4818, %v5038
        %v5040 = vpop.f32.mrf.mxu0
        %v5041 = vadd.f32 %v4818, %v5040
        %5042 = vmatmul.bf16.gmra.mxu0 %v4967
        %v5043 = vpop.f32.mrf.mxu0
        %v5044 = vadd.f32 %v4818, %v5043
        %v5045 = vpop.f32.mrf.mxu0
        %v5046 = vadd.f32 %v4818, %v5045
        %5047 = vmatmul.bf16.gmra.mxu0 %v4970
        %v5048 = vpop.f32.mrf.mxu0
        %v5049 = vadd.f32 %v4818, %v5048
        %v5050 = vpop.f32.mrf.mxu0
        %v5051 = vadd.f32 %v4818, %v5050
        %5052 = vmatmul.bf16.gmra.mxu0 %v4973
        %v5053 = vpop.f32.mrf.mxu0
        %v5054 = vadd.f32 %v4818, %v5053
        %v5055 = vpop.f32.mrf.mxu0
        %v5056 = vadd.f32 %v4818, %v5055
        %5057 = vmatmul.bf16.gmra.mxu0 %v4976
        %v5058 = vpop.f32.mrf.mxu0
        %v5059 = vadd.f32 %v4818, %v5058
        %v5060 = vpop.f32.mrf.mxu0
        %v5061 = vadd.f32 %v4818, %v5060
        %5062 = vmatmul.bf16.gmra.mxu0 %v4979
        %v5063 = vpop.f32.mrf.mxu0
        %v5064 = vadd.f32 %v4818, %v5063
        %v5065 = vpop.f32.mrf.mxu0
        %v5066 = vadd.f32 %v4818, %v5065
        %5067 = vmatmul.bf16.gmra.mxu0 %v4982
        %v5068 = vpop.f32.mrf.mxu0
        %v5069 = vadd.f32 %v4818, %v5068
        %v5070 = vpop.f32.mrf.mxu0
        %v5071 = vadd.f32 %v4818, %v5070
        %5072 = vmatmul.bf16.gmra.mxu0 %v4985
        %v5073 = vpop.f32.mrf.mxu0
        %v5074 = vadd.f32 %v4818, %v5073
        %v5075 = vpop.f32.mrf.mxu0
        %v5076 = vadd.f32 %v4818, %v5075
        %5077 = vmatmul.bf16.gmra.mxu0 %v4988
        %v5078 = vpop.f32.mrf.mxu0
        %v5079 = vadd.f32 %v4818, %v5078
        %v5080 = vpop.f32.mrf.mxu0
        %v5081 = vadd.f32 %v4818, %v5080
        %5082 = vdwg.mxu0
        %5083 = vst [vmem:[%s187] sm:$0xff] %v5004
        %5084 = vst [vmem:[%s187 + $0x8] sm:$0xff] %v5006
        %5085 = vst [vmem:[%s187 + $0x10] sm:$0xff] %v5009
        %5086 = vst [vmem:[%s187 + $0x18] sm:$0xff] %v5011
        %5087 = vst [vmem:[%s187 + $0x20] sm:$0xff] %v5014
        %5088 = vst [vmem:[%s187 + $0x28] sm:$0xff] %v5016
        %5089 = vst [vmem:[%s187 + $0x30] sm:$0xff] %v5019
        %5090 = vst [vmem:[%s187 + $0x38] sm:$0xff] %v5021
        %5091 = vst [vmem:[%s187 + $0x40] sm:$0xff] %v5024
        %5092 = vst [vmem:[%s187 + $0x48] sm:$0xff] %v5026
        %5093 = vst [vmem:[%s187 + $0x50] sm:$0xff] %v5029
        %5094 = vst [vmem:[%s187 + $0x58] sm:$0xff] %v5031
        %5095 = vst [vmem:[%s187 + $0x60] sm:$0xff] %v5034
        %5096 = vst [vmem:[%s187 + $0x68] sm:$0xff] %v5036
        %5097 = vst [vmem:[%s187 + $0x70] sm:$0xff] %v5039
        %5098 = vst [vmem:[%s187 + $0x78] sm:$0xff] %v5041
        %5099 = vst [vmem:[%s187 + $0x80] sm:$0xff] %v5044
        %5100 = vst [vmem:[%s187 + $0x88] sm:$0xff] %v5046
        %5101 = vst [vmem:[%s187 + $0x90] sm:$0xff] %v5049
        %5102 = vst [vmem:[%s187 + $0x98] sm:$0xff] %v5051
        %5103 = vst [vmem:[%s187 + $0xa0] sm:$0xff] %v5054
        %5104 = vst [vmem:[%s187 + $0xa8] sm:$0xff] %v5056
        %5105 = vst [vmem:[%s187 + $0xb0] sm:$0xff] %v5059
        %5106 = vst [vmem:[%s187 + $0xb8] sm:$0xff] %v5061
        %5107 = vst [vmem:[%s187 + $0xc0] sm:$0xff] %v5064
        %5108 = vst [vmem:[%s187 + $0xc8] sm:$0xff] %v5066
        %5109 = vst [vmem:[%s187 + $0xd0] sm:$0xff] %v5069
        %5110 = vst [vmem:[%s187 + $0xd8] sm:$0xff] %v5071
        %5111 = vst [vmem:[%s187 + $0xe0] sm:$0xff] %v5074
        %5112 = vst [vmem:[%s187 + $0xe8] sm:$0xff] %v5076
        %5113 = vst [vmem:[%s187 + $0xf0] sm:$0xff] %v5079
        %5114 = vst [vmem:[%s187 + $0xf8] sm:$0xff] %v5081
        %s5115 = sand.u32 %s109, 1
        %s5116 = scalar_lea.sflag [#allocation3], %s5115
        %s5117 = sand.u32 %s109, 1
        %s5118 = smul.addr %s5117, 256
        %s5119 = scalar_lea.vmem [#allocation2], %s5118
        // Predicated region
        $region33: #{tpu_custom_call.1} parent=31 // pred_check
          %p5120 = pneg %p119
        $region34: #{tpu_custom_call.1} parent=31 // pred_check_branch
          %5122 = sbr.rel (%p5120) target = $region36
        $region35: #{tpu_custom_call.1} parent=31 // pred_region
          %5124 = vsyncadd %s5116, 0
          %s5125 = smul.addr %s22, 32
          %s5126 = smul.addr %s21, 64
          %s5127 = sadd.s32 %s5125, %s5126
          %s5128 = smul.addr %s5127, 8
          %s5129 = scalar_lea.hbm %s3, %s5128
          %s5130 = sshll.u32 %s5119, 4
          %s5131 = int_to_ptr.vmem [resolvable:$true] %s5130
          %s5132 = sshll.u32 %s5129, 4
          %s5133 = int_to_ptr.hbm [resolvable:$true] %s5132
          %5138 = dma.vmem_to_hbm [thread:$0]  %s5131, 4096, %s5133, %s5116, 128, 128, 8
        $region36: #{tpu_custom_call.1} parent=31 // pred_fallthru
          _
      $region32: #{tpu_custom_call.1} parent=5 // pred_fallthru
        _
      %p5139 = scmp.le.s32.totalorder 2, %s12
      // Predicated region
      $region37: #{tpu_custom_call.1} parent=5 // pred_check
        %p5140 = pneg %p5139
      $region38: #{tpu_custom_call.1} parent=5 // pred_check_branch
        %5142 = sbr.rel (%p5140) target = $region40
      $region39: #{tpu_custom_call.1} parent=5 // pred_region
        %s5143 = ssub.s32 %s12, 2
        // Predicated region
        $region41: #{tpu_custom_call.1} parent=39 // pred_check
          %p5144 = pneg %p125
        $region42: #{tpu_custom_call.1} parent=39 // pred_check_branch
          %5146 = sbr.rel (%p5144) target = $region44
        $region43: #{tpu_custom_call.1} parent=39 // pred_region
          %s5147 = sand.u32 %s110, 1
          %s5148 = scalar_lea.sflag [#allocation3], %s5147
          %s5149 = sand.u32 %s110, 1
          %s5150 = smul.addr %s5149, 256
          %s5151 = scalar_lea.vmem [#allocation2], %s5150
          %5153 = dma.done %s5148, 4096
        $region44: #{tpu_custom_call.1} parent=39 // pred_fallthru
          _
      $region40: #{tpu_custom_call.1} parent=5 // pred_fallthru
        _
    $region6: #{tpu_custom_call.1} parent=1 // loop_footer
      %s16 = sadd.s32 1, %s12
    $region7: #{tpu_custom_call.1} parent=1 // loop_footer_branch
      %11 = sbr.rel target = $region3
    $region8: #{tpu_custom_call.1} parent=1 // loop_exit
      _
    %5154 = vsyncpa [#allocation3], 1
    %s5155 = scalar_lea.sflag [#allocation3], 1
    %5156 = vsyncpa %s5155, 1

</llo_original>
